<compile_context>
chip_gen: v7x
topology: tpu7x:2x2x1
jax: 0.10.0
libtpu: 0.0.40
codegen_flags: <defaults>
</compile_context>

<pallas_src>
import functools

import numpy as np

import jax
import jax.numpy as jnp
from jax.experimental import pallas as pl
from jax.experimental.pallas import tpu as pltpu


# ----------------------------------------------------------------------------
# Fused LeNet kernel (whole batch in one invocation, batch on the lane axis)
# ----------------------------------------------------------------------------
def _lenet_kernel(xcat_ref, a1_ref, b1_ref, p1_ref, q1_ref,
                  a2_ref, b2_ref, p2_ref, q2_ref,
                  fc1w_ref, fc1b_ref, fc2w_ref, fc2b_ref,
                  fc3w_ref, fc3b_ref, out_ref, zcat_ref, *, batch):
    dot = functools.partial(jnp.dot, preferred_element_type=jnp.float32)
    n = batch
    w1c = n * 28 - 2          # conv1-stage activation width (28-wide blocks)
    w2c = n * 13 - 2          # conv2-stage activation width (13-wide blocks)

    # conv1 (1->6, 3x3, VALID) + bias + ReLU: ONE matmul for the whole batch.
    # xcat_ref is the 3 kw-shifted input slices stacked along K (96, n*28-2).
    y1 = jnp.maximum(dot(a1_ref[...], xcat_ref[...]) + b1_ref[...], 0.0)   # (156, 54)

    # pool1 (2x2, stride 2): 4-way shifted max, then column/row selection
    # matmuls (selection commutes with max). Column-select first (smaller op).
    pm = jnp.maximum(jnp.maximum(y1[0:155, 0:w1c - 1], y1[0:155, 1:w1c]),
                     jnp.maximum(y1[1:156, 0:w1c - 1], y1[1:156, 1:w1c]))
    z = dot(p1_ref[...], dot(pm, q1_ref[...]))           # (80, n*13), rows 78-79 = 0 pad

    # conv2 (6->16, 3x3, VALID): stack the 3 kw-shifted slices of z along
    # sublanes (80-row blocks -> aligned offsets 0/80/160) through a VMEM
    # scratch, then ONE matmul for the whole batch.
    zcat_ref[0:80, :] = z[:, 0:w2c]
    zcat_ref[80:160, :] = z[:, 1:w2c + 1]
    zcat_ref[160:240, :] = z[:, 2:w2c + 2]
    y2 = jnp.maximum(dot(a2_ref[...], zcat_ref[...]) + b2_ref[...], 0.0)   # (176, 24)

    # pool2 (2x2, stride 2; floors 11 -> 5 like F.max_pool2d).  Q2 emits the
    # selected columns in (w, sample)-major order for the fc1 blocks below.
    pm2 = jnp.maximum(jnp.maximum(y2[0:175, 0:w2c - 1], y2[0:175, 1:w2c]),
                      jnp.maximum(y2[1:176, 0:w2c - 1], y2[1:176, 1:w2c]))
    pooled = dot(p2_ref[...], dot(pm2, q2_ref[...]))     # (80, 5*n), cols = (w, s)

    # fc1 (400->120) without an explicit flatten: per-w regrouped weight block
    # times the contiguous (80, n) column slice -> every matmul spans all
    # batch lanes (torch .view(-1,400) (c,h,w) order preserved by regrouping).
    h1 = fc1b_ref[...]                                   # (120, 1) broadcasts over n
    for w in range(5):
        h1 = h1 + dot(fc1w_ref[w], pooled[:, w * n:(w + 1) * n])
    h1 = jnp.maximum(h1, 0.0)                            # (120, n)

    h2 = jnp.maximum(dot(fc2w_ref[...], h1) + fc2b_ref[...], 0.0)   # (84, n)

    # Single lane-dense store of all logits (no per-sample masked stores).
    out_ref[...] = dot(fc3w_ref[...], h2) + fc3b_ref[...]           # (10, n)


def lenet_forward(prepared, x):
    """x: (N, 1, 28, 28) float32 -> logits (N, 10). One fused Pallas kernel."""
    n, c, h, w = x.shape
    assert (c, h, w) == (1, 28, 28), "this LeNet variant expects (N, 1, 28, 28)"

    # Lane-batched input layout (wrapper-side plumbing, ~6 KB):
    #   x_wide[p, s*28 + q] = x[s, 0, p, q], rows padded 28 -> 32 so the
    #   kw-stacked K blocks are sublane-aligned.
    x2d = x.reshape(n, 28, 28).astype(jnp.float32)
    x_wide = jnp.transpose(x2d, (1, 0, 2)).reshape(28, n * 28)
    x_wide = jnp.pad(x_wide, ((0, 4), (0, 0)))                     # (32, n*28)
    wcols = n * 28 - 2
    x_cat = jnp.concatenate([x_wide[:, kw:kw + wcols] for kw in range(3)],
                            axis=0)                                # (96, n*28-2)

    out = pl.pallas_call(
        functools.partial(_lenet_kernel, batch=n),
        out_shape=jax.ShapeDtypeStruct((10, n), jnp.float32),
        in_specs=[pl.BlockSpec(memory_space=pltpu.MemorySpace.VMEM)] * 15,
        out_specs=pl.BlockSpec(memory_space=pltpu.MemorySpace.VMEM),
        scratch_shapes=[pltpu.VMEM((3 * 80, n * 13 - 2), jnp.float32)],
    )(x_cat,
      prepared["A1"], prepared["b1col"], prepared["P1"], prepared["Q1"],
      prepared["A2"], prepared["b2col"], prepared["P2"], prepared["Q2"],
      prepared["fc1w"], prepared["fc1b"], prepared["fc2w"], prepared["fc2b"],
      prepared["fc3w"], prepared["fc3b"])
    return out.T                                                   # (N, 10)


# ----------------------------------------------------------------------------
# One-time parameter lowering (init-time, NOT in the per-step forward)
# ----------------------------------------------------------------------------
def prepare_params(params, batch):
    f = np.float32
    n = batch
    w1 = np.asarray(params["conv1_w"], f)     # (6, 1, 3, 3)
    b1 = np.asarray(params["conv1_b"], f)
    w2 = np.asarray(params["conv2_w"], f)     # (16, 6, 3, 3)
    b2 = np.asarray(params["conv2_b"], f)
    fw1 = np.asarray(params["fc1_w"], f)      # (120, 400)
    fb1 = np.asarray(params["fc1_b"], f)
    fw2 = np.asarray(params["fc2_w"], f)      # (84, 120)
    fb2 = np.asarray(params["fc2_b"], f)
    fw3 = np.asarray(params["fc3_w"], f)      # (10, 84)
    fb3 = np.asarray(params["fc3_b"], f)

    # conv1 lowered, kw taps concatenated along K (each block padded to 32
    # rows so the in-kernel / wrapper stacking is sublane-aligned):
    #   y1[co*26+i, col] = sum_{kw,kh} w1[co,0,kh,kw] * x[i+kh, col+kw]
    A1 = np.zeros((6 * 26, 3 * 32), f)
    for kw in range(3):
        for co in range(6):
            for i in range(26):
                for kh in range(3):
                    A1[co * 26 + i, kw * 32 + i + kh] = w1[co, 0, kh, kw]
    b1col = np.repeat(b1, 26).reshape(6 * 26, 1)

    # pool1 row selection (picks row c*26 + 2r); 2 zero rows pad z to 80 rows.
    P1 = np.zeros((80, 6 * 26 - 1), f)
    for c in range(6):
        for r in range(13):
            P1[c * 13 + r, c * 26 + 2 * r] = 1.0
    # pool1 batched column selection: pairmax columns live in 28-wide
    # per-sample blocks; pick column s*28 + 2j -> output column s*13 + j.
    Q1 = np.zeros((n * 28 - 3, n * 13), f)
    for s in range(n):
        for j in range(13):
            Q1[s * 28 + 2 * j, s * 13 + j] = 1.0

    # conv2 lowered, kw taps concatenated along K (blocks of 80 z-rows).
    A2 = np.zeros((16 * 11, 3 * 80), f)
    for kw in range(3):
        for co in range(16):
            for ci in range(6):
                for i in range(11):
                    for kh in range(3):
                        A2[co * 11 + i, kw * 80 + ci * 13 + i + kh] = w2[co, ci, kh, kw]
    b2col = np.repeat(b2, 11).reshape(16 * 11, 1)

    # pool2 row selection (picks row c*11 + 2r).
    P2 = np.zeros((16 * 5, 16 * 11 - 1), f)
    for c in range(16):
        for r in range(5):
            P2[c * 5 + r, c * 11 + 2 * r] = 1.0
    # pool2 batched column selection, OUTPUT columns in (w, sample)-major
    # order so fc1's per-w weight blocks consume contiguous column slices.
    Q2 = np.zeros((n * 13 - 3, 5 * n), f)
    for s in range(n):
        for w in range(5):
            Q2[s * 13 + 2 * w, w * n + s] = 1.0

    # fc1 regrouped per pooled column w:  h1 = b + sum_w fc1w_p[w] @ pooled_w
    # fc1w_p[w, o, c*5+h] == fc1_w[o, c*25 + h*5 + w]  (torch .view order).
    fc1w_p = np.ascontiguousarray(
        np.transpose(fw1.reshape(120, 16, 5, 5), (3, 0, 1, 2)).reshape(5, 120, 80))

    j = jnp.asarray
    return dict(
        A1=j(A1), b1col=j(b1col), P1=j(P1), Q1=j(Q1),
        A2=j(A2), b2col=j(b2col), P2=j(P2), Q2=j(Q2),
        fc1w=j(fc1w_p), fc1b=j(fb1.reshape(120, 1)),
        fc2w=j(fw2), fc2b=j(fb2.reshape(84, 1)),
        fc3w=j(fw3), fc3b=j(fb3.reshape(10, 1)),
    )


# ----------------------------------------------------------------------------
# Parameter init (PyTorch-style layouts) and numpy reference
# ----------------------------------------------------------------------------
def init_params(key):
    ks = jax.random.split(key, 10)

    def u(k, shape, fan_in):
        bound = 1.0 / (fan_in ** 0.5)
        return jax.random.uniform(k, shape, jnp.float32, -bound, bound)

    return dict(
        conv1_w=u(ks[0], (6, 1, 3, 3), 1 * 3 * 3),
        conv1_b=u(ks[1], (6,), 1 * 3 * 3),
        conv2_w=u(ks[2], (16, 6, 3, 3), 6 * 3 * 3),
        conv2_b=u(ks[3], (16,), 6 * 3 * 3),
        fc1_w=u(ks[4], (120, 16 * 5 * 5), 16 * 5 * 5),
        fc1_b=u(ks[5], (120,), 16 * 5 * 5),
        fc2_w=u(ks[6], (84, 120), 120),
        fc2_b=u(ks[7], (84,), 120),
        fc3_w=u(ks[8], (10, 84), 84),
        fc3_b=u(ks[9], (10,), 84),
    )


def _reference_forward(params, x):
    """Exact host-side (float64 numpy) implementation of the PyTorch module."""
    f = np.float64
    xn = np.asarray(x, f)
    w1, b1 = np.asarray(params["conv1_w"], f), np.asarray(params["conv1_b"], f)
    w2, b2 = np.asarray(params["conv2_w"], f), np.asarray(params["conv2_b"], f)
    fw1, fb1 = np.asarray(params["fc1_w"], f), np.asarray(params["fc1_b"], f)
    fw2, fb2 = np.asarray(params["fc2_w"], f), np.asarray(params["fc2_b"], f)
    fw3, fb3 = np.asarray(params["fc3_w"], f), np.asarray(params["fc3_b"], f)

    def conv(a, w, b):
        nb, ci, h, wd = a.shape
        co, _, kh, kw = w.shape
        ho, wo = h - kh + 1, wd - kw + 1
        out = np.zeros((nb, co, ho, wo), f)
        for dh in range(kh):
            for dw in range(kw):
                out += np.einsum("ncij,oc->noij",
                                 a[:, :, dh:dh + ho, dw:dw + wo], w[:, :, dh, dw])
        return out + b[None, :, None, None]

    def pool(a):
        nb, c, h, wd = a.shape
        hp, wp = h // 2, wd // 2
        a = a[:, :, :hp * 2, :wp * 2].reshape(nb, c, hp, 2, wp, 2)
        return a.max(axis=(3, 5))

    y = pool(np.maximum(conv(xn, w1, b1), 0.0))
    y = pool(np.maximum(conv(y, w2, b2), 0.0))
    y = y.reshape(y.shape[0], -1)
    y = np.maximum(y @ fw1.T + fb1, 0.0)
    y = np.maximum(y @ fw2.T + fb2, 0.0)
    return y @ fw3.T + fb3


if __name__ == "__main__":
    key = jax.random.PRNGKey(0)
    pkey, xkey = jax.random.split(key)
    params = init_params(pkey)

    # MNIST-style input implied by fc1 = 16*5*5: (batch=2, C=1, H=28, W=28)
    batch = 2
    prepared = prepare_params(params, batch)   # one-time weight lowering
    x = jax.random.normal(xkey, (batch, 1, 28, 28), dtype=jnp.float32)

    fwd = jax.jit(lenet_forward)
    out = jax.block_until_ready(fwd(prepared, x))

    assert out.shape == (batch, 10), out.shape
    assert bool(jnp.all(jnp.isfinite(out)))
    ref = _reference_forward(params, x)
    err = float(np.max(np.abs(np.asarray(out, np.float64) - ref)))
    assert err < 3e-2, f"max abs error vs reference: {err}"
    print("KERNEL_OK")
</pallas_src>

<mosaic_0001>
module attributes {stable_mosaic.version = 11 : i64} {
  func.func @_lenet_kernel(%arg0: memref<96x54xf32, #tpu.memory_space<vmem>>, %arg1: memref<156x96xf32, #tpu.memory_space<vmem>>, %arg2: memref<156x1xf32, #tpu.memory_space<vmem>>, %arg3: memref<80x155xf32, #tpu.memory_space<vmem>>, %arg4: memref<53x26xf32, #tpu.memory_space<vmem>>, %arg5: memref<176x240xf32, #tpu.memory_space<vmem>>, %arg6: memref<176x1xf32, #tpu.memory_space<vmem>>, %arg7: memref<80x175xf32, #tpu.memory_space<vmem>>, %arg8: memref<23x10xf32, #tpu.memory_space<vmem>>, %arg9: memref<5x120x80xf32, #tpu.memory_space<vmem>>, %arg10: memref<120x1xf32, #tpu.memory_space<vmem>>, %arg11: memref<84x120xf32, #tpu.memory_space<vmem>>, %arg12: memref<84x1xf32, #tpu.memory_space<vmem>>, %arg13: memref<10x84xf32, #tpu.memory_space<vmem>>, %arg14: memref<10x1xf32, #tpu.memory_space<vmem>>, %arg15: memref<10x2xf32, #tpu.memory_space<vmem>>, %arg16: memref<240x24xf32, #tpu.memory_space<vmem>>) attributes {dimension_semantics = [], scalar_prefetch = 0 : i64, scratch_operands = 1 : i64, tpu.core_type = #tpu.core_type<tc>} {
    %c0 = arith.constant 0 : index
    %c0_0 = arith.constant 0 : index
    %0 = vector.load %arg1[%c0, %c0_0] : memref<156x96xf32, #tpu.memory_space<vmem>>, vector<156x96xf32>
    %c0_1 = arith.constant 0 : index
    %c0_2 = arith.constant 0 : index
    %1 = vector.load %arg0[%c0_1, %c0_2] : memref<96x54xf32, #tpu.memory_space<vmem>>, vector<96x54xf32>
    %cst = arith.constant dense<0.000000e+00> : vector<156x54xf32>
    %2 = tpu.matmul %0, %1, %cst {dimension_numbers = #tpu.dot_dimension_numbers<[1], [0], [0], [1], [0, 0, 1, 1], [], []>} : vector<156x96xf32>, vector<96x54xf32>, vector<156x54xf32> -> vector<156x54xf32>
    %c0_3 = arith.constant 0 : index
    %c0_4 = arith.constant 0 : index
    %3 = vector.load %arg2[%c0_3, %c0_4] : memref<156x1xf32, #tpu.memory_space<vmem>>, vector<156x1xf32>
    %4 = vector.broadcast %3 : vector<156x1xf32> to vector<156x54xf32>
    %5 = arith.addf %2, %4 : vector<156x54xf32>
    %cst_5 = arith.constant 0.000000e+00 : f32
    %6 = vector.broadcast %cst_5 : f32 to vector<156x54xf32>
    %7 = arith.maximumf %5, %6 : vector<156x54xf32>
    %8 = vector.extract_strided_slice %7 {offsets = [0, 0], sizes = [155, 53], strides = [1, 1]} : vector<156x54xf32> to vector<155x53xf32>
    %9 = vector.extract_strided_slice %7 {offsets = [0, 1], sizes = [155, 53], strides = [1, 1]} : vector<156x54xf32> to vector<155x53xf32>
    %10 = arith.maximumf %8, %9 : vector<155x53xf32>
    %11 = vector.extract_strided_slice %7 {offsets = [1, 0], sizes = [155, 53], strides = [1, 1]} : vector<156x54xf32> to vector<155x53xf32>
    %12 = vector.extract_strided_slice %7 {offsets = [1, 1], sizes = [155, 53], strides = [1, 1]} : vector<156x54xf32> to vector<155x53xf32>
    %13 = arith.maximumf %11, %12 : vector<155x53xf32>
    %14 = arith.maximumf %10, %13 : vector<155x53xf32>
    %c0_6 = arith.constant 0 : index
    %c0_7 = arith.constant 0 : index
    %15 = vector.load %arg3[%c0_6, %c0_7] : memref<80x155xf32, #tpu.memory_space<vmem>>, vector<80x155xf32>
    %c0_8 = arith.constant 0 : index
    %c0_9 = arith.constant 0 : index
    %16 = vector.load %arg4[%c0_8, %c0_9] : memref<53x26xf32, #tpu.memory_space<vmem>>, vector<53x26xf32>
    %cst_10 = arith.constant dense<0.000000e+00> : vector<155x26xf32>
    %17 = tpu.matmul %14, %16, %cst_10 {dimension_numbers = #tpu.dot_dimension_numbers<[1], [0], [0], [1], [0, 0, 1, 1], [], []>} : vector<155x53xf32>, vector<53x26xf32>, vector<155x26xf32> -> vector<155x26xf32>
    %cst_11 = arith.constant dense<0.000000e+00> : vector<80x26xf32>
    %18 = tpu.matmul %15, %17, %cst_11 {dimension_numbers = #tpu.dot_dimension_numbers<[1], [0], [0], [1], [0, 0, 1, 1], [], []>} : vector<80x155xf32>, vector<155x26xf32>, vector<80x26xf32> -> vector<80x26xf32>
    %19 = vector.extract_strided_slice %18 {offsets = [0, 0], sizes = [80, 24], strides = [1, 1]} : vector<80x26xf32> to vector<80x24xf32>
    %c0_12 = arith.constant 0 : index
    %c0_13 = arith.constant 0 : index
    %20 = vector.load %arg16[%c0_12, %c0_13] : memref<240x24xf32, #tpu.memory_space<vmem>>, vector<80x24xf32>
    tpu.vector_store %arg16[%c0_12, %c0_13], %19 {strides = array<i32>} : memref<240x24xf32, #tpu.memory_space<vmem>>, vector<80x24xf32>,
    %21 = vector.extract_strided_slice %18 {offsets = [0, 1], sizes = [80, 24], strides = [1, 1]} : vector<80x26xf32> to vector<80x24xf32>
    %c80 = arith.constant 80 : index
    %c0_14 = arith.constant 0 : index
    %22 = vector.load %arg16[%c80, %c0_14] : memref<240x24xf32, #tpu.memory_space<vmem>>, vector<80x24xf32>
    tpu.vector_store %arg16[%c80, %c0_14], %21 {strides = array<i32>} : memref<240x24xf32, #tpu.memory_space<vmem>>, vector<80x24xf32>,
    %23 = vector.extract_strided_slice %18 {offsets = [0, 2], sizes = [80, 24], strides = [1, 1]} : vector<80x26xf32> to vector<80x24xf32>
    %c160 = arith.constant 160 : index
    %c0_15 = arith.constant 0 : index
    %24 = vector.load %arg16[%c160, %c0_15] : memref<240x24xf32, #tpu.memory_space<vmem>>, vector<80x24xf32>
    tpu.vector_store %arg16[%c160, %c0_15], %23 {strides = array<i32>} : memref<240x24xf32, #tpu.memory_space<vmem>>, vector<80x24xf32>,
    %c0_16 = arith.constant 0 : index
    %c0_17 = arith.constant 0 : index
    %25 = vector.load %arg5[%c0_16, %c0_17] : memref<176x240xf32, #tpu.memory_space<vmem>>, vector<176x240xf32>
    %c0_18 = arith.constant 0 : index
    %c0_19 = arith.constant 0 : index
    %26 = vector.load %arg16[%c0_18, %c0_19] : memref<240x24xf32, #tpu.memory_space<vmem>>, vector<240x24xf32>
    %cst_20 = arith.constant dense<0.000000e+00> : vector<176x24xf32>
    %27 = tpu.matmul %25, %26, %cst_20 {dimension_numbers = #tpu.dot_dimension_numbers<[1], [0], [0], [1], [0, 0, 1, 1], [], []>} : vector<176x240xf32>, vector<240x24xf32>, vector<176x24xf32> -> vector<176x24xf32>
    %c0_21 = arith.constant 0 : index
    %c0_22 = arith.constant 0 : index
    %28 = vector.load %arg6[%c0_21, %c0_22] : memref<176x1xf32, #tpu.memory_space<vmem>>, vector<176x1xf32>
    %29 = vector.broadcast %28 : vector<176x1xf32> to vector<176x24xf32>
    %30 = arith.addf %27, %29 : vector<176x24xf32>
    %cst_23 = arith.constant 0.000000e+00 : f32
    %31 = vector.broadcast %cst_23 : f32 to vector<176x24xf32>
    %32 = arith.maximumf %30, %31 : vector<176x24xf32>
    %33 = vector.extract_strided_slice %32 {offsets = [0, 0], sizes = [175, 23], strides = [1, 1]} : vector<176x24xf32> to vector<175x23xf32>
    %34 = vector.extract_strided_slice %32 {offsets = [0, 1], sizes = [175, 23], strides = [1, 1]} : vector<176x24xf32> to vector<175x23xf32>
    %35 = arith.maximumf %33, %34 : vector<175x23xf32>
    %36 = vector.extract_strided_slice %32 {offsets = [1, 0], sizes = [175, 23], strides = [1, 1]} : vector<176x24xf32> to vector<175x23xf32>
    %37 = vector.extract_strided_slice %32 {offsets = [1, 1], sizes = [175, 23], strides = [1, 1]} : vector<176x24xf32> to vector<175x23xf32>
    %38 = arith.maximumf %36, %37 : vector<175x23xf32>
    %39 = arith.maximumf %35, %38 : vector<175x23xf32>
    %c0_24 = arith.constant 0 : index
    %c0_25 = arith.constant 0 : index
    %40 = vector.load %arg7[%c0_24, %c0_25] : memref<80x175xf32, #tpu.memory_space<vmem>>, vector<80x175xf32>
    %c0_26 = arith.constant 0 : index
    %c0_27 = arith.constant 0 : index
    %41 = vector.load %arg8[%c0_26, %c0_27] : memref<23x10xf32, #tpu.memory_space<vmem>>, vector<23x10xf32>
    %cst_28 = arith.constant dense<0.000000e+00> : vector<175x10xf32>
    %42 = tpu.matmul %39, %41, %cst_28 {dimension_numbers = #tpu.dot_dimension_numbers<[1], [0], [0], [1], [0, 0, 1, 1], [], []>} : vector<175x23xf32>, vector<23x10xf32>, vector<175x10xf32> -> vector<175x10xf32>
    %cst_29 = arith.constant dense<0.000000e+00> : vector<80x10xf32>
    %43 = tpu.matmul %40, %42, %cst_29 {dimension_numbers = #tpu.dot_dimension_numbers<[1], [0], [0], [1], [0, 0, 1, 1], [], []>} : vector<80x175xf32>, vector<175x10xf32>, vector<80x10xf32> -> vector<80x10xf32>
    %c0_30 = arith.constant 0 : index
    %c0_31 = arith.constant 0 : index
    %44 = vector.load %arg10[%c0_30, %c0_31] : memref<120x1xf32, #tpu.memory_space<vmem>>, vector<120x1xf32>
    %c0_32 = arith.constant 0 : index
    %c0_33 = arith.constant 0 : index
    %c0_34 = arith.constant 0 : index
    %45 = vector.load %arg9[%c0_32, %c0_33, %c0_34] : memref<5x120x80xf32, #tpu.memory_space<vmem>>, vector<1x120x80xf32>
    %46 = vector.shape_cast %45 : vector<1x120x80xf32> to vector<120x80xf32>
    %47 = vector.extract_strided_slice %43 {offsets = [0, 0], sizes = [80, 2], strides = [1, 1]} : vector<80x10xf32> to vector<80x2xf32>
    %cst_35 = arith.constant dense<0.000000e+00> : vector<120x2xf32>
    %48 = tpu.matmul %46, %47, %cst_35 {dimension_numbers = #tpu.dot_dimension_numbers<[1], [0], [0], [1], [0, 0, 1, 1], [], []>} : vector<120x80xf32>, vector<80x2xf32>, vector<120x2xf32> -> vector<120x2xf32>
    %49 = vector.broadcast %44 : vector<120x1xf32> to vector<120x2xf32>
    %50 = arith.addf %49, %48 : vector<120x2xf32>
    %c1 = arith.constant 1 : index
    %c0_36 = arith.constant 0 : index
    %c0_37 = arith.constant 0 : index
    %51 = vector.load %arg9[%c1, %c0_36, %c0_37] : memref<5x120x80xf32, #tpu.memory_space<vmem>>, vector<1x120x80xf32>
    %52 = vector.shape_cast %51 : vector<1x120x80xf32> to vector<120x80xf32>
    %53 = vector.extract_strided_slice %43 {offsets = [0, 2], sizes = [80, 2], strides = [1, 1]} : vector<80x10xf32> to vector<80x2xf32>
    %cst_38 = arith.constant dense<0.000000e+00> : vector<120x2xf32>
    %54 = tpu.matmul %52, %53, %cst_38 {dimension_numbers = #tpu.dot_dimension_numbers<[1], [0], [0], [1], [0, 0, 1, 1], [], []>} : vector<120x80xf32>, vector<80x2xf32>, vector<120x2xf32> -> vector<120x2xf32>
    %55 = arith.addf %50, %54 : vector<120x2xf32>
    %c2 = arith.constant 2 : index
    %c0_39 = arith.constant 0 : index
    %c0_40 = arith.constant 0 : index
    %56 = vector.load %arg9[%c2, %c0_39, %c0_40] : memref<5x120x80xf32, #tpu.memory_space<vmem>>, vector<1x120x80xf32>
    %57 = vector.shape_cast %56 : vector<1x120x80xf32> to vector<120x80xf32>
    %58 = vector.extract_strided_slice %43 {offsets = [0, 4], sizes = [80, 2], strides = [1, 1]} : vector<80x10xf32> to vector<80x2xf32>
    %cst_41 = arith.constant dense<0.000000e+00> : vector<120x2xf32>
    %59 = tpu.matmul %57, %58, %cst_41 {dimension_numbers = #tpu.dot_dimension_numbers<[1], [0], [0], [1], [0, 0, 1, 1], [], []>} : vector<120x80xf32>, vector<80x2xf32>, vector<120x2xf32> -> vector<120x2xf32>
    %60 = arith.addf %55, %59 : vector<120x2xf32>
    %c3 = arith.constant 3 : index
    %c0_42 = arith.constant 0 : index
    %c0_43 = arith.constant 0 : index
    %61 = vector.load %arg9[%c3, %c0_42, %c0_43] : memref<5x120x80xf32, #tpu.memory_space<vmem>>, vector<1x120x80xf32>
    %62 = vector.shape_cast %61 : vector<1x120x80xf32> to vector<120x80xf32>
    %63 = vector.extract_strided_slice %43 {offsets = [0, 6], sizes = [80, 2], strides = [1, 1]} : vector<80x10xf32> to vector<80x2xf32>
    %cst_44 = arith.constant dense<0.000000e+00> : vector<120x2xf32>
    %64 = tpu.matmul %62, %63, %cst_44 {dimension_numbers = #tpu.dot_dimension_numbers<[1], [0], [0], [1], [0, 0, 1, 1], [], []>} : vector<120x80xf32>, vector<80x2xf32>, vector<120x2xf32> -> vector<120x2xf32>
    %65 = arith.addf %60, %64 : vector<120x2xf32>
    %c4 = arith.constant 4 : index
    %c0_45 = arith.constant 0 : index
    %c0_46 = arith.constant 0 : index
    %66 = vector.load %arg9[%c4, %c0_45, %c0_46] : memref<5x120x80xf32, #tpu.memory_space<vmem>>, vector<1x120x80xf32>
    %67 = vector.shape_cast %66 : vector<1x120x80xf32> to vector<120x80xf32>
    %68 = vector.extract_strided_slice %43 {offsets = [0, 8], sizes = [80, 2], strides = [1, 1]} : vector<80x10xf32> to vector<80x2xf32>
    %cst_47 = arith.constant dense<0.000000e+00> : vector<120x2xf32>
    %69 = tpu.matmul %67, %68, %cst_47 {dimension_numbers = #tpu.dot_dimension_numbers<[1], [0], [0], [1], [0, 0, 1, 1], [], []>} : vector<120x80xf32>, vector<80x2xf32>, vector<120x2xf32> -> vector<120x2xf32>
    %70 = arith.addf %65, %69 : vector<120x2xf32>
    %cst_48 = arith.constant 0.000000e+00 : f32
    %71 = vector.broadcast %cst_48 : f32 to vector<120x2xf32>
    %72 = arith.maximumf %70, %71 : vector<120x2xf32>
    %c0_49 = arith.constant 0 : index
    %c0_50 = arith.constant 0 : index
    %73 = vector.load %arg11[%c0_49, %c0_50] : memref<84x120xf32, #tpu.memory_space<vmem>>, vector<84x120xf32>
    %cst_51 = arith.constant dense<0.000000e+00> : vector<84x2xf32>
    %74 = tpu.matmul %73, %72, %cst_51 {dimension_numbers = #tpu.dot_dimension_numbers<[1], [0], [0], [1], [0, 0, 1, 1], [], []>} : vector<84x120xf32>, vector<120x2xf32>, vector<84x2xf32> -> vector<84x2xf32>
    %c0_52 = arith.constant 0 : index
    %c0_53 = arith.constant 0 : index
    %75 = vector.load %arg12[%c0_52, %c0_53] : memref<84x1xf32, #tpu.memory_space<vmem>>, vector<84x1xf32>
    %76 = vector.broadcast %75 : vector<84x1xf32> to vector<84x2xf32>
    %77 = arith.addf %74, %76 : vector<84x2xf32>
    %cst_54 = arith.constant 0.000000e+00 : f32
    %78 = vector.broadcast %cst_54 : f32 to vector<84x2xf32>
    %79 = arith.maximumf %77, %78 : vector<84x2xf32>
    %c0_55 = arith.constant 0 : index
    %c0_56 = arith.constant 0 : index
    %80 = vector.load %arg13[%c0_55, %c0_56] : memref<10x84xf32, #tpu.memory_space<vmem>>, vector<10x84xf32>
    %cst_57 = arith.constant dense<0.000000e+00> : vector<10x2xf32>
    %81 = tpu.matmul %80, %79, %cst_57 {dimension_numbers = #tpu.dot_dimension_numbers<[1], [0], [0], [1], [0, 0, 1, 1], [], []>} : vector<10x84xf32>, vector<84x2xf32>, vector<10x2xf32> -> vector<10x2xf32>
    %c0_58 = arith.constant 0 : index
    %c0_59 = arith.constant 0 : index
    %82 = vector.load %arg14[%c0_58, %c0_59] : memref<10x1xf32, #tpu.memory_space<vmem>>, vector<10x1xf32>
    %83 = vector.broadcast %82 : vector<10x1xf32> to vector<10x2xf32>
    %84 = arith.addf %81, %83 : vector<10x2xf32>
    %c0_60 = arith.constant 0 : index
    %c0_61 = arith.constant 0 : index
    %85 = vector.load %arg15[%c0_60, %c0_61] : memref<10x2xf32, #tpu.memory_space<vmem>>, vector<10x2xf32>
    tpu.vector_store %arg15[%c0_60, %c0_61], %84 {strides = array<i32>} : memref<10x2xf32, #tpu.memory_space<vmem>>, vector<10x2xf32>,
    return
  }
}

</mosaic_0001>

<llo_original>
// kernel: lenet_forward.1
$region0: #{lenet_forward.1}
  #allocation0 [shape = 'u32[]', space=smem, size = 0x4, offset = 0x4, fixed_abs, tag = 'smem constant byte address 0x4 - core index']
  #allocation1 [shape = 'u32[144,128]{1,0:T(1,128)}', space=vmem, size = 0x12000, scoped, tag = 'internal scratch']
  #allocation2 [shape = 'f32[240,24]{1,0:T(8,128)}', space=vmem, size = 0x1e000, scoped, tag = 'scratch operand']
  %s0 = inlined_call_operand.vmem [shape: f32[96,54], index: 0, kind: input, shape index: {}]
  %s1 = inlined_call_operand.vmem [shape: f32[156,96], index: 1, kind: input, shape index: {}]
  %s2 = inlined_call_operand.vmem [shape: f32[156,1], index: 2, kind: input, shape index: {}]
  %s3 = inlined_call_operand.vmem [shape: f32[80,155], index: 3, kind: input, shape index: {}]
  %s4 = inlined_call_operand.vmem [shape: f32[53,26], index: 4, kind: input, shape index: {}]
  %s5 = inlined_call_operand.vmem [shape: f32[176,240], index: 5, kind: input, shape index: {}]
  %s6 = inlined_call_operand.vmem [shape: f32[176,1], index: 6, kind: input, shape index: {}]
  %s7 = inlined_call_operand.vmem [shape: f32[80,175], index: 7, kind: input, shape index: {}]
  %s8 = inlined_call_operand.vmem [shape: f32[23,10], index: 8, kind: input, shape index: {}]
  %s9 = inlined_call_operand.vmem [shape: f32[5,120,80], index: 9, kind: input, shape index: {}]
  %s10 = inlined_call_operand.vmem [shape: f32[120,1], index: 10, kind: input, shape index: {}]
  %s11 = inlined_call_operand.vmem [shape: f32[84,120], index: 11, kind: input, shape index: {}]
  %s12 = inlined_call_operand.vmem [shape: f32[84,1], index: 12, kind: input, shape index: {}]
  %s13 = inlined_call_operand.vmem [shape: f32[10,84], index: 13, kind: input, shape index: {}]
  %s14 = inlined_call_operand.vmem [shape: f32[10,1], index: 14, kind: input, shape index: {}]
  %s15 = inlined_call_operand.vmem [shape: f32[10,2], index: 15, kind: output, shape index: {}]
  %s16 = sld [smem:[#allocation0]]
  $region70: #{lenet_forward.1} parent=0
    _
  %s18 = ssub.s32 1, %s16
  %s19 = scalar_select 0, %s18, %s16
  // Predicated region
  $region2: #{lenet_forward.1} parent=0 // pred_check
    _
  $region3: #{lenet_forward.1} parent=0 // pred_check_branch
    %21 = sbr.rel (0) target = $region5
  $region4: #{lenet_forward.1} parent=0 // pred_region
    _
  $region5: #{lenet_forward.1} parent=0 // pred_fallthru
    _
  // Predicated region
  $region6: #{lenet_forward.1} parent=0 // pred_check
    _
  $region7: #{lenet_forward.1} parent=0 // pred_check_branch
    %23 = sbr.rel (0) target = $region9
  $region8: #{lenet_forward.1} parent=0 // pred_region
    _
  $region9: #{lenet_forward.1} parent=0 // pred_fallthru
    _
  // Predicated region
  $region10: #{lenet_forward.1} parent=0 // pred_check
    _
  $region11: #{lenet_forward.1} parent=0 // pred_check_branch
    %25 = sbr.rel (0) target = $region13
  $region12: #{lenet_forward.1} parent=0 // pred_region
    _
  $region13: #{lenet_forward.1} parent=0 // pred_fallthru
    _
  // Predicated region
  $region14: #{lenet_forward.1} parent=0 // pred_check
    _
  $region15: #{lenet_forward.1} parent=0 // pred_check_branch
    %27 = sbr.rel (0) target = $region17
  $region16: #{lenet_forward.1} parent=0 // pred_region
    _
  $region17: #{lenet_forward.1} parent=0 // pred_fallthru
    _
  // Predicated region
  $region18: #{lenet_forward.1} parent=0 // pred_check
    _
  $region19: #{lenet_forward.1} parent=0 // pred_check_branch
    %29 = sbr.rel (0) target = $region21
  $region20: #{lenet_forward.1} parent=0 // pred_region
    _
  $region21: #{lenet_forward.1} parent=0 // pred_fallthru
    _
  // Predicated region
  $region22: #{lenet_forward.1} parent=0 // pred_check
    _
  $region23: #{lenet_forward.1} parent=0 // pred_check_branch
    %31 = sbr.rel (0) target = $region25
  $region24: #{lenet_forward.1} parent=0 // pred_region
    _
  $region25: #{lenet_forward.1} parent=0 // pred_fallthru
    _
  // Predicated region
  $region26: #{lenet_forward.1} parent=0 // pred_check
    _
  $region27: #{lenet_forward.1} parent=0 // pred_check_branch
    %33 = sbr.rel (0) target = $region29
  $region28: #{lenet_forward.1} parent=0 // pred_region
    _
  $region29: #{lenet_forward.1} parent=0 // pred_fallthru
    _
  // Predicated region
  $region30: #{lenet_forward.1} parent=0 // pred_check
    _
  $region31: #{lenet_forward.1} parent=0 // pred_check_branch
    %35 = sbr.rel (0) target = $region33
  $region32: #{lenet_forward.1} parent=0 // pred_region
    _
  $region33: #{lenet_forward.1} parent=0 // pred_fallthru
    _
  // Predicated region
  $region34: #{lenet_forward.1} parent=0 // pred_check
    _
  $region35: #{lenet_forward.1} parent=0 // pred_check_branch
    %37 = sbr.rel (0) target = $region37
  $region36: #{lenet_forward.1} parent=0 // pred_region
    _
  $region37: #{lenet_forward.1} parent=0 // pred_fallthru
    _
  // Predicated region
  $region38: #{lenet_forward.1} parent=0 // pred_check
    _
  $region39: #{lenet_forward.1} parent=0 // pred_check_branch
    %39 = sbr.rel (0) target = $region41
  $region40: #{lenet_forward.1} parent=0 // pred_region
    _
  $region41: #{lenet_forward.1} parent=0 // pred_fallthru
    _
  // Predicated region
  $region42: #{lenet_forward.1} parent=0 // pred_check
    _
  $region43: #{lenet_forward.1} parent=0 // pred_check_branch
    %41 = sbr.rel (0) target = $region45
  $region44: #{lenet_forward.1} parent=0 // pred_region
    _
  $region45: #{lenet_forward.1} parent=0 // pred_fallthru
    _
  // Predicated region
  $region46: #{lenet_forward.1} parent=0 // pred_check
    _
  $region47: #{lenet_forward.1} parent=0 // pred_check_branch
    %43 = sbr.rel (0) target = $region49
  $region48: #{lenet_forward.1} parent=0 // pred_region
    _
  $region49: #{lenet_forward.1} parent=0 // pred_fallthru
    _
  // Predicated region
  $region50: #{lenet_forward.1} parent=0 // pred_check
    _
  $region51: #{lenet_forward.1} parent=0 // pred_check_branch
    %45 = sbr.rel (0) target = $region53
  $region52: #{lenet_forward.1} parent=0 // pred_region
    _
  $region53: #{lenet_forward.1} parent=0 // pred_fallthru
    _
  // Predicated region
  $region54: #{lenet_forward.1} parent=0 // pred_check
    _
  $region55: #{lenet_forward.1} parent=0 // pred_check_branch
    %47 = sbr.rel (0) target = $region57
  $region56: #{lenet_forward.1} parent=0 // pred_region
    _
  $region57: #{lenet_forward.1} parent=0 // pred_fallthru
    _
  // Predicated region
  $region58: #{lenet_forward.1} parent=0 // pred_check
    _
  $region59: #{lenet_forward.1} parent=0 // pred_check_branch
    %49 = sbr.rel (0) target = $region61
  $region60: #{lenet_forward.1} parent=0 // pred_region
    _
  $region61: #{lenet_forward.1} parent=0 // pred_fallthru
    _
  %v50 = vld [vmem:[%s1] sm:$0xff]
  %v51 = vld [vmem:[%s1 + $0x8] sm:$0xff]
  %v52 = vld [vmem:[%s1 + $0x10] sm:$0xff]
  %v53 = vld [vmem:[%s1 + $0x18] sm:$0xff]
  %v54 = vld [vmem:[%s1 + $0x20] sm:$0xff]
  %v55 = vld [vmem:[%s1 + $0x28] sm:$0xff]
  %v56 = vld [vmem:[%s1 + $0x30] sm:$0xff]
  %v57 = vld [vmem:[%s1 + $0x38] sm:$0xff]
  %v58 = vld [vmem:[%s1 + $0x40] sm:$0xff]
  %v59 = vld [vmem:[%s1 + $0x48] sm:$0xff]
  %v60 = vld [vmem:[%s1 + $0x50] sm:$0xff]
  %v61 = vld [vmem:[%s1 + $0x58] sm:$0xff]
  %v62 = vld [vmem:[%s1 + $0x60] sm:$0xff]
  %v63 = vld [vmem:[%s1 + $0x68] sm:$0xff]
  %v64 = vld [vmem:[%s1 + $0x70] sm:$0xff]
  %v65 = vld [vmem:[%s1 + $0x78] sm:$0xff]
  %v66 = vld [vmem:[%s1 + $0x80] sm:$0xff]
  %v67 = vld [vmem:[%s1 + $0x88] sm:$0xff]
  %v68 = vld [vmem:[%s1 + $0x90] sm:$0xff]
  %v69 = vld [vmem:[%s1 + $0x98] sm:$0xf]
  %v70 = vld [vmem:[%s0] sm:$0xff]
  %v71 = vld [vmem:[%s0 + $0x8] sm:$0xff]
  %v72 = vld [vmem:[%s0 + $0x10] sm:$0xff]
  %v73 = vld [vmem:[%s0 + $0x18] sm:$0xff]
  %v74 = vld [vmem:[%s0 + $0x20] sm:$0xff]
  %v75 = vld [vmem:[%s0 + $0x28] sm:$0xff]
  %v76 = vld [vmem:[%s0 + $0x30] sm:$0xff]
  %v77 = vld [vmem:[%s0 + $0x38] sm:$0xff]
  %v78 = vld [vmem:[%s0 + $0x40] sm:$0xff]
  %v79 = vld [vmem:[%s0 + $0x48] sm:$0xff]
  %v80 = vld [vmem:[%s0 + $0x50] sm:$0xff]
  %v81 = vld [vmem:[%s0 + $0x58] sm:$0xff]
  %v82 = vld [vmem:[%s2] sm:$0xff]
  %v83 = vld [vmem:[%s2 + $0x8] sm:$0xff]
  %v84 = vld [vmem:[%s2 + $0x10] sm:$0xff]
  %v85 = vld [vmem:[%s2 + $0x18] sm:$0xff]
  %v86 = vld [vmem:[%s2 + $0x20] sm:$0xff]
  %v87 = vld [vmem:[%s2 + $0x28] sm:$0xff]
  %v88 = vld [vmem:[%s2 + $0x30] sm:$0xff]
  %v89 = vld [vmem:[%s2 + $0x38] sm:$0xff]
  %v90 = vld [vmem:[%s2 + $0x40] sm:$0xff]
  %v91 = vld [vmem:[%s2 + $0x48] sm:$0xff]
  %v92 = vld [vmem:[%s2 + $0x50] sm:$0xff]
  %v93 = vld [vmem:[%s2 + $0x58] sm:$0xff]
  %v94 = vld [vmem:[%s2 + $0x60] sm:$0xff]
  %v95 = vld [vmem:[%s2 + $0x68] sm:$0xff]
  %v96 = vld [vmem:[%s2 + $0x70] sm:$0xff]
  %v97 = vld [vmem:[%s2 + $0x78] sm:$0xff]
  %v98 = vld [vmem:[%s2 + $0x80] sm:$0xff]
  %v99 = vld [vmem:[%s2 + $0x88] sm:$0xff]
  %v100 = vld [vmem:[%s2 + $0x90] sm:$0xff]
  %v101 = vld [vmem:[%s2 + $0x98] sm:$0xf]
  %103 = vset.pattern.permute.xlu0 0
  %104 = vperm.xlu0 %103, %v82
  %v105 = vpop.permute.xlu0 %104
  %108 = vset.pattern.permute.xlu0 0
  %109 = vperm.xlu0 %108, %v83
  %v110 = vpop.permute.xlu0 %109
  %113 = vset.pattern.permute.xlu0 0
  %114 = vperm.xlu0 %113, %v84
  %v115 = vpop.permute.xlu0 %114
  %118 = vset.pattern.permute.xlu0 0
  %119 = vperm.xlu0 %118, %v85
  %v120 = vpop.permute.xlu0 %119
  %123 = vset.pattern.permute.xlu0 0
  %124 = vperm.xlu0 %123, %v86
  %v125 = vpop.permute.xlu0 %124
  %128 = vset.pattern.permute.xlu0 0
  %129 = vperm.xlu0 %128, %v87
  %v130 = vpop.permute.xlu0 %129
  %133 = vset.pattern.permute.xlu0 0
  %134 = vperm.xlu0 %133, %v88
  %v135 = vpop.permute.xlu0 %134
  %138 = vset.pattern.permute.xlu0 0
  %139 = vperm.xlu0 %138, %v89
  %v140 = vpop.permute.xlu0 %139
  %143 = vset.pattern.permute.xlu0 0
  %144 = vperm.xlu0 %143, %v90
  %v145 = vpop.permute.xlu0 %144
  %148 = vset.pattern.permute.xlu0 0
  %149 = vperm.xlu0 %148, %v91
  %v150 = vpop.permute.xlu0 %149
  %153 = vset.pattern.permute.xlu0 0
  %154 = vperm.xlu0 %153, %v92
  %v155 = vpop.permute.xlu0 %154
  %158 = vset.pattern.permute.xlu0 0
  %159 = vperm.xlu0 %158, %v93
  %v160 = vpop.permute.xlu0 %159
  %163 = vset.pattern.permute.xlu0 0
  %164 = vperm.xlu0 %163, %v94
  %v165 = vpop.permute.xlu0 %164
  %168 = vset.pattern.permute.xlu0 0
  %169 = vperm.xlu0 %168, %v95
  %v170 = vpop.permute.xlu0 %169
  %173 = vset.pattern.permute.xlu0 0
  %174 = vperm.xlu0 %173, %v96
  %v175 = vpop.permute.xlu0 %174
  %178 = vset.pattern.permute.xlu0 0
  %179 = vperm.xlu0 %178, %v97
  %v180 = vpop.permute.xlu0 %179
  %183 = vset.pattern.permute.xlu0 0
  %184 = vperm.xlu0 %183, %v98
  %v185 = vpop.permute.xlu0 %184
  %188 = vset.pattern.permute.xlu0 0
  %189 = vperm.xlu0 %188, %v99
  %v190 = vpop.permute.xlu0 %189
  %193 = vset.pattern.permute.xlu0 0
  %194 = vperm.xlu0 %193, %v100
  %v195 = vpop.permute.xlu0 %194
  %198 = vset.pattern.permute.xlu0 0
  %199 = vperm.xlu0 %198, %v101
  %v200 = vpop.permute.xlu0 %199
  %vm202 = vcmask 785408
  %v204 = vsel %vm202, %v50, 0
  %v207 = vsel %vm202, %v51, 0
  %v210 = vsel %vm202, %v52, 0
  %v213 = vsel %vm202, %v53, 0
  %v216 = vsel %vm202, %v54, 0
  %v219 = vsel %vm202, %v55, 0
  %v222 = vsel %vm202, %v56, 0
  %v225 = vsel %vm202, %v57, 0
  %v228 = vsel %vm202, %v58, 0
  %v231 = vsel %vm202, %v59, 0
  %v234 = vsel %vm202, %v60, 0
  %v237 = vsel %vm202, %v61, 0
  %v240 = vsel %vm202, %v62, 0
  %v243 = vsel %vm202, %v63, 0
  %v246 = vsel %vm202, %v64, 0
  %v249 = vsel %vm202, %v65, 0
  %v252 = vsel %vm202, %v66, 0
  %v255 = vsel %vm202, %v67, 0
  %v258 = vsel %vm202, %v68, 0
  %v261 = vsel %vm202, %v69, 0
  %263 = vmatprep.subr.mxu0 0.0
  %264 = vmatpush1.msra.mxu0 %v70
  %265 = vmatprep.subr.mxu0 0.0
  %266 = vmatpush1.msra.mxu0 %v71
  %267 = vmatprep.subr.mxu0 0.0
  %268 = vmatpush1.msra.mxu0 %v72
  %269 = vmatprep.subr.mxu0 0.0
  %270 = vmatpush1.msra.mxu0 %v73
  %271 = vmatprep.subr.mxu0 0.0
  %272 = vmatpush1.msra.mxu0 %v74
  %273 = vmatprep.subr.mxu0 0.0
  %274 = vmatpush1.msra.mxu0 %v75
  %275 = vmatprep.subr.mxu0 0.0
  %276 = vmatpush1.msra.mxu0 %v76
  %277 = vmatprep.subr.mxu0 0.0
  %278 = vmatpush1.msra.mxu0 %v77
  %279 = vmatprep.subr.mxu0 0.0
  %280 = vmatpush1.msra.mxu0 %v78
  %281 = vmatprep.subr.mxu0 0.0
  %282 = vmatpush1.msra.mxu0 %v79
  %283 = vmatprep.subr.mxu0 0.0
  %284 = vmatpush1.msra.mxu0 %v80
  %285 = vmatprep.subr.mxu0 0.0
  %286 = vmatpush1.msra.mxu0 %v81
  %287 = vmatprep.subr.mxu0 0.0
  %288 = vmatpush1.msra.mxu0 0.0
  %289 = vmatprep.subr.mxu0 0.0
  %290 = vmatpush1.msra.mxu0 0.0
  %291 = vmatprep.subr.mxu0 0.0
  %292 = vmatpush1.msra.mxu0 0.0
  %293 = vmatprep.subr.mxu0 0.0
  %294 = vmatpush1.msra.mxu0 0.0
  %295 = vmatprep.subr.mxu0 0.0
  %296 = vmatpush1.msra.mxu0 0.0
  %297 = vmatprep.subr.mxu0 0.0
  %298 = vmatpush1.msra.mxu0 0.0
  %299 = vmatprep.subr.mxu0 0.0
  %300 = vmatpush1.msra.mxu0 0.0
  %301 = vmatprep.subr.mxu0 0.0
  %302 = vmatpush1.msra.mxu0 0.0
  %303 = vmatprep.subr.mxu0 0.0
  %304 = vmatpush1.msra.mxu0 0.0
  %305 = vmatprep.subr.mxu0 0.0
  %306 = vmatpush1.msra.mxu0 0.0
  %307 = vmatprep.subr.mxu0 0.0
  %308 = vmatpush1.msra.mxu0 0.0
  %309 = vmatprep.subr.mxu0 0.0
  %310 = vmatpush1.msra.mxu0 0.0
  %311 = vmatprep.subr.mxu0 0.0
  %312 = vmatpush1.msra.mxu0 0.0
  %313 = vmatprep.subr.mxu0 0.0
  %314 = vmatpush1.msra.mxu0 0.0
  %315 = vmatprep.subr.mxu0 0.0
  %316 = vmatpush1.msra.mxu0 0.0
  %317 = vmatprep.subr.mxu0 0.0
  %318 = vmatpush1.msra.mxu0 0.0
  %319 = vmatprep.subr.mxu0 0.0
  %320 = vmatpush1.msra.mxu0 0.0
  %321 = vmatprep.subr.mxu0 0.0
  %322 = vmatpush1.msra.mxu0 0.0
  %323 = vmatprep.subr.mxu0 0.0
  %324 = vmatpush1.msra.mxu0 0.0
  %325 = vmatprep.subr.mxu0 0.0
  %326 = vmatpush1.msra.mxu0 0.0
  %327 = vmatprep.mubr.f32.mxu0 0.0
  %328 = vmatmul.mubr.f32.gmra.mrb[0].mxu0 %v204
  %v329 = vpop.f32.mrb[0].mxu0
  %v330 = vadd.f32 %v105, %v329
  %v331 = vpop.f32.mrb[0].mxu0
  %332 = vmatprep.mubr.f32.mxu0 0.0
  %333 = vmatmul.mubr.f32.gmra.mrb[0].mxu0 %v207
  %v334 = vpop.f32.mrb[0].mxu0
  %v335 = vadd.f32 %v110, %v334
  %v336 = vpop.f32.mrb[0].mxu0
  %337 = vmatprep.mubr.f32.mxu0 0.0
  %338 = vmatmul.mubr.f32.gmra.mrb[0].mxu0 %v210
  %v339 = vpop.f32.mrb[0].mxu0
  %v340 = vadd.f32 %v115, %v339
  %v341 = vpop.f32.mrb[0].mxu0
  %342 = vmatprep.mubr.f32.mxu0 0.0
  %343 = vmatmul.mubr.f32.gmra.mrb[0].mxu0 %v213
  %v344 = vpop.f32.mrb[0].mxu0
  %v345 = vadd.f32 %v120, %v344
  %v346 = vpop.f32.mrb[0].mxu0
  %347 = vmatprep.mubr.f32.mxu0 0.0
  %348 = vmatmul.mubr.f32.gmra.mrb[0].mxu0 %v216
  %v349 = vpop.f32.mrb[0].mxu0
  %v350 = vadd.f32 %v125, %v349
  %v351 = vpop.f32.mrb[0].mxu0
  %352 = vmatprep.mubr.f32.mxu0 0.0
  %353 = vmatmul.mubr.f32.gmra.mrb[0].mxu0 %v219
  %v354 = vpop.f32.mrb[0].mxu0
  %v355 = vadd.f32 %v130, %v354
  %v356 = vpop.f32.mrb[0].mxu0
  %357 = vmatprep.mubr.f32.mxu0 0.0
  %358 = vmatmul.mubr.f32.gmra.mrb[0].mxu0 %v222
  %v359 = vpop.f32.mrb[0].mxu0
  %v360 = vadd.f32 %v135, %v359
  %v361 = vpop.f32.mrb[0].mxu0
  %362 = vmatprep.mubr.f32.mxu0 0.0
  %363 = vmatmul.mubr.f32.gmra.mrb[0].mxu0 %v225
  %v364 = vpop.f32.mrb[0].mxu0
  %v365 = vadd.f32 %v140, %v364
  %v366 = vpop.f32.mrb[0].mxu0
  %367 = vmatprep.mubr.f32.mxu0 0.0
  %368 = vmatmul.mubr.f32.gmra.mrb[0].mxu0 %v228
  %v369 = vpop.f32.mrb[0].mxu0
  %v370 = vadd.f32 %v145, %v369
  %v371 = vpop.f32.mrb[0].mxu0
  %372 = vmatprep.mubr.f32.mxu0 0.0
  %373 = vmatmul.mubr.f32.gmra.mrb[0].mxu0 %v231
  %v374 = vpop.f32.mrb[0].mxu0
  %v375 = vadd.f32 %v150, %v374
  %v376 = vpop.f32.mrb[0].mxu0
  %377 = vmatprep.mubr.f32.mxu0 0.0
  %378 = vmatmul.mubr.f32.gmra.mrb[0].mxu0 %v234
  %v379 = vpop.f32.mrb[0].mxu0
  %v380 = vadd.f32 %v155, %v379
  %v381 = vpop.f32.mrb[0].mxu0
  %382 = vmatprep.mubr.f32.mxu0 0.0
  %383 = vmatmul.mubr.f32.gmra.mrb[0].mxu0 %v237
  %v384 = vpop.f32.mrb[0].mxu0
  %v385 = vadd.f32 %v160, %v384
  %v386 = vpop.f32.mrb[0].mxu0
  %387 = vmatprep.mubr.f32.mxu0 0.0
  %388 = vmatmul.mubr.f32.gmra.mrb[0].mxu0 %v240
  %v389 = vpop.f32.mrb[0].mxu0
  %v390 = vadd.f32 %v165, %v389
  %v391 = vpop.f32.mrb[0].mxu0
  %392 = vmatprep.mubr.f32.mxu0 0.0
  %393 = vmatmul.mubr.f32.gmra.mrb[0].mxu0 %v243
  %v394 = vpop.f32.mrb[0].mxu0
  %v395 = vadd.f32 %v170, %v394
  %v396 = vpop.f32.mrb[0].mxu0
  %397 = vmatprep.mubr.f32.mxu0 0.0
  %398 = vmatmul.mubr.f32.gmra.mrb[0].mxu0 %v246
  %v399 = vpop.f32.mrb[0].mxu0
  %v400 = vadd.f32 %v175, %v399
  %v401 = vpop.f32.mrb[0].mxu0
  %402 = vmatprep.mubr.f32.mxu0 0.0
  %403 = vmatmul.mubr.f32.gmra.mrb[0].mxu0 %v249
  %v404 = vpop.f32.mrb[0].mxu0
  %v405 = vadd.f32 %v180, %v404
  %v406 = vpop.f32.mrb[0].mxu0
  %407 = vmatprep.mubr.f32.mxu0 0.0
  %408 = vmatmul.mubr.f32.gmra.mrb[0].mxu0 %v252
  %v409 = vpop.f32.mrb[0].mxu0
  %v410 = vadd.f32 %v185, %v409
  %v411 = vpop.f32.mrb[0].mxu0
  %412 = vmatprep.mubr.f32.mxu0 0.0
  %413 = vmatmul.mubr.f32.gmra.mrb[0].mxu0 %v255
  %v414 = vpop.f32.mrb[0].mxu0
  %v415 = vadd.f32 %v190, %v414
  %v416 = vpop.f32.mrb[0].mxu0
  %417 = vmatprep.mubr.f32.mxu0 0.0
  %418 = vmatmul.mubr.f32.gmra.mrb[0].mxu0 %v258
  %v419 = vpop.f32.mrb[0].mxu0
  %v420 = vadd.f32 %v195, %v419
  %v421 = vpop.f32.mrb[0].mxu0
  %422 = vmatprep.mubr.f32.mxu0 0.0
  %423 = vmatmul.mubr.f32.gmra.mrb[0].mxu0 %v261
  %v424 = vpop.f32.mrb[0].mxu0
  %v425 = vadd.f32 %v200, %v424
  %v426 = vpop.f32.mrb[0].mxu0
  %427 = vdwg.mxu0
  %v428 = vmax.f32 %v330, 0.0
  %v429 = vmax.f32 %v335, 0.0
  %v430 = vmax.f32 %v340, 0.0
  %v431 = vmax.f32 %v345, 0.0
  %v432 = vmax.f32 %v350, 0.0
  %v433 = vmax.f32 %v355, 0.0
  %v434 = vmax.f32 %v360, 0.0
  %v435 = vmax.f32 %v365, 0.0
  %v436 = vmax.f32 %v370, 0.0
  %v437 = vmax.f32 %v375, 0.0
  %v438 = vmax.f32 %v380, 0.0
  %v439 = vmax.f32 %v385, 0.0
  %v440 = vmax.f32 %v390, 0.0
  %v441 = vmax.f32 %v395, 0.0
  %v442 = vmax.f32 %v400, 0.0
  %v443 = vmax.f32 %v405, 0.0
  %v444 = vmax.f32 %v410, 0.0
  %v445 = vmax.f32 %v415, 0.0
  %v446 = vmax.f32 %v420, 0.0
  %v447 = vmax.f32 %v425, 0.0
  %468 = vrot.lane.b32.xlu0 %v428, 127
  %v469 = vpop.permute.xlu0 %468
  %470 = vrot.lane.b32.xlu0 %v429, 127
  %v471 = vpop.permute.xlu0 %470
  %472 = vrot.lane.b32.xlu0 %v430, 127
  %v473 = vpop.permute.xlu0 %472
  %474 = vrot.lane.b32.xlu0 %v431, 127
  %v475 = vpop.permute.xlu0 %474
  %476 = vrot.lane.b32.xlu0 %v432, 127
  %v477 = vpop.permute.xlu0 %476
  %478 = vrot.lane.b32.xlu0 %v433, 127
  %v479 = vpop.permute.xlu0 %478
  %480 = vrot.lane.b32.xlu0 %v434, 127
  %v481 = vpop.permute.xlu0 %480
  %482 = vrot.lane.b32.xlu0 %v435, 127
  %v483 = vpop.permute.xlu0 %482
  %484 = vrot.lane.b32.xlu0 %v436, 127
  %v485 = vpop.permute.xlu0 %484
  %486 = vrot.lane.b32.xlu0 %v437, 127
  %v487 = vpop.permute.xlu0 %486
  %488 = vrot.lane.b32.xlu0 %v438, 127
  %v489 = vpop.permute.xlu0 %488
  %490 = vrot.lane.b32.xlu0 %v439, 127
  %v491 = vpop.permute.xlu0 %490
  %492 = vrot.lane.b32.xlu0 %v440, 127
  %v493 = vpop.permute.xlu0 %492
  %494 = vrot.lane.b32.xlu0 %v441, 127
  %v495 = vpop.permute.xlu0 %494
  %496 = vrot.lane.b32.xlu0 %v442, 127
  %v497 = vpop.permute.xlu0 %496
  %498 = vrot.lane.b32.xlu0 %v443, 127
  %v499 = vpop.permute.xlu0 %498
  %500 = vrot.lane.b32.xlu0 %v444, 127
  %v501 = vpop.permute.xlu0 %500
  %502 = vrot.lane.b32.xlu0 %v445, 127
  %v503 = vpop.permute.xlu0 %502
  %504 = vrot.lane.b32.xlu0 %v446, 127
  %v505 = vpop.permute.xlu0 %504
  %506 = vrot.lane.b32.xlu0 %v447, 127
  %v507 = vpop.permute.xlu0 %506
  %v528 = vmax.f32 %v428, %v469
  %v529 = vmax.f32 %v429, %v471
  %v530 = vmax.f32 %v430, %v473
  %v531 = vmax.f32 %v431, %v475
  %v532 = vmax.f32 %v432, %v477
  %v533 = vmax.f32 %v433, %v479
  %v534 = vmax.f32 %v434, %v481
  %v535 = vmax.f32 %v435, %v483
  %v536 = vmax.f32 %v436, %v485
  %v537 = vmax.f32 %v437, %v487
  %v538 = vmax.f32 %v438, %v489
  %v539 = vmax.f32 %v439, %v491
  %v540 = vmax.f32 %v440, %v493
  %v541 = vmax.f32 %v441, %v495
  %v542 = vmax.f32 %v442, %v497
  %v543 = vmax.f32 %v443, %v499
  %v544 = vmax.f32 %v444, %v501
  %v545 = vmax.f32 %v445, %v503
  %v546 = vmax.f32 %v446, %v505
  %v547 = vmax.f32 %v447, %v507
  %vm568 = vcmask 1046528
  %v569 = vrot.slane %v528, 1
  %v570 = vrot.slane %v529, 1
  %v571 = vsel %vm568, %v569, %v570
  %v572 = vrot.slane %v530, 1
  %v573 = vsel %vm568, %v570, %v572
  %v574 = vrot.slane %v531, 1
  %v575 = vsel %vm568, %v572, %v574
  %v576 = vrot.slane %v532, 1
  %v577 = vsel %vm568, %v574, %v576
  %v578 = vrot.slane %v533, 1
  %v579 = vsel %vm568, %v576, %v578
  %v580 = vrot.slane %v534, 1
  %v581 = vsel %vm568, %v578, %v580
  %v582 = vrot.slane %v535, 1
  %v583 = vsel %vm568, %v580, %v582
  %v584 = vrot.slane %v536, 1
  %v585 = vsel %vm568, %v582, %v584
  %v586 = vrot.slane %v537, 1
  %v587 = vsel %vm568, %v584, %v586
  %v588 = vrot.slane %v538, 1
  %v589 = vsel %vm568, %v586, %v588
  %v590 = vrot.slane %v539, 1
  %v591 = vsel %vm568, %v588, %v590
  %v592 = vrot.slane %v540, 1
  %v593 = vsel %vm568, %v590, %v592
  %v594 = vrot.slane %v541, 1
  %v595 = vsel %vm568, %v592, %v594
  %v596 = vrot.slane %v542, 1
  %v597 = vsel %vm568, %v594, %v596
  %v598 = vrot.slane %v543, 1
  %v599 = vsel %vm568, %v596, %v598
  %v600 = vrot.slane %v544, 1
  %v601 = vsel %vm568, %v598, %v600
  %v602 = vrot.slane %v545, 1
  %v603 = vsel %vm568, %v600, %v602
  %v604 = vrot.slane %v546, 1
  %v605 = vsel %vm568, %v602, %v604
  %v606 = vrot.slane %v547, 1
  %v607 = vsel %vm568, %v604, %v606
  %v628 = vmax.f32 %v528, %v571
  %v629 = vmax.f32 %v529, %v573
  %v630 = vmax.f32 %v530, %v575
  %v631 = vmax.f32 %v531, %v577
  %v632 = vmax.f32 %v532, %v579
  %v633 = vmax.f32 %v533, %v581
  %v634 = vmax.f32 %v534, %v583
  %v635 = vmax.f32 %v535, %v585
  %v636 = vmax.f32 %v536, %v587
  %v637 = vmax.f32 %v537, %v589
  %v638 = vmax.f32 %v538, %v591
  %v639 = vmax.f32 %v539, %v593
  %v640 = vmax.f32 %v540, %v595
  %v641 = vmax.f32 %v541, %v597
  %v642 = vmax.f32 %v542, %v599
  %v643 = vmax.f32 %v543, %v601
  %v644 = vmax.f32 %v544, %v603
  %v645 = vmax.f32 %v545, %v605
  %v646 = vmax.f32 %v546, %v607
  %v647 = vmax.f32 %v547, %v606
  %v648 = vld [vmem:[%s3] sm:$0xff]
  %v649 = vld [vmem:[%s3 + $0x8] sm:$0xff]
  %v650 = vld [vmem:[%s3 + $0x10] sm:$0xff]
  %v651 = vld [vmem:[%s3 + $0x18] sm:$0xff]
  %v652 = vld [vmem:[%s3 + $0x20] sm:$0xff]
  %v653 = vld [vmem:[%s3 + $0x28] sm:$0xff]
  %v654 = vld [vmem:[%s3 + $0x30] sm:$0xff]
  %v655 = vld [vmem:[%s3 + $0x38] sm:$0xff]
  %v656 = vld [vmem:[%s3 + $0x40] sm:$0xff]
  %v657 = vld [vmem:[%s3 + $0x48] sm:$0xff]
  %v658 = vld [vmem:[%s3 + $0x50] sm:$0xff]
  %v659 = vld [vmem:[%s3 + $0x58] sm:$0xff]
  %v660 = vld [vmem:[%s3 + $0x60] sm:$0xff]
  %v661 = vld [vmem:[%s3 + $0x68] sm:$0xff]
  %v662 = vld [vmem:[%s3 + $0x70] sm:$0xff]
  %v663 = vld [vmem:[%s3 + $0x78] sm:$0xff]
  %v664 = vld [vmem:[%s3 + $0x80] sm:$0xff]
  %v665 = vld [vmem:[%s3 + $0x88] sm:$0xff]
  %v666 = vld [vmem:[%s3 + $0x90] sm:$0xff]
  %v667 = vld [vmem:[%s3 + $0x98] sm:$0xff]
  %v668 = vld [vmem:[%s4] sm:$0xff]
  %v669 = vld [vmem:[%s4 + $0x8] sm:$0xff]
  %v670 = vld [vmem:[%s4 + $0x10] sm:$0xff]
  %v671 = vld [vmem:[%s4 + $0x18] sm:$0xff]
  %v672 = vld [vmem:[%s4 + $0x20] sm:$0xff]
  %v673 = vld [vmem:[%s4 + $0x28] sm:$0xff]
  %v674 = vld [vmem:[%s4 + $0x30] sm:$0x1f]
  %vm675 = vcmask 433152
  %v677 = vsel %vm675, %v628, 0
  %v680 = vsel %vm675, %v629, 0
  %v683 = vsel %vm675, %v630, 0
  %v686 = vsel %vm675, %v631, 0
  %v689 = vsel %vm675, %v632, 0
  %v692 = vsel %vm675, %v633, 0
  %v695 = vsel %vm675, %v634, 0
  %v698 = vsel %vm675, %v635, 0
  %v701 = vsel %vm675, %v636, 0
  %v704 = vsel %vm675, %v637, 0
  %v707 = vsel %vm675, %v638, 0
  %v710 = vsel %vm675, %v639, 0
  %v713 = vsel %vm675, %v640, 0
  %v716 = vsel %vm675, %v641, 0
  %v719 = vsel %vm675, %v642, 0
  %v722 = vsel %vm675, %v643, 0
  %v725 = vsel %vm675, %v644, 0
  %v728 = vsel %vm675, %v645, 0
  %v731 = vsel %vm675, %v646, 0
  %v734 = vsel %vm675, %v647, 0
  %vm736 = vcmask 1044480
  %v738 = vsel %vm736, %v674, 0
  %740 = vmatprep.subr.mxu0 0.0
  %741 = vmatpush1.msra.mxu0 %v668
  %742 = vmatprep.subr.mxu0 0.0
  %743 = vmatpush1.msra.mxu0 %v669
  %744 = vmatprep.subr.mxu0 0.0
  %745 = vmatpush1.msra.mxu0 %v670
  %746 = vmatprep.subr.mxu0 0.0
  %747 = vmatpush1.msra.mxu0 %v671
  %748 = vmatprep.subr.mxu0 0.0
  %749 = vmatpush1.msra.mxu0 %v672
  %750 = vmatprep.subr.mxu0 0.0
  %751 = vmatpush1.msra.mxu0 %v673
  %752 = vmatprep.subr.mxu0 0.0
  %753 = vmatpush1.msra.mxu0 %v738
  %754 = vmatprep.subr.mxu0 0.0
  %755 = vmatpush1.msra.mxu0 0.0
  %756 = vmatprep.subr.mxu0 0.0
  %757 = vmatpush1.msra.mxu0 0.0
  %758 = vmatprep.subr.mxu0 0.0
  %759 = vmatpush1.msra.mxu0 0.0
  %760 = vmatprep.subr.mxu0 0.0
  %761 = vmatpush1.msra.mxu0 0.0
  %762 = vmatprep.subr.mxu0 0.0
  %763 = vmatpush1.msra.mxu0 0.0
  %764 = vmatprep.subr.mxu0 0.0
  %765 = vmatpush1.msra.mxu0 0.0
  %766 = vmatprep.subr.mxu0 0.0
  %767 = vmatpush1.msra.mxu0 0.0
  %768 = vmatprep.subr.mxu0 0.0
  %769 = vmatpush1.msra.mxu0 0.0
  %770 = vmatprep.subr.mxu0 0.0
  %771 = vmatpush1.msra.mxu0 0.0
  %772 = vmatprep.subr.mxu0 0.0
  %773 = vmatpush1.msra.mxu0 0.0
  %774 = vmatprep.subr.mxu0 0.0
  %775 = vmatpush1.msra.mxu0 0.0
  %776 = vmatprep.subr.mxu0 0.0
  %777 = vmatpush1.msra.mxu0 0.0
  %778 = vmatprep.subr.mxu0 0.0
  %779 = vmatpush1.msra.mxu0 0.0
  %780 = vmatprep.subr.mxu0 0.0
  %781 = vmatpush1.msra.mxu0 0.0
  %782 = vmatprep.subr.mxu0 0.0
  %783 = vmatpush1.msra.mxu0 0.0
  %784 = vmatprep.subr.mxu0 0.0
  %785 = vmatpush1.msra.mxu0 0.0
  %786 = vmatprep.subr.mxu0 0.0
  %787 = vmatpush1.msra.mxu0 0.0
  %788 = vmatprep.subr.mxu0 0.0
  %789 = vmatpush1.msra.mxu0 0.0
  %790 = vmatprep.subr.mxu0 0.0
  %791 = vmatpush1.msra.mxu0 0.0
  %792 = vmatprep.subr.mxu0 0.0
  %793 = vmatpush1.msra.mxu0 0.0
  %794 = vmatprep.subr.mxu0 0.0
  %795 = vmatpush1.msra.mxu0 0.0
  %796 = vmatprep.subr.mxu0 0.0
  %797 = vmatpush1.msra.mxu0 0.0
  %798 = vmatprep.subr.mxu0 0.0
  %799 = vmatpush1.msra.mxu0 0.0
  %800 = vmatprep.subr.mxu0 0.0
  %801 = vmatpush1.msra.mxu0 0.0
  %802 = vmatprep.subr.mxu0 0.0
  %803 = vmatpush1.msra.mxu0 0.0
  %804 = vmatprep.mubr.f32.mxu0 0.0
  %805 = vmatmul.mubr.f32.gmra.mrb[0].mxu0 %v677
  %v806 = vpop.f32.mrb[0].mxu0
  %v807 = vadd.f32 0.0, %v806
  %v808 = vpop.f32.mrb[0].mxu0
  %809 = vmatprep.mubr.f32.mxu0 0.0
  %810 = vmatmul.mubr.f32.gmra.mrb[0].mxu0 %v680
  %v811 = vpop.f32.mrb[0].mxu0
  %v812 = vadd.f32 0.0, %v811
  %v813 = vpop.f32.mrb[0].mxu0
  %814 = vmatprep.mubr.f32.mxu0 0.0
  %815 = vmatmul.mubr.f32.gmra.mrb[0].mxu0 %v683
  %v816 = vpop.f32.mrb[0].mxu0
  %v817 = vadd.f32 0.0, %v816
  %v818 = vpop.f32.mrb[0].mxu0
  %819 = vmatprep.mubr.f32.mxu0 0.0
  %820 = vmatmul.mubr.f32.gmra.mrb[0].mxu0 %v686
  %v821 = vpop.f32.mrb[0].mxu0
  %v822 = vadd.f32 0.0, %v821
  %v823 = vpop.f32.mrb[0].mxu0
  %824 = vmatprep.mubr.f32.mxu0 0.0
  %825 = vmatmul.mubr.f32.gmra.mrb[0].mxu0 %v689
  %v826 = vpop.f32.mrb[0].mxu0
  %v827 = vadd.f32 0.0, %v826
  %v828 = vpop.f32.mrb[0].mxu0
  %829 = vmatprep.mubr.f32.mxu0 0.0
  %830 = vmatmul.mubr.f32.gmra.mrb[0].mxu0 %v692
  %v831 = vpop.f32.mrb[0].mxu0
  %v832 = vadd.f32 0.0, %v831
  %v833 = vpop.f32.mrb[0].mxu0
  %834 = vmatprep.mubr.f32.mxu0 0.0
  %835 = vmatmul.mubr.f32.gmra.mrb[0].mxu0 %v695
  %v836 = vpop.f32.mrb[0].mxu0
  %v837 = vadd.f32 0.0, %v836
  %v838 = vpop.f32.mrb[0].mxu0
  %839 = vmatprep.mubr.f32.mxu0 0.0
  %840 = vmatmul.mubr.f32.gmra.mrb[0].mxu0 %v698
  %v841 = vpop.f32.mrb[0].mxu0
  %v842 = vadd.f32 0.0, %v841
  %v843 = vpop.f32.mrb[0].mxu0
  %844 = vmatprep.mubr.f32.mxu0 0.0
  %845 = vmatmul.mubr.f32.gmra.mrb[0].mxu0 %v701
  %v846 = vpop.f32.mrb[0].mxu0
  %v847 = vadd.f32 0.0, %v846
  %v848 = vpop.f32.mrb[0].mxu0
  %849 = vmatprep.mubr.f32.mxu0 0.0
  %850 = vmatmul.mubr.f32.gmra.mrb[0].mxu0 %v704
  %v851 = vpop.f32.mrb[0].mxu0
  %v852 = vadd.f32 0.0, %v851
  %v853 = vpop.f32.mrb[0].mxu0
  %854 = vmatprep.mubr.f32.mxu0 0.0
  %855 = vmatmul.mubr.f32.gmra.mrb[0].mxu0 %v707
  %v856 = vpop.f32.mrb[0].mxu0
  %v857 = vadd.f32 0.0, %v856
  %v858 = vpop.f32.mrb[0].mxu0
  %859 = vmatprep.mubr.f32.mxu0 0.0
  %860 = vmatmul.mubr.f32.gmra.mrb[0].mxu0 %v710
  %v861 = vpop.f32.mrb[0].mxu0
  %v862 = vadd.f32 0.0, %v861
  %v863 = vpop.f32.mrb[0].mxu0
  %864 = vmatprep.mubr.f32.mxu0 0.0
  %865 = vmatmul.mubr.f32.gmra.mrb[0].mxu0 %v713
  %v866 = vpop.f32.mrb[0].mxu0
  %v867 = vadd.f32 0.0, %v866
  %v868 = vpop.f32.mrb[0].mxu0
  %869 = vmatprep.mubr.f32.mxu0 0.0
  %870 = vmatmul.mubr.f32.gmra.mrb[0].mxu0 %v716
  %v871 = vpop.f32.mrb[0].mxu0
  %v872 = vadd.f32 0.0, %v871
  %v873 = vpop.f32.mrb[0].mxu0
  %874 = vmatprep.mubr.f32.mxu0 0.0
  %875 = vmatmul.mubr.f32.gmra.mrb[0].mxu0 %v719
  %v876 = vpop.f32.mrb[0].mxu0
  %v877 = vadd.f32 0.0, %v876
  %v878 = vpop.f32.mrb[0].mxu0
  %879 = vmatprep.mubr.f32.mxu0 0.0
  %880 = vmatmul.mubr.f32.gmra.mrb[0].mxu0 %v722
  %v881 = vpop.f32.mrb[0].mxu0
  %v882 = vadd.f32 0.0, %v881
  %v883 = vpop.f32.mrb[0].mxu0
  %884 = vmatprep.mubr.f32.mxu0 0.0
  %885 = vmatmul.mubr.f32.gmra.mrb[0].mxu0 %v725
  %v886 = vpop.f32.mrb[0].mxu0
  %v887 = vadd.f32 0.0, %v886
  %v888 = vpop.f32.mrb[0].mxu0
  %889 = vmatprep.mubr.f32.mxu0 0.0
  %890 = vmatmul.mubr.f32.gmra.mrb[0].mxu0 %v728
  %v891 = vpop.f32.mrb[0].mxu0
  %v892 = vadd.f32 0.0, %v891
  %v893 = vpop.f32.mrb[0].mxu0
  %894 = vmatprep.mubr.f32.mxu0 0.0
  %895 = vmatmul.mubr.f32.gmra.mrb[0].mxu0 %v731
  %v896 = vpop.f32.mrb[0].mxu0
  %v897 = vadd.f32 0.0, %v896
  %v898 = vpop.f32.mrb[0].mxu0
  %899 = vmatprep.mubr.f32.mxu0 0.0
  %900 = vmatmul.mubr.f32.gmra.mrb[0].mxu0 %v734
  %v901 = vpop.f32.mrb[0].mxu0
  %v902 = vadd.f32 0.0, %v901
  %v903 = vpop.f32.mrb[0].mxu0
  %904 = vdwg.mxu0
  %vm905 = vcmask 220160
  %v907 = vsel %vm905, %v649, 0
  %v910 = vsel %vm905, %v651, 0
  %v913 = vsel %vm905, %v653, 0
  %v916 = vsel %vm905, %v655, 0
  %v919 = vsel %vm905, %v657, 0
  %v922 = vsel %vm905, %v659, 0
  %v925 = vsel %vm905, %v661, 0
  %v928 = vsel %vm905, %v663, 0
  %v931 = vsel %vm905, %v665, 0
  %v934 = vsel %vm905, %v667, 0
  %vm936 = vcmask 1042432
  %v938 = vsel %vm936, %v902, 0
  %940 = vmatprep.subr.mxu0 0.0
  %941 = vmatpush1.msra.mxu0 %v807
  %942 = vmatprep.subr.mxu0 0.0
  %943 = vmatpush1.msra.mxu0 %v812
  %944 = vmatprep.subr.mxu0 0.0
  %945 = vmatpush1.msra.mxu0 %v817
  %946 = vmatprep.subr.mxu0 0.0
  %947 = vmatpush1.msra.mxu0 %v822
  %948 = vmatprep.subr.mxu0 0.0
  %949 = vmatpush1.msra.mxu0 %v827
  %950 = vmatprep.subr.mxu0 0.0
  %951 = vmatpush1.msra.mxu0 %v832
  %952 = vmatprep.subr.mxu0 0.0
  %953 = vmatpush1.msra.mxu0 %v837
  %954 = vmatprep.subr.mxu0 0.0
  %955 = vmatpush1.msra.mxu0 %v842
  %956 = vmatprep.subr.mxu0 0.0
  %957 = vmatpush1.msra.mxu0 %v847
  %958 = vmatprep.subr.mxu0 0.0
  %959 = vmatpush1.msra.mxu0 %v852
  %960 = vmatprep.subr.mxu0 0.0
  %961 = vmatpush1.msra.mxu0 %v857
  %962 = vmatprep.subr.mxu0 0.0
  %963 = vmatpush1.msra.mxu0 %v862
  %964 = vmatprep.subr.mxu0 0.0
  %965 = vmatpush1.msra.mxu0 %v867
  %966 = vmatprep.subr.mxu0 0.0
  %967 = vmatpush1.msra.mxu0 %v872
  %968 = vmatprep.subr.mxu0 0.0
  %969 = vmatpush1.msra.mxu0 %v877
  %970 = vmatprep.subr.mxu0 0.0
  %971 = vmatpush1.msra.mxu0 %v882
  %972 = vmatprep.subr.mxu0 0.0
  %973 = vmatpush1.msra.mxu0 %v887
  %974 = vmatprep.subr.mxu0 0.0
  %975 = vmatpush1.msra.mxu0 %v892
  %976 = vmatprep.subr.mxu0 0.0
  %977 = vmatpush1.msra.mxu0 %v897
  %978 = vmatprep.subr.mxu0 0.0
  %979 = vmatpush1.msra.mxu0 %v938
  %980 = vmatprep.subr.mxu0 0.0
  %981 = vmatpush1.msra.mxu0 0.0
  %982 = vmatprep.subr.mxu0 0.0
  %983 = vmatpush1.msra.mxu0 0.0
  %984 = vmatprep.subr.mxu0 0.0
  %985 = vmatpush1.msra.mxu0 0.0
  %986 = vmatprep.subr.mxu0 0.0
  %987 = vmatpush1.msra.mxu0 0.0
  %988 = vmatprep.subr.mxu0 0.0
  %989 = vmatpush1.msra.mxu0 0.0
  %990 = vmatprep.subr.mxu0 0.0
  %991 = vmatpush1.msra.mxu0 0.0
  %992 = vmatprep.subr.mxu0 0.0
  %993 = vmatpush1.msra.mxu0 0.0
  %994 = vmatprep.subr.mxu0 0.0
  %995 = vmatpush1.msra.mxu0 0.0
  %996 = vmatprep.subr.mxu0 0.0
  %997 = vmatpush1.msra.mxu0 0.0
  %998 = vmatprep.subr.mxu0 0.0
  %999 = vmatpush1.msra.mxu0 0.0
  %1000 = vmatprep.subr.mxu0 0.0
  %1001 = vmatpush1.msra.mxu0 0.0
  %1002 = vmatprep.subr.mxu0 0.0
  %1003 = vmatpush1.msra.mxu0 0.0
  %1004 = vmatprep.mubr.f32.mxu0 %v907
  %1005 = vmatmul.mubr.f32.gmra.mrb[0].mxu0 %v648
  %v1006 = vpop.f32.mrb[0].mxu0
  %v1007 = vadd.f32 0.0, %v1006
  %v1008 = vpop.f32.mrb[0].mxu0
  %1009 = vmatprep.mubr.f32.mxu0 %v910
  %1010 = vmatmul.mubr.f32.gmra.mrb[0].mxu0 %v650
  %v1011 = vpop.f32.mrb[0].mxu0
  %v1012 = vadd.f32 0.0, %v1011
  %v1013 = vpop.f32.mrb[0].mxu0
  %1014 = vmatprep.mubr.f32.mxu0 %v913
  %1015 = vmatmul.mubr.f32.gmra.mrb[0].mxu0 %v652
  %v1016 = vpop.f32.mrb[0].mxu0
  %v1017 = vadd.f32 0.0, %v1016
  %v1018 = vpop.f32.mrb[0].mxu0
  %1019 = vmatprep.mubr.f32.mxu0 %v916
  %1020 = vmatmul.mubr.f32.gmra.mrb[0].mxu0 %v654
  %v1021 = vpop.f32.mrb[0].mxu0
  %v1022 = vadd.f32 0.0, %v1021
  %v1023 = vpop.f32.mrb[0].mxu0
  %1024 = vmatprep.mubr.f32.mxu0 %v919
  %1025 = vmatmul.mubr.f32.gmra.mrb[0].mxu0 %v656
  %v1026 = vpop.f32.mrb[0].mxu0
  %v1027 = vadd.f32 0.0, %v1026
  %v1028 = vpop.f32.mrb[0].mxu0
  %1029 = vmatprep.mubr.f32.mxu0 %v922
  %1030 = vmatmul.mubr.f32.gmra.mrb[0].mxu0 %v658
  %v1031 = vpop.f32.mrb[0].mxu0
  %v1032 = vadd.f32 0.0, %v1031
  %v1033 = vpop.f32.mrb[0].mxu0
  %1034 = vmatprep.mubr.f32.mxu0 %v925
  %1035 = vmatmul.mubr.f32.gmra.mrb[0].mxu0 %v660
  %v1036 = vpop.f32.mrb[0].mxu0
  %v1037 = vadd.f32 0.0, %v1036
  %v1038 = vpop.f32.mrb[0].mxu0
  %1039 = vmatprep.mubr.f32.mxu0 %v928
  %1040 = vmatmul.mubr.f32.gmra.mrb[0].mxu0 %v662
  %v1041 = vpop.f32.mrb[0].mxu0
  %v1042 = vadd.f32 0.0, %v1041
  %v1043 = vpop.f32.mrb[0].mxu0
  %1044 = vmatprep.mubr.f32.mxu0 %v931
  %1045 = vmatmul.mubr.f32.gmra.mrb[0].mxu0 %v664
  %v1046 = vpop.f32.mrb[0].mxu0
  %v1047 = vadd.f32 0.0, %v1046
  %v1048 = vpop.f32.mrb[0].mxu0
  %1049 = vmatprep.mubr.f32.mxu0 %v934
  %1050 = vmatmul.mubr.f32.gmra.mrb[0].mxu0 %v666
  %v1051 = vpop.f32.mrb[0].mxu0
  %v1052 = vadd.f32 0.0, %v1051
  %v1053 = vpop.f32.mrb[0].mxu0
  %1054 = vdwg.mxu0
  %vm1055 = vcmask 195584
  %1056 = vst.msk [vmem:[#allocation2] sm:$0xff] %vm1055, %v1007
  %1057 = vst.msk [vmem:[#allocation2 + $0x8] sm:$0xff] %vm1055, %v1012
  %1058 = vst.msk [vmem:[#allocation2 + $0x10] sm:$0xff] %vm1055, %v1017
  %1059 = vst.msk [vmem:[#allocation2 + $0x18] sm:$0xff] %vm1055, %v1022
  %1060 = vst.msk [vmem:[#allocation2 + $0x20] sm:$0xff] %vm1055, %v1027
  %1061 = vst.msk [vmem:[#allocation2 + $0x28] sm:$0xff] %vm1055, %v1032
  %1062 = vst.msk [vmem:[#allocation2 + $0x30] sm:$0xff] %vm1055, %v1037
  %1063 = vst.msk [vmem:[#allocation2 + $0x38] sm:$0xff] %vm1055, %v1042
  %1064 = vst.msk [vmem:[#allocation2 + $0x40] sm:$0xff] %vm1055, %v1047
  %1065 = vst.msk [vmem:[#allocation2 + $0x48] sm:$0xff] %vm1055, %v1052
  %1076 = vrot.lane.b32.xlu0 %v1007, 127
  %v1077 = vpop.permute.xlu0 %1076
  %1078 = vrot.lane.b32.xlu0 %v1012, 127
  %v1079 = vpop.permute.xlu0 %1078
  %1080 = vrot.lane.b32.xlu0 %v1017, 127
  %v1081 = vpop.permute.xlu0 %1080
  %1082 = vrot.lane.b32.xlu0 %v1022, 127
  %v1083 = vpop.permute.xlu0 %1082
  %1084 = vrot.lane.b32.xlu0 %v1027, 127
  %v1085 = vpop.permute.xlu0 %1084
  %1086 = vrot.lane.b32.xlu0 %v1032, 127
  %v1087 = vpop.permute.xlu0 %1086
  %1088 = vrot.lane.b32.xlu0 %v1037, 127
  %v1089 = vpop.permute.xlu0 %1088
  %1090 = vrot.lane.b32.xlu0 %v1042, 127
  %v1091 = vpop.permute.xlu0 %1090
  %1092 = vrot.lane.b32.xlu0 %v1047, 127
  %v1093 = vpop.permute.xlu0 %1092
  %1094 = vrot.lane.b32.xlu0 %v1052, 127
  %v1095 = vpop.permute.xlu0 %1094
  %1106 = vst.msk [vmem:[#allocation2 + $0x50] sm:$0xff] %vm1055, %v1077
  %1107 = vst.msk [vmem:[#allocation2 + $0x58] sm:$0xff] %vm1055, %v1079
  %1108 = vst.msk [vmem:[#allocation2 + $0x60] sm:$0xff] %vm1055, %v1081
  %1109 = vst.msk [vmem:[#allocation2 + $0x68] sm:$0xff] %vm1055, %v1083
  %1110 = vst.msk [vmem:[#allocation2 + $0x70] sm:$0xff] %vm1055, %v1085
  %1111 = vst.msk [vmem:[#allocation2 + $0x78] sm:$0xff] %vm1055, %v1087
  %1112 = vst.msk [vmem:[#allocation2 + $0x80] sm:$0xff] %vm1055, %v1089
  %1113 = vst.msk [vmem:[#allocation2 + $0x88] sm:$0xff] %vm1055, %v1091
  %1114 = vst.msk [vmem:[#allocation2 + $0x90] sm:$0xff] %vm1055, %v1093
  %1115 = vst.msk [vmem:[#allocation2 + $0x98] sm:$0xff] %vm1055, %v1095
  %1116 = vrot.lane.b32.xlu0 %v1007, 126
  %v1117 = vpop.permute.xlu0 %1116
  %1118 = vrot.lane.b32.xlu0 %v1012, 126
  %v1119 = vpop.permute.xlu0 %1118
  %1120 = vrot.lane.b32.xlu0 %v1017, 126
  %v1121 = vpop.permute.xlu0 %1120
  %1122 = vrot.lane.b32.xlu0 %v1022, 126
  %v1123 = vpop.permute.xlu0 %1122
  %1124 = vrot.lane.b32.xlu0 %v1027, 126
  %v1125 = vpop.permute.xlu0 %1124
  %1126 = vrot.lane.b32.xlu0 %v1032, 126
  %v1127 = vpop.permute.xlu0 %1126
  %1128 = vrot.lane.b32.xlu0 %v1037, 126
  %v1129 = vpop.permute.xlu0 %1128
  %1130 = vrot.lane.b32.xlu0 %v1042, 126
  %v1131 = vpop.permute.xlu0 %1130
  %1132 = vrot.lane.b32.xlu0 %v1047, 126
  %v1133 = vpop.permute.xlu0 %1132
  %1134 = vrot.lane.b32.xlu0 %v1052, 126
  %v1135 = vpop.permute.xlu0 %1134
  %1146 = vst.msk [vmem:[#allocation2 + $0xa0] sm:$0xff] %vm1055, %v1117
  %1147 = vst.msk [vmem:[#allocation2 + $0xa8] sm:$0xff] %vm1055, %v1119
  %1148 = vst.msk [vmem:[#allocation2 + $0xb0] sm:$0xff] %vm1055, %v1121
  %1149 = vst.msk [vmem:[#allocation2 + $0xb8] sm:$0xff] %vm1055, %v1123
  %1150 = vst.msk [vmem:[#allocation2 + $0xc0] sm:$0xff] %vm1055, %v1125
  %1151 = vst.msk [vmem:[#allocation2 + $0xc8] sm:$0xff] %vm1055, %v1127
  %1152 = vst.msk [vmem:[#allocation2 + $0xd0] sm:$0xff] %vm1055, %v1129
  %1153 = vst.msk [vmem:[#allocation2 + $0xd8] sm:$0xff] %vm1055, %v1131
  %1154 = vst.msk [vmem:[#allocation2 + $0xe0] sm:$0xff] %vm1055, %v1133
  %1155 = vst.msk [vmem:[#allocation2 + $0xe8] sm:$0xff] %vm1055, %v1135
  %v1156 = vld [vmem:[%s5] sm:$0xff]
  %v1157 = vld [vmem:[%s5 + $0x8] sm:$0xff]
  %v1158 = vld [vmem:[%s5 + $0x10] sm:$0xff]
  %v1159 = vld [vmem:[%s5 + $0x18] sm:$0xff]
  %v1160 = vld [vmem:[%s5 + $0x20] sm:$0xff]
  %v1161 = vld [vmem:[%s5 + $0x28] sm:$0xff]
  %v1162 = vld [vmem:[%s5 + $0x30] sm:$0xff]
  %v1163 = vld [vmem:[%s5 + $0x38] sm:$0xff]
  %v1164 = vld [vmem:[%s5 + $0x40] sm:$0xff]
  %v1165 = vld [vmem:[%s5 + $0x48] sm:$0xff]
  %v1166 = vld [vmem:[%s5 + $0x50] sm:$0xff]
  %v1167 = vld [vmem:[%s5 + $0x58] sm:$0xff]
  %v1168 = vld [vmem:[%s5 + $0x60] sm:$0xff]
  %v1169 = vld [vmem:[%s5 + $0x68] sm:$0xff]
  %v1170 = vld [vmem:[%s5 + $0x70] sm:$0xff]
  %v1171 = vld [vmem:[%s5 + $0x78] sm:$0xff]
  %v1172 = vld [vmem:[%s5 + $0x80] sm:$0xff]
  %v1173 = vld [vmem:[%s5 + $0x88] sm:$0xff]
  %v1174 = vld [vmem:[%s5 + $0x90] sm:$0xff]
  %v1175 = vld [vmem:[%s5 + $0x98] sm:$0xff]
  %v1176 = vld [vmem:[%s5 + $0xa0] sm:$0xff]
  %v1177 = vld [vmem:[%s5 + $0xa8] sm:$0xff]
  %v1178 = vld [vmem:[%s5 + $0xb0] sm:$0xff]
  %v1179 = vld [vmem:[%s5 + $0xb8] sm:$0xff]
  %v1180 = vld [vmem:[%s5 + $0xc0] sm:$0xff]
  %v1181 = vld [vmem:[%s5 + $0xc8] sm:$0xff]
  %v1182 = vld [vmem:[%s5 + $0xd0] sm:$0xff]
  %v1183 = vld [vmem:[%s5 + $0xd8] sm:$0xff]
  %v1184 = vld [vmem:[%s5 + $0xe0] sm:$0xff]
  %v1185 = vld [vmem:[%s5 + $0xe8] sm:$0xff]
  %v1186 = vld [vmem:[%s5 + $0xf0] sm:$0xff]
  %v1187 = vld [vmem:[%s5 + $0xf8] sm:$0xff]
  %v1188 = vld [vmem:[%s5 + $0x100] sm:$0xff]
  %v1189 = vld [vmem:[%s5 + $0x108] sm:$0xff]
  %v1190 = vld [vmem:[%s5 + $0x110] sm:$0xff]
  %v1191 = vld [vmem:[%s5 + $0x118] sm:$0xff]
  %v1192 = vld [vmem:[%s5 + $0x120] sm:$0xff]
  %v1193 = vld [vmem:[%s5 + $0x128] sm:$0xff]
  %v1194 = vld [vmem:[%s5 + $0x130] sm:$0xff]
  %v1195 = vld [vmem:[%s5 + $0x138] sm:$0xff]
  %v1196 = vld [vmem:[%s5 + $0x140] sm:$0xff]
  %v1197 = vld [vmem:[%s5 + $0x148] sm:$0xff]
  %v1198 = vld [vmem:[%s5 + $0x150] sm:$0xff]
  %v1199 = vld [vmem:[%s5 + $0x158] sm:$0xff]
  %v1200 = vld [vmem:[#allocation2] sm:$0xff]
  %v1201 = vld [vmem:[#allocation2 + $0x8] sm:$0xff]
  %v1202 = vld [vmem:[#allocation2 + $0x10] sm:$0xff]
  %v1203 = vld [vmem:[#allocation2 + $0x18] sm:$0xff]
  %v1204 = vld [vmem:[#allocation2 + $0x20] sm:$0xff]
  %v1205 = vld [vmem:[#allocation2 + $0x28] sm:$0xff]
  %v1206 = vld [vmem:[#allocation2 + $0x30] sm:$0xff]
  %v1207 = vld [vmem:[#allocation2 + $0x38] sm:$0xff]
  %v1208 = vld [vmem:[#allocation2 + $0x40] sm:$0xff]
  %v1209 = vld [vmem:[#allocation2 + $0x48] sm:$0xff]
  %v1210 = vld [vmem:[#allocation2 + $0x50] sm:$0xff]
  %v1211 = vld [vmem:[#allocation2 + $0x58] sm:$0xff]
  %v1212 = vld [vmem:[#allocation2 + $0x60] sm:$0xff]
  %v1213 = vld [vmem:[#allocation2 + $0x68] sm:$0xff]
  %v1214 = vld [vmem:[#allocation2 + $0x70] sm:$0xff]
  %v1215 = vld [vmem:[#allocation2 + $0x78] sm:$0xff]
  %v1216 = vld [vmem:[#allocation2 + $0x80] sm:$0xff]
  %v1217 = vld [vmem:[#allocation2 + $0x88] sm:$0xff]
  %v1218 = vld [vmem:[#allocation2 + $0x90] sm:$0xff]
  %v1219 = vld [vmem:[#allocation2 + $0x98] sm:$0xff]
  %v1220 = vld [vmem:[#allocation2 + $0xa0] sm:$0xff]
  %v1221 = vld [vmem:[#allocation2 + $0xa8] sm:$0xff]
  %v1222 = vld [vmem:[#allocation2 + $0xb0] sm:$0xff]
  %v1223 = vld [vmem:[#allocation2 + $0xb8] sm:$0xff]
  %v1224 = vld [vmem:[#allocation2 + $0xc0] sm:$0xff]
  %v1225 = vld [vmem:[#allocation2 + $0xc8] sm:$0xff]
  %v1226 = vld [vmem:[#allocation2 + $0xd0] sm:$0xff]
  %v1227 = vld [vmem:[#allocation2 + $0xd8] sm:$0xff]
  %v1228 = vld [vmem:[#allocation2 + $0xe0] sm:$0xff]
  %v1229 = vld [vmem:[#allocation2 + $0xe8] sm:$0xff]
  %v1230 = vld [vmem:[%s6] sm:$0xff]
  %v1231 = vld [vmem:[%s6 + $0x8] sm:$0xff]
  %v1232 = vld [vmem:[%s6 + $0x10] sm:$0xff]
  %v1233 = vld [vmem:[%s6 + $0x18] sm:$0xff]
  %v1234 = vld [vmem:[%s6 + $0x20] sm:$0xff]
  %v1235 = vld [vmem:[%s6 + $0x28] sm:$0xff]
  %v1236 = vld [vmem:[%s6 + $0x30] sm:$0xff]
  %v1237 = vld [vmem:[%s6 + $0x38] sm:$0xff]
  %v1238 = vld [vmem:[%s6 + $0x40] sm:$0xff]
  %v1239 = vld [vmem:[%s6 + $0x48] sm:$0xff]
  %v1240 = vld [vmem:[%s6 + $0x50] sm:$0xff]
  %v1241 = vld [vmem:[%s6 + $0x58] sm:$0xff]
  %v1242 = vld [vmem:[%s6 + $0x60] sm:$0xff]
  %v1243 = vld [vmem:[%s6 + $0x68] sm:$0xff]
  %v1244 = vld [vmem:[%s6 + $0x70] sm:$0xff]
  %v1245 = vld [vmem:[%s6 + $0x78] sm:$0xff]
  %v1246 = vld [vmem:[%s6 + $0x80] sm:$0xff]
  %v1247 = vld [vmem:[%s6 + $0x88] sm:$0xff]
  %v1248 = vld [vmem:[%s6 + $0x90] sm:$0xff]
  %v1249 = vld [vmem:[%s6 + $0x98] sm:$0xff]
  %v1250 = vld [vmem:[%s6 + $0xa0] sm:$0xff]
  %v1251 = vld [vmem:[%s6 + $0xa8] sm:$0xff]
  %1253 = vset.pattern.permute.xlu0 0
  %1254 = vperm.xlu0 %1253, %v1230
  %v1255 = vpop.permute.xlu0 %1254
  %1258 = vset.pattern.permute.xlu0 0
  %1259 = vperm.xlu0 %1258, %v1231
  %v1260 = vpop.permute.xlu0 %1259
  %1263 = vset.pattern.permute.xlu0 0
  %1264 = vperm.xlu0 %1263, %v1232
  %v1265 = vpop.permute.xlu0 %1264
  %1268 = vset.pattern.permute.xlu0 0
  %1269 = vperm.xlu0 %1268, %v1233
  %v1270 = vpop.permute.xlu0 %1269
  %1273 = vset.pattern.permute.xlu0 0
  %1274 = vperm.xlu0 %1273, %v1234
  %v1275 = vpop.permute.xlu0 %1274
  %1278 = vset.pattern.permute.xlu0 0
  %1279 = vperm.xlu0 %1278, %v1235
  %v1280 = vpop.permute.xlu0 %1279
  %1283 = vset.pattern.permute.xlu0 0
  %1284 = vperm.xlu0 %1283, %v1236
  %v1285 = vpop.permute.xlu0 %1284
  %1288 = vset.pattern.permute.xlu0 0
  %1289 = vperm.xlu0 %1288, %v1237
  %v1290 = vpop.permute.xlu0 %1289
  %1293 = vset.pattern.permute.xlu0 0
  %1294 = vperm.xlu0 %1293, %v1238
  %v1295 = vpop.permute.xlu0 %1294
  %1298 = vset.pattern.permute.xlu0 0
  %1299 = vperm.xlu0 %1298, %v1239
  %v1300 = vpop.permute.xlu0 %1299
  %1303 = vset.pattern.permute.xlu0 0
  %1304 = vperm.xlu0 %1303, %v1240
  %v1305 = vpop.permute.xlu0 %1304
  %1308 = vset.pattern.permute.xlu0 0
  %1309 = vperm.xlu0 %1308, %v1241
  %v1310 = vpop.permute.xlu0 %1309
  %1313 = vset.pattern.permute.xlu0 0
  %1314 = vperm.xlu0 %1313, %v1242
  %v1315 = vpop.permute.xlu0 %1314
  %1318 = vset.pattern.permute.xlu0 0
  %1319 = vperm.xlu0 %1318, %v1243
  %v1320 = vpop.permute.xlu0 %1319
  %1323 = vset.pattern.permute.xlu0 0
  %1324 = vperm.xlu0 %1323, %v1244
  %v1325 = vpop.permute.xlu0 %1324
  %1328 = vset.pattern.permute.xlu0 0
  %1329 = vperm.xlu0 %1328, %v1245
  %v1330 = vpop.permute.xlu0 %1329
  %1333 = vset.pattern.permute.xlu0 0
  %1334 = vperm.xlu0 %1333, %v1246
  %v1335 = vpop.permute.xlu0 %1334
  %1338 = vset.pattern.permute.xlu0 0
  %1339 = vperm.xlu0 %1338, %v1247
  %v1340 = vpop.permute.xlu0 %1339
  %1343 = vset.pattern.permute.xlu0 0
  %1344 = vperm.xlu0 %1343, %v1248
  %v1345 = vpop.permute.xlu0 %1344
  %1348 = vset.pattern.permute.xlu0 0
  %1349 = vperm.xlu0 %1348, %v1249
  %v1350 = vpop.permute.xlu0 %1349
  %1353 = vset.pattern.permute.xlu0 0
  %1354 = vperm.xlu0 %1353, %v1250
  %v1355 = vpop.permute.xlu0 %1354
  %1358 = vset.pattern.permute.xlu0 0
  %1359 = vperm.xlu0 %1358, %v1251
  %v1360 = vpop.permute.xlu0 %1359
  %vm1362 = vcmask 916480
  %v1364 = vsel %vm1362, %v1157, 0
  %v1367 = vsel %vm1362, %v1159, 0
  %v1370 = vsel %vm1362, %v1161, 0
  %v1373 = vsel %vm1362, %v1163, 0
  %v1376 = vsel %vm1362, %v1165, 0
  %v1379 = vsel %vm1362, %v1167, 0
  %v1382 = vsel %vm1362, %v1169, 0
  %v1385 = vsel %vm1362, %v1171, 0
  %v1388 = vsel %vm1362, %v1173, 0
  %v1391 = vsel %vm1362, %v1175, 0
  %v1394 = vsel %vm1362, %v1177, 0
  %v1397 = vsel %vm1362, %v1179, 0
  %v1400 = vsel %vm1362, %v1181, 0
  %v1403 = vsel %vm1362, %v1183, 0
  %v1406 = vsel %vm1362, %v1185, 0
  %v1409 = vsel %vm1362, %v1187, 0
  %v1412 = vsel %vm1362, %v1189, 0
  %v1415 = vsel %vm1362, %v1191, 0
  %v1418 = vsel %vm1362, %v1193, 0
  %v1421 = vsel %vm1362, %v1195, 0
  %v1424 = vsel %vm1362, %v1197, 0
  %v1427 = vsel %vm1362, %v1199, 0
  %1429 = vmatprep.subr.mxu0 0.0
  %1430 = vmatpush1.msra.mxu0 %v1200
  %1431 = vmatprep.subr.mxu0 0.0
  %1432 = vmatpush1.msra.mxu0 %v1201
  %1433 = vmatprep.subr.mxu0 0.0
  %1434 = vmatpush1.msra.mxu0 %v1202
  %1435 = vmatprep.subr.mxu0 0.0
  %1436 = vmatpush1.msra.mxu0 %v1203
  %1437 = vmatprep.subr.mxu0 0.0
  %1438 = vmatpush1.msra.mxu0 %v1204
  %1439 = vmatprep.subr.mxu0 0.0
  %1440 = vmatpush1.msra.mxu0 %v1205
  %1441 = vmatprep.subr.mxu0 0.0
  %1442 = vmatpush1.msra.mxu0 %v1206
  %1443 = vmatprep.subr.mxu0 0.0
  %1444 = vmatpush1.msra.mxu0 %v1207
  %1445 = vmatprep.subr.mxu0 0.0
  %1446 = vmatpush1.msra.mxu0 %v1208
  %1447 = vmatprep.subr.mxu0 0.0
  %1448 = vmatpush1.msra.mxu0 %v1209
  %1449 = vmatprep.subr.mxu0 0.0
  %1450 = vmatpush1.msra.mxu0 %v1210
  %1451 = vmatprep.subr.mxu0 0.0
  %1452 = vmatpush1.msra.mxu0 %v1211
  %1453 = vmatprep.subr.mxu0 0.0
  %1454 = vmatpush1.msra.mxu0 %v1212
  %1455 = vmatprep.subr.mxu0 0.0
  %1456 = vmatpush1.msra.mxu0 %v1213
  %1457 = vmatprep.subr.mxu0 0.0
  %1458 = vmatpush1.msra.mxu0 %v1214
  %1459 = vmatprep.subr.mxu0 0.0
  %1460 = vmatpush1.msra.mxu0 %v1215
  %1461 = vmatprep.subr.mxu0 0.0
  %1462 = vmatpush1.msra.mxu0 %v1216
  %1463 = vmatprep.subr.mxu0 0.0
  %1464 = vmatpush1.msra.mxu0 %v1217
  %1465 = vmatprep.subr.mxu0 0.0
  %1466 = vmatpush1.msra.mxu0 %v1218
  %1467 = vmatprep.subr.mxu0 0.0
  %1468 = vmatpush1.msra.mxu0 %v1219
  %1469 = vmatprep.subr.mxu0 0.0
  %1470 = vmatpush1.msra.mxu0 %v1220
  %1471 = vmatprep.subr.mxu0 0.0
  %1472 = vmatpush1.msra.mxu0 %v1221
  %1473 = vmatprep.subr.mxu0 0.0
  %1474 = vmatpush1.msra.mxu0 %v1222
  %1475 = vmatprep.subr.mxu0 0.0
  %1476 = vmatpush1.msra.mxu0 %v1223
  %1477 = vmatprep.subr.mxu0 0.0
  %1478 = vmatpush1.msra.mxu0 %v1224
  %1479 = vmatprep.subr.mxu0 0.0
  %1480 = vmatpush1.msra.mxu0 %v1225
  %1481 = vmatprep.subr.mxu0 0.0
  %1482 = vmatpush1.msra.mxu0 %v1226
  %1483 = vmatprep.subr.mxu0 0.0
  %1484 = vmatpush1.msra.mxu0 %v1227
  %1485 = vmatprep.subr.mxu0 0.0
  %1486 = vmatpush1.msra.mxu0 %v1228
  %1487 = vmatprep.subr.mxu0 0.0
  %1488 = vmatpush1.msra.mxu0 %v1229
  %1489 = vmatprep.subr.mxu0 0.0
  %1490 = vmatpush1.msra.mxu0 0.0
  %1491 = vmatprep.subr.mxu0 0.0
  %1492 = vmatpush1.msra.mxu0 0.0
  %1493 = vmatprep.mubr.f32.mxu0 %v1364
  %1494 = vmatmul.mubr.f32.gmra.mrb[0].mxu0 %v1156
  %v1495 = vpop.f32.mrb[0].mxu0
  %v1496 = vadd.f32 %v1255, %v1495
  %v1497 = vpop.f32.mrb[0].mxu0
  %1498 = vmatprep.mubr.f32.mxu0 %v1367
  %1499 = vmatmul.mubr.f32.gmra.mrb[0].mxu0 %v1158
  %v1500 = vpop.f32.mrb[0].mxu0
  %v1501 = vadd.f32 %v1260, %v1500
  %v1502 = vpop.f32.mrb[0].mxu0
  %1503 = vmatprep.mubr.f32.mxu0 %v1370
  %1504 = vmatmul.mubr.f32.gmra.mrb[0].mxu0 %v1160
  %v1505 = vpop.f32.mrb[0].mxu0
  %v1506 = vadd.f32 %v1265, %v1505
  %v1507 = vpop.f32.mrb[0].mxu0
  %1508 = vmatprep.mubr.f32.mxu0 %v1373
  %1509 = vmatmul.mubr.f32.gmra.mrb[0].mxu0 %v1162
  %v1510 = vpop.f32.mrb[0].mxu0
  %v1511 = vadd.f32 %v1270, %v1510
  %v1512 = vpop.f32.mrb[0].mxu0
  %1513 = vmatprep.mubr.f32.mxu0 %v1376
  %1514 = vmatmul.mubr.f32.gmra.mrb[0].mxu0 %v1164
  %v1515 = vpop.f32.mrb[0].mxu0
  %v1516 = vadd.f32 %v1275, %v1515
  %v1517 = vpop.f32.mrb[0].mxu0
  %1518 = vmatprep.mubr.f32.mxu0 %v1379
  %1519 = vmatmul.mubr.f32.gmra.mrb[0].mxu0 %v1166
  %v1520 = vpop.f32.mrb[0].mxu0
  %v1521 = vadd.f32 %v1280, %v1520
  %v1522 = vpop.f32.mrb[0].mxu0
  %1523 = vmatprep.mubr.f32.mxu0 %v1382
  %1524 = vmatmul.mubr.f32.gmra.mrb[0].mxu0 %v1168
  %v1525 = vpop.f32.mrb[0].mxu0
  %v1526 = vadd.f32 %v1285, %v1525
  %v1527 = vpop.f32.mrb[0].mxu0
  %1528 = vmatprep.mubr.f32.mxu0 %v1385
  %1529 = vmatmul.mubr.f32.gmra.mrb[0].mxu0 %v1170
  %v1530 = vpop.f32.mrb[0].mxu0
  %v1531 = vadd.f32 %v1290, %v1530
  %v1532 = vpop.f32.mrb[0].mxu0
  %1533 = vmatprep.mubr.f32.mxu0 %v1388
  %1534 = vmatmul.mubr.f32.gmra.mrb[0].mxu0 %v1172
  %v1535 = vpop.f32.mrb[0].mxu0
  %v1536 = vadd.f32 %v1295, %v1535
  %v1537 = vpop.f32.mrb[0].mxu0
  %1538 = vmatprep.mubr.f32.mxu0 %v1391
  %1539 = vmatmul.mubr.f32.gmra.mrb[0].mxu0 %v1174
  %v1540 = vpop.f32.mrb[0].mxu0
  %v1541 = vadd.f32 %v1300, %v1540
  %v1542 = vpop.f32.mrb[0].mxu0
  %1543 = vmatprep.mubr.f32.mxu0 %v1394
  %1544 = vmatmul.mubr.f32.gmra.mrb[0].mxu0 %v1176
  %v1545 = vpop.f32.mrb[0].mxu0
  %v1546 = vadd.f32 %v1305, %v1545
  %v1547 = vpop.f32.mrb[0].mxu0
  %1548 = vmatprep.mubr.f32.mxu0 %v1397
  %1549 = vmatmul.mubr.f32.gmra.mrb[0].mxu0 %v1178
  %v1550 = vpop.f32.mrb[0].mxu0
  %v1551 = vadd.f32 %v1310, %v1550
  %v1552 = vpop.f32.mrb[0].mxu0
  %1553 = vmatprep.mubr.f32.mxu0 %v1400
  %1554 = vmatmul.mubr.f32.gmra.mrb[0].mxu0 %v1180
  %v1555 = vpop.f32.mrb[0].mxu0
  %v1556 = vadd.f32 %v1315, %v1555
  %v1557 = vpop.f32.mrb[0].mxu0
  %1558 = vmatprep.mubr.f32.mxu0 %v1403
  %1559 = vmatmul.mubr.f32.gmra.mrb[0].mxu0 %v1182
  %v1560 = vpop.f32.mrb[0].mxu0
  %v1561 = vadd.f32 %v1320, %v1560
  %v1562 = vpop.f32.mrb[0].mxu0
  %1563 = vmatprep.mubr.f32.mxu0 %v1406
  %1564 = vmatmul.mubr.f32.gmra.mrb[0].mxu0 %v1184
  %v1565 = vpop.f32.mrb[0].mxu0
  %v1566 = vadd.f32 %v1325, %v1565
  %v1567 = vpop.f32.mrb[0].mxu0
  %1568 = vmatprep.mubr.f32.mxu0 %v1409
  %1569 = vmatmul.mubr.f32.gmra.mrb[0].mxu0 %v1186
  %v1570 = vpop.f32.mrb[0].mxu0
  %v1571 = vadd.f32 %v1330, %v1570
  %v1572 = vpop.f32.mrb[0].mxu0
  %1573 = vmatprep.mubr.f32.mxu0 %v1412
  %1574 = vmatmul.mubr.f32.gmra.mrb[0].mxu0 %v1188
  %v1575 = vpop.f32.mrb[0].mxu0
  %v1576 = vadd.f32 %v1335, %v1575
  %v1577 = vpop.f32.mrb[0].mxu0
  %1578 = vmatprep.mubr.f32.mxu0 %v1415
  %1579 = vmatmul.mubr.f32.gmra.mrb[0].mxu0 %v1190
  %v1580 = vpop.f32.mrb[0].mxu0
  %v1581 = vadd.f32 %v1340, %v1580
  %v1582 = vpop.f32.mrb[0].mxu0
  %1583 = vmatprep.mubr.f32.mxu0 %v1418
  %1584 = vmatmul.mubr.f32.gmra.mrb[0].mxu0 %v1192
  %v1585 = vpop.f32.mrb[0].mxu0
  %v1586 = vadd.f32 %v1345, %v1585
  %v1587 = vpop.f32.mrb[0].mxu0
  %1588 = vmatprep.mubr.f32.mxu0 %v1421
  %1589 = vmatmul.mubr.f32.gmra.mrb[0].mxu0 %v1194
  %v1590 = vpop.f32.mrb[0].mxu0
  %v1591 = vadd.f32 %v1350, %v1590
  %v1592 = vpop.f32.mrb[0].mxu0
  %1593 = vmatprep.mubr.f32.mxu0 %v1424
  %1594 = vmatmul.mubr.f32.gmra.mrb[0].mxu0 %v1196
  %v1595 = vpop.f32.mrb[0].mxu0
  %v1596 = vadd.f32 %v1355, %v1595
  %v1597 = vpop.f32.mrb[0].mxu0
  %1598 = vmatprep.mubr.f32.mxu0 %v1427
  %1599 = vmatmul.mubr.f32.gmra.mrb[0].mxu0 %v1198
  %v1600 = vpop.f32.mrb[0].mxu0
  %v1601 = vadd.f32 %v1360, %v1600
  %v1602 = vpop.f32.mrb[0].mxu0
  %1603 = vdwg.mxu0
  %v1604 = vmax.f32 %v1496, 0.0
  %v1605 = vmax.f32 %v1501, 0.0
  %v1606 = vmax.f32 %v1506, 0.0
  %v1607 = vmax.f32 %v1511, 0.0
  %v1608 = vmax.f32 %v1516, 0.0
  %v1609 = vmax.f32 %v1521, 0.0
  %v1610 = vmax.f32 %v1526, 0.0
  %v1611 = vmax.f32 %v1531, 0.0
  %v1612 = vmax.f32 %v1536, 0.0
  %v1613 = vmax.f32 %v1541, 0.0
  %v1614 = vmax.f32 %v1546, 0.0
  %v1615 = vmax.f32 %v1551, 0.0
  %v1616 = vmax.f32 %v1556, 0.0
  %v1617 = vmax.f32 %v1561, 0.0
  %v1618 = vmax.f32 %v1566, 0.0
  %v1619 = vmax.f32 %v1571, 0.0
  %v1620 = vmax.f32 %v1576, 0.0
  %v1621 = vmax.f32 %v1581, 0.0
  %v1622 = vmax.f32 %v1586, 0.0
  %v1623 = vmax.f32 %v1591, 0.0
  %v1624 = vmax.f32 %v1596, 0.0
  %v1625 = vmax.f32 %v1601, 0.0
  %1648 = vrot.lane.b32.xlu0 %v1604, 127
  %v1649 = vpop.permute.xlu0 %1648
  %1650 = vrot.lane.b32.xlu0 %v1605, 127
  %v1651 = vpop.permute.xlu0 %1650
  %1652 = vrot.lane.b32.xlu0 %v1606, 127
  %v1653 = vpop.permute.xlu0 %1652
  %1654 = vrot.lane.b32.xlu0 %v1607, 127
  %v1655 = vpop.permute.xlu0 %1654
  %1656 = vrot.lane.b32.xlu0 %v1608, 127
  %v1657 = vpop.permute.xlu0 %1656
  %1658 = vrot.lane.b32.xlu0 %v1609, 127
  %v1659 = vpop.permute.xlu0 %1658
  %1660 = vrot.lane.b32.xlu0 %v1610, 127
  %v1661 = vpop.permute.xlu0 %1660
  %1662 = vrot.lane.b32.xlu0 %v1611, 127
  %v1663 = vpop.permute.xlu0 %1662
  %1664 = vrot.lane.b32.xlu0 %v1612, 127
  %v1665 = vpop.permute.xlu0 %1664
  %1666 = vrot.lane.b32.xlu0 %v1613, 127
  %v1667 = vpop.permute.xlu0 %1666
  %1668 = vrot.lane.b32.xlu0 %v1614, 127
  %v1669 = vpop.permute.xlu0 %1668
  %1670 = vrot.lane.b32.xlu0 %v1615, 127
  %v1671 = vpop.permute.xlu0 %1670
  %1672 = vrot.lane.b32.xlu0 %v1616, 127
  %v1673 = vpop.permute.xlu0 %1672
  %1674 = vrot.lane.b32.xlu0 %v1617, 127
  %v1675 = vpop.permute.xlu0 %1674
  %1676 = vrot.lane.b32.xlu0 %v1618, 127
  %v1677 = vpop.permute.xlu0 %1676
  %1678 = vrot.lane.b32.xlu0 %v1619, 127
  %v1679 = vpop.permute.xlu0 %1678
  %1680 = vrot.lane.b32.xlu0 %v1620, 127
  %v1681 = vpop.permute.xlu0 %1680
  %1682 = vrot.lane.b32.xlu0 %v1621, 127
  %v1683 = vpop.permute.xlu0 %1682
  %1684 = vrot.lane.b32.xlu0 %v1622, 127
  %v1685 = vpop.permute.xlu0 %1684
  %1686 = vrot.lane.b32.xlu0 %v1623, 127
  %v1687 = vpop.permute.xlu0 %1686
  %1688 = vrot.lane.b32.xlu0 %v1624, 127
  %v1689 = vpop.permute.xlu0 %1688
  %1690 = vrot.lane.b32.xlu0 %v1625, 127
  %v1691 = vpop.permute.xlu0 %1690
  %v1714 = vmax.f32 %v1604, %v1649
  %v1715 = vmax.f32 %v1605, %v1651
  %v1716 = vmax.f32 %v1606, %v1653
  %v1717 = vmax.f32 %v1607, %v1655
  %v1718 = vmax.f32 %v1608, %v1657
  %v1719 = vmax.f32 %v1609, %v1659
  %v1720 = vmax.f32 %v1610, %v1661
  %v1721 = vmax.f32 %v1611, %v1663
  %v1722 = vmax.f32 %v1612, %v1665
  %v1723 = vmax.f32 %v1613, %v1667
  %v1724 = vmax.f32 %v1614, %v1669
  %v1725 = vmax.f32 %v1615, %v1671
  %v1726 = vmax.f32 %v1616, %v1673
  %v1727 = vmax.f32 %v1617, %v1675
  %v1728 = vmax.f32 %v1618, %v1677
  %v1729 = vmax.f32 %v1619, %v1679
  %v1730 = vmax.f32 %v1620, %v1681
  %v1731 = vmax.f32 %v1621, %v1683
  %v1732 = vmax.f32 %v1622, %v1685
  %v1733 = vmax.f32 %v1623, %v1687
  %v1734 = vmax.f32 %v1624, %v1689
  %v1735 = vmax.f32 %v1625, %v1691
  %v1758 = vrot.slane %v1714, 1
  %v1759 = vrot.slane %v1715, 1
  %v1760 = vsel %vm568, %v1758, %v1759
  %v1761 = vrot.slane %v1716, 1
  %v1762 = vsel %vm568, %v1759, %v1761
  %v1763 = vrot.slane %v1717, 1
  %v1764 = vsel %vm568, %v1761, %v1763
  %v1765 = vrot.slane %v1718, 1
  %v1766 = vsel %vm568, %v1763, %v1765
  %v1767 = vrot.slane %v1719, 1
  %v1768 = vsel %vm568, %v1765, %v1767
  %v1769 = vrot.slane %v1720, 1
  %v1770 = vsel %vm568, %v1767, %v1769
  %v1771 = vrot.slane %v1721, 1
  %v1772 = vsel %vm568, %v1769, %v1771
  %v1773 = vrot.slane %v1722, 1
  %v1774 = vsel %vm568, %v1771, %v1773
  %v1775 = vrot.slane %v1723, 1
  %v1776 = vsel %vm568, %v1773, %v1775
  %v1777 = vrot.slane %v1724, 1
  %v1778 = vsel %vm568, %v1775, %v1777
  %v1779 = vrot.slane %v1725, 1
  %v1780 = vsel %vm568, %v1777, %v1779
  %v1781 = vrot.slane %v1726, 1
  %v1782 = vsel %vm568, %v1779, %v1781
  %v1783 = vrot.slane %v1727, 1
  %v1784 = vsel %vm568, %v1781, %v1783
  %v1785 = vrot.slane %v1728, 1
  %v1786 = vsel %vm568, %v1783, %v1785
  %v1787 = vrot.slane %v1729, 1
  %v1788 = vsel %vm568, %v1785, %v1787
  %v1789 = vrot.slane %v1730, 1
  %v1790 = vsel %vm568, %v1787, %v1789
  %v1791 = vrot.slane %v1731, 1
  %v1792 = vsel %vm568, %v1789, %v1791
  %v1793 = vrot.slane %v1732, 1
  %v1794 = vsel %vm568, %v1791, %v1793
  %v1795 = vrot.slane %v1733, 1
  %v1796 = vsel %vm568, %v1793, %v1795
  %v1797 = vrot.slane %v1734, 1
  %v1798 = vsel %vm568, %v1795, %v1797
  %v1799 = vrot.slane %v1735, 1
  %v1800 = vsel %vm568, %v1797, %v1799
  %v1823 = vmax.f32 %v1714, %v1760
  %v1824 = vmax.f32 %v1715, %v1762
  %v1825 = vmax.f32 %v1716, %v1764
  %v1826 = vmax.f32 %v1717, %v1766
  %v1827 = vmax.f32 %v1718, %v1768
  %v1828 = vmax.f32 %v1719, %v1770
  %v1829 = vmax.f32 %v1720, %v1772
  %v1830 = vmax.f32 %v1721, %v1774
  %v1831 = vmax.f32 %v1722, %v1776
  %v1832 = vmax.f32 %v1723, %v1778
  %v1833 = vmax.f32 %v1724, %v1780
  %v1834 = vmax.f32 %v1725, %v1782
  %v1835 = vmax.f32 %v1726, %v1784
  %v1836 = vmax.f32 %v1727, %v1786
  %v1837 = vmax.f32 %v1728, %v1788
  %v1838 = vmax.f32 %v1729, %v1790
  %v1839 = vmax.f32 %v1730, %v1792
  %v1840 = vmax.f32 %v1731, %v1794
  %v1841 = vmax.f32 %v1732, %v1796
  %v1842 = vmax.f32 %v1733, %v1798
  %v1843 = vmax.f32 %v1734, %v1800
  %v1844 = vmax.f32 %v1735, %v1799
  %v1845 = vld [vmem:[%s7] sm:$0xff]
  %v1846 = vld [vmem:[%s7 + $0x8] sm:$0xff]
  %v1847 = vld [vmem:[%s7 + $0x10] sm:$0xff]
  %v1848 = vld [vmem:[%s7 + $0x18] sm:$0xff]
  %v1849 = vld [vmem:[%s7 + $0x20] sm:$0xff]
  %v1850 = vld [vmem:[%s7 + $0x28] sm:$0xff]
  %v1851 = vld [vmem:[%s7 + $0x30] sm:$0xff]
  %v1852 = vld [vmem:[%s7 + $0x38] sm:$0xff]
  %v1853 = vld [vmem:[%s7 + $0x40] sm:$0xff]
  %v1854 = vld [vmem:[%s7 + $0x48] sm:$0xff]
  %v1855 = vld [vmem:[%s7 + $0x50] sm:$0xff]
  %v1856 = vld [vmem:[%s7 + $0x58] sm:$0xff]
  %v1857 = vld [vmem:[%s7 + $0x60] sm:$0xff]
  %v1858 = vld [vmem:[%s7 + $0x68] sm:$0xff]
  %v1859 = vld [vmem:[%s7 + $0x70] sm:$0xff]
  %v1860 = vld [vmem:[%s7 + $0x78] sm:$0xff]
  %v1861 = vld [vmem:[%s7 + $0x80] sm:$0xff]
  %v1862 = vld [vmem:[%s7 + $0x88] sm:$0xff]
  %v1863 = vld [vmem:[%s7 + $0x90] sm:$0xff]
  %v1864 = vld [vmem:[%s7 + $0x98] sm:$0xff]
  %v1865 = vld [vmem:[%s8] sm:$0xff]
  %v1866 = vld [vmem:[%s8 + $0x8] sm:$0xff]
  %v1867 = vld [vmem:[%s8 + $0x10] sm:$0x7f]
  %vm1868 = vcmask 187392
  %v1870 = vsel %vm1868, %v1823, 0
  %v1873 = vsel %vm1868, %v1824, 0
  %v1876 = vsel %vm1868, %v1825, 0
  %v1879 = vsel %vm1868, %v1826, 0
  %v1882 = vsel %vm1868, %v1827, 0
  %v1885 = vsel %vm1868, %v1828, 0
  %v1888 = vsel %vm1868, %v1829, 0
  %v1891 = vsel %vm1868, %v1830, 0
  %v1894 = vsel %vm1868, %v1831, 0
  %v1897 = vsel %vm1868, %v1832, 0
  %v1900 = vsel %vm1868, %v1833, 0
  %v1903 = vsel %vm1868, %v1834, 0
  %v1906 = vsel %vm1868, %v1835, 0
  %v1909 = vsel %vm1868, %v1836, 0
  %v1912 = vsel %vm1868, %v1837, 0
  %v1915 = vsel %vm1868, %v1838, 0
  %v1918 = vsel %vm1868, %v1839, 0
  %v1921 = vsel %vm1868, %v1840, 0
  %v1924 = vsel %vm1868, %v1841, 0
  %v1927 = vsel %vm1868, %v1842, 0
  %v1930 = vsel %vm1868, %v1843, 0
  %v1933 = vsel %vm1868, %v1844, 0
  %v1936 = vsel %vm568, %v1867, 0
  %1938 = vmatprep.subr.mxu0 0.0
  %1939 = vmatpush1.msra.mxu0 %v1865
  %1940 = vmatprep.subr.mxu0 0.0
  %1941 = vmatpush1.msra.mxu0 %v1866
  %1942 = vmatprep.subr.mxu0 0.0
  %1943 = vmatpush1.msra.mxu0 %v1936
  %1944 = vmatprep.subr.mxu0 0.0
  %1945 = vmatpush1.msra.mxu0 0.0
  %1946 = vmatprep.subr.mxu0 0.0
  %1947 = vmatpush1.msra.mxu0 0.0
  %1948 = vmatprep.subr.mxu0 0.0
  %1949 = vmatpush1.msra.mxu0 0.0
  %1950 = vmatprep.subr.mxu0 0.0
  %1951 = vmatpush1.msra.mxu0 0.0
  %1952 = vmatprep.subr.mxu0 0.0
  %1953 = vmatpush1.msra.mxu0 0.0
  %1954 = vmatprep.subr.mxu0 0.0
  %1955 = vmatpush1.msra.mxu0 0.0
  %1956 = vmatprep.subr.mxu0 0.0
  %1957 = vmatpush1.msra.mxu0 0.0
  %1958 = vmatprep.subr.mxu0 0.0
  %1959 = vmatpush1.msra.mxu0 0.0
  %1960 = vmatprep.subr.mxu0 0.0
  %1961 = vmatpush1.msra.mxu0 0.0
  %1962 = vmatprep.subr.mxu0 0.0
  %1963 = vmatpush1.msra.mxu0 0.0
  %1964 = vmatprep.subr.mxu0 0.0
  %1965 = vmatpush1.msra.mxu0 0.0
  %1966 = vmatprep.subr.mxu0 0.0
  %1967 = vmatpush1.msra.mxu0 0.0
  %1968 = vmatprep.subr.mxu0 0.0
  %1969 = vmatpush1.msra.mxu0 0.0
  %1970 = vmatprep.subr.mxu0 0.0
  %1971 = vmatpush1.msra.mxu0 0.0
  %1972 = vmatprep.subr.mxu0 0.0
  %1973 = vmatpush1.msra.mxu0 0.0
  %1974 = vmatprep.subr.mxu0 0.0
  %1975 = vmatpush1.msra.mxu0 0.0
  %1976 = vmatprep.subr.mxu0 0.0
  %1977 = vmatpush1.msra.mxu0 0.0
  %1978 = vmatprep.subr.mxu0 0.0
  %1979 = vmatpush1.msra.mxu0 0.0
  %1980 = vmatprep.subr.mxu0 0.0
  %1981 = vmatpush1.msra.mxu0 0.0
  %1982 = vmatprep.subr.mxu0 0.0
  %1983 = vmatpush1.msra.mxu0 0.0
  %1984 = vmatprep.subr.mxu0 0.0
  %1985 = vmatpush1.msra.mxu0 0.0
  %1986 = vmatprep.subr.mxu0 0.0
  %1987 = vmatpush1.msra.mxu0 0.0
  %1988 = vmatprep.subr.mxu0 0.0
  %1989 = vmatpush1.msra.mxu0 0.0
  %1990 = vmatprep.subr.mxu0 0.0
  %1991 = vmatpush1.msra.mxu0 0.0
  %1992 = vmatprep.subr.mxu0 0.0
  %1993 = vmatpush1.msra.mxu0 0.0
  %1994 = vmatprep.subr.mxu0 0.0
  %1995 = vmatpush1.msra.mxu0 0.0
  %1996 = vmatprep.subr.mxu0 0.0
  %1997 = vmatpush1.msra.mxu0 0.0
  %1998 = vmatprep.subr.mxu0 0.0
  %1999 = vmatpush1.msra.mxu0 0.0
  %2000 = vmatprep.subr.mxu0 0.0
  %2001 = vmatpush1.msra.mxu0 0.0
  %2002 = vmatprep.mubr.f32.mxu0 0.0
  %2003 = vmatmul.mubr.f32.gmra.mrb[0].mxu0 %v1870
  %v2004 = vpop.f32.mrb[0].mxu0
  %v2005 = vadd.f32 0.0, %v2004
  %v2006 = vpop.f32.mrb[0].mxu0
  %2007 = vmatprep.mubr.f32.mxu0 0.0
  %2008 = vmatmul.mubr.f32.gmra.mrb[0].mxu0 %v1873
  %v2009 = vpop.f32.mrb[0].mxu0
  %v2010 = vadd.f32 0.0, %v2009
  %v2011 = vpop.f32.mrb[0].mxu0
  %2012 = vmatprep.mubr.f32.mxu0 0.0
  %2013 = vmatmul.mubr.f32.gmra.mrb[0].mxu0 %v1876
  %v2014 = vpop.f32.mrb[0].mxu0
  %v2015 = vadd.f32 0.0, %v2014
  %v2016 = vpop.f32.mrb[0].mxu0
  %2017 = vmatprep.mubr.f32.mxu0 0.0
  %2018 = vmatmul.mubr.f32.gmra.mrb[0].mxu0 %v1879
  %v2019 = vpop.f32.mrb[0].mxu0
  %v2020 = vadd.f32 0.0, %v2019
  %v2021 = vpop.f32.mrb[0].mxu0
  %2022 = vmatprep.mubr.f32.mxu0 0.0
  %2023 = vmatmul.mubr.f32.gmra.mrb[0].mxu0 %v1882
  %v2024 = vpop.f32.mrb[0].mxu0
  %v2025 = vadd.f32 0.0, %v2024
  %v2026 = vpop.f32.mrb[0].mxu0
  %2027 = vmatprep.mubr.f32.mxu0 0.0
  %2028 = vmatmul.mubr.f32.gmra.mrb[0].mxu0 %v1885
  %v2029 = vpop.f32.mrb[0].mxu0
  %v2030 = vadd.f32 0.0, %v2029
  %v2031 = vpop.f32.mrb[0].mxu0
  %2032 = vmatprep.mubr.f32.mxu0 0.0
  %2033 = vmatmul.mubr.f32.gmra.mrb[0].mxu0 %v1888
  %v2034 = vpop.f32.mrb[0].mxu0
  %v2035 = vadd.f32 0.0, %v2034
  %v2036 = vpop.f32.mrb[0].mxu0
  %2037 = vmatprep.mubr.f32.mxu0 0.0
  %2038 = vmatmul.mubr.f32.gmra.mrb[0].mxu0 %v1891
  %v2039 = vpop.f32.mrb[0].mxu0
  %v2040 = vadd.f32 0.0, %v2039
  %v2041 = vpop.f32.mrb[0].mxu0
  %2042 = vmatprep.mubr.f32.mxu0 0.0
  %2043 = vmatmul.mubr.f32.gmra.mrb[0].mxu0 %v1894
  %v2044 = vpop.f32.mrb[0].mxu0
  %v2045 = vadd.f32 0.0, %v2044
  %v2046 = vpop.f32.mrb[0].mxu0
  %2047 = vmatprep.mubr.f32.mxu0 0.0
  %2048 = vmatmul.mubr.f32.gmra.mrb[0].mxu0 %v1897
  %v2049 = vpop.f32.mrb[0].mxu0
  %v2050 = vadd.f32 0.0, %v2049
  %v2051 = vpop.f32.mrb[0].mxu0
  %2052 = vmatprep.mubr.f32.mxu0 0.0
  %2053 = vmatmul.mubr.f32.gmra.mrb[0].mxu0 %v1900
  %v2054 = vpop.f32.mrb[0].mxu0
  %v2055 = vadd.f32 0.0, %v2054
  %v2056 = vpop.f32.mrb[0].mxu0
  %2057 = vmatprep.mubr.f32.mxu0 0.0
  %2058 = vmatmul.mubr.f32.gmra.mrb[0].mxu0 %v1903
  %v2059 = vpop.f32.mrb[0].mxu0
  %v2060 = vadd.f32 0.0, %v2059
  %v2061 = vpop.f32.mrb[0].mxu0
  %2062 = vmatprep.mubr.f32.mxu0 0.0
  %2063 = vmatmul.mubr.f32.gmra.mrb[0].mxu0 %v1906
  %v2064 = vpop.f32.mrb[0].mxu0
  %v2065 = vadd.f32 0.0, %v2064
  %v2066 = vpop.f32.mrb[0].mxu0
  %2067 = vmatprep.mubr.f32.mxu0 0.0
  %2068 = vmatmul.mubr.f32.gmra.mrb[0].mxu0 %v1909
  %v2069 = vpop.f32.mrb[0].mxu0
  %v2070 = vadd.f32 0.0, %v2069
  %v2071 = vpop.f32.mrb[0].mxu0
  %2072 = vmatprep.mubr.f32.mxu0 0.0
  %2073 = vmatmul.mubr.f32.gmra.mrb[0].mxu0 %v1912
  %v2074 = vpop.f32.mrb[0].mxu0
  %v2075 = vadd.f32 0.0, %v2074
  %v2076 = vpop.f32.mrb[0].mxu0
  %2077 = vmatprep.mubr.f32.mxu0 0.0
  %2078 = vmatmul.mubr.f32.gmra.mrb[0].mxu0 %v1915
  %v2079 = vpop.f32.mrb[0].mxu0
  %v2080 = vadd.f32 0.0, %v2079
  %v2081 = vpop.f32.mrb[0].mxu0
  %2082 = vmatprep.mubr.f32.mxu0 0.0
  %2083 = vmatmul.mubr.f32.gmra.mrb[0].mxu0 %v1918
  %v2084 = vpop.f32.mrb[0].mxu0
  %v2085 = vadd.f32 0.0, %v2084
  %v2086 = vpop.f32.mrb[0].mxu0
  %2087 = vmatprep.mubr.f32.mxu0 0.0
  %2088 = vmatmul.mubr.f32.gmra.mrb[0].mxu0 %v1921
  %v2089 = vpop.f32.mrb[0].mxu0
  %v2090 = vadd.f32 0.0, %v2089
  %v2091 = vpop.f32.mrb[0].mxu0
  %2092 = vmatprep.mubr.f32.mxu0 0.0
  %2093 = vmatmul.mubr.f32.gmra.mrb[0].mxu0 %v1924
  %v2094 = vpop.f32.mrb[0].mxu0
  %v2095 = vadd.f32 0.0, %v2094
  %v2096 = vpop.f32.mrb[0].mxu0
  %2097 = vmatprep.mubr.f32.mxu0 0.0
  %2098 = vmatmul.mubr.f32.gmra.mrb[0].mxu0 %v1927
  %v2099 = vpop.f32.mrb[0].mxu0
  %v2100 = vadd.f32 0.0, %v2099
  %v2101 = vpop.f32.mrb[0].mxu0
  %2102 = vmatprep.mubr.f32.mxu0 0.0
  %2103 = vmatmul.mubr.f32.gmra.mrb[0].mxu0 %v1930
  %v2104 = vpop.f32.mrb[0].mxu0
  %v2105 = vadd.f32 0.0, %v2104
  %v2106 = vpop.f32.mrb[0].mxu0
  %2107 = vmatprep.mubr.f32.mxu0 0.0
  %2108 = vmatmul.mubr.f32.gmra.mrb[0].mxu0 %v1933
  %v2109 = vpop.f32.mrb[0].mxu0
  %v2110 = vadd.f32 0.0, %v2109
  %v2111 = vpop.f32.mrb[0].mxu0
  %2112 = vdwg.mxu0
  %vm2113 = vcmask 384000
  %v2115 = vsel %vm2113, %v1846, 0
  %v2118 = vsel %vm2113, %v1848, 0
  %v2121 = vsel %vm2113, %v1850, 0
  %v2124 = vsel %vm2113, %v1852, 0
  %v2127 = vsel %vm2113, %v1854, 0
  %v2130 = vsel %vm2113, %v1856, 0
  %v2133 = vsel %vm2113, %v1858, 0
  %v2136 = vsel %vm2113, %v1860, 0
  %v2139 = vsel %vm2113, %v1862, 0
  %v2142 = vsel %vm2113, %v1864, 0
  %v2145 = vsel %vm568, %v2110, 0
  %2147 = vmatprep.subr.mxu0 0.0
  %2148 = vmatpush1.msra.mxu0 %v2005
  %2149 = vmatprep.subr.mxu0 0.0
  %2150 = vmatpush1.msra.mxu0 %v2010
  %2151 = vmatprep.subr.mxu0 0.0
  %2152 = vmatpush1.msra.mxu0 %v2015
  %2153 = vmatprep.subr.mxu0 0.0
  %2154 = vmatpush1.msra.mxu0 %v2020
  %2155 = vmatprep.subr.mxu0 0.0
  %2156 = vmatpush1.msra.mxu0 %v2025
  %2157 = vmatprep.subr.mxu0 0.0
  %2158 = vmatpush1.msra.mxu0 %v2030
  %2159 = vmatprep.subr.mxu0 0.0
  %2160 = vmatpush1.msra.mxu0 %v2035
  %2161 = vmatprep.subr.mxu0 0.0
  %2162 = vmatpush1.msra.mxu0 %v2040
  %2163 = vmatprep.subr.mxu0 0.0
  %2164 = vmatpush1.msra.mxu0 %v2045
  %2165 = vmatprep.subr.mxu0 0.0
  %2166 = vmatpush1.msra.mxu0 %v2050
  %2167 = vmatprep.subr.mxu0 0.0
  %2168 = vmatpush1.msra.mxu0 %v2055
  %2169 = vmatprep.subr.mxu0 0.0
  %2170 = vmatpush1.msra.mxu0 %v2060
  %2171 = vmatprep.subr.mxu0 0.0
  %2172 = vmatpush1.msra.mxu0 %v2065
  %2173 = vmatprep.subr.mxu0 0.0
  %2174 = vmatpush1.msra.mxu0 %v2070
  %2175 = vmatprep.subr.mxu0 0.0
  %2176 = vmatpush1.msra.mxu0 %v2075
  %2177 = vmatprep.subr.mxu0 0.0
  %2178 = vmatpush1.msra.mxu0 %v2080
  %2179 = vmatprep.subr.mxu0 0.0
  %2180 = vmatpush1.msra.mxu0 %v2085
  %2181 = vmatprep.subr.mxu0 0.0
  %2182 = vmatpush1.msra.mxu0 %v2090
  %2183 = vmatprep.subr.mxu0 0.0
  %2184 = vmatpush1.msra.mxu0 %v2095
  %2185 = vmatprep.subr.mxu0 0.0
  %2186 = vmatpush1.msra.mxu0 %v2100
  %2187 = vmatprep.subr.mxu0 0.0
  %2188 = vmatpush1.msra.mxu0 %v2105
  %2189 = vmatprep.subr.mxu0 0.0
  %2190 = vmatpush1.msra.mxu0 %v2145
  %2191 = vmatprep.subr.mxu0 0.0
  %2192 = vmatpush1.msra.mxu0 0.0
  %2193 = vmatprep.subr.mxu0 0.0
  %2194 = vmatpush1.msra.mxu0 0.0
  %2195 = vmatprep.subr.mxu0 0.0
  %2196 = vmatpush1.msra.mxu0 0.0
  %2197 = vmatprep.subr.mxu0 0.0
  %2198 = vmatpush1.msra.mxu0 0.0
  %2199 = vmatprep.subr.mxu0 0.0
  %2200 = vmatpush1.msra.mxu0 0.0
  %2201 = vmatprep.subr.mxu0 0.0
  %2202 = vmatpush1.msra.mxu0 0.0
  %2203 = vmatprep.subr.mxu0 0.0
  %2204 = vmatpush1.msra.mxu0 0.0
  %2205 = vmatprep.subr.mxu0 0.0
  %2206 = vmatpush1.msra.mxu0 0.0
  %2207 = vmatprep.subr.mxu0 0.0
  %2208 = vmatpush1.msra.mxu0 0.0
  %2209 = vmatprep.subr.mxu0 0.0
  %2210 = vmatpush1.msra.mxu0 0.0
  %2211 = vmatprep.mubr.f32.mxu0 %v2115
  %2212 = vmatmul.mubr.f32.gmra.mrb[0].mxu0 %v1845
  %v2213 = vpop.f32.mrb[0].mxu0
  %v2214 = vadd.f32 0.0, %v2213
  %v2215 = vpop.f32.mrb[0].mxu0
  %2216 = vmatprep.mubr.f32.mxu0 %v2118
  %2217 = vmatmul.mubr.f32.gmra.mrb[0].mxu0 %v1847
  %v2218 = vpop.f32.mrb[0].mxu0
  %v2219 = vadd.f32 0.0, %v2218
  %v2220 = vpop.f32.mrb[0].mxu0
  %2221 = vmatprep.mubr.f32.mxu0 %v2121
  %2222 = vmatmul.mubr.f32.gmra.mrb[0].mxu0 %v1849
  %v2223 = vpop.f32.mrb[0].mxu0
  %v2224 = vadd.f32 0.0, %v2223
  %v2225 = vpop.f32.mrb[0].mxu0
  %2226 = vmatprep.mubr.f32.mxu0 %v2124
  %2227 = vmatmul.mubr.f32.gmra.mrb[0].mxu0 %v1851
  %v2228 = vpop.f32.mrb[0].mxu0
  %v2229 = vadd.f32 0.0, %v2228
  %v2230 = vpop.f32.mrb[0].mxu0
  %2231 = vmatprep.mubr.f32.mxu0 %v2127
  %2232 = vmatmul.mubr.f32.gmra.mrb[0].mxu0 %v1853
  %v2233 = vpop.f32.mrb[0].mxu0
  %v2234 = vadd.f32 0.0, %v2233
  %v2235 = vpop.f32.mrb[0].mxu0
  %2236 = vmatprep.mubr.f32.mxu0 %v2130
  %2237 = vmatmul.mubr.f32.gmra.mrb[0].mxu0 %v1855
  %v2238 = vpop.f32.mrb[0].mxu0
  %v2239 = vadd.f32 0.0, %v2238
  %v2240 = vpop.f32.mrb[0].mxu0
  %2241 = vmatprep.mubr.f32.mxu0 %v2133
  %2242 = vmatmul.mubr.f32.gmra.mrb[0].mxu0 %v1857
  %v2243 = vpop.f32.mrb[0].mxu0
  %v2244 = vadd.f32 0.0, %v2243
  %v2245 = vpop.f32.mrb[0].mxu0
  %2246 = vmatprep.mubr.f32.mxu0 %v2136
  %2247 = vmatmul.mubr.f32.gmra.mrb[0].mxu0 %v1859
  %v2248 = vpop.f32.mrb[0].mxu0
  %v2249 = vadd.f32 0.0, %v2248
  %v2250 = vpop.f32.mrb[0].mxu0
  %2251 = vmatprep.mubr.f32.mxu0 %v2139
  %2252 = vmatmul.mubr.f32.gmra.mrb[0].mxu0 %v1861
  %v2253 = vpop.f32.mrb[0].mxu0
  %v2254 = vadd.f32 0.0, %v2253
  %v2255 = vpop.f32.mrb[0].mxu0
  %2256 = vmatprep.mubr.f32.mxu0 %v2142
  %2257 = vmatmul.mubr.f32.gmra.mrb[0].mxu0 %v1863
  %v2258 = vpop.f32.mrb[0].mxu0
  %v2259 = vadd.f32 0.0, %v2258
  %v2260 = vpop.f32.mrb[0].mxu0
  %2261 = vdwg.mxu0
  %v2262 = vld [vmem:[%s10] sm:$0xff]
  %v2263 = vld [vmem:[%s10 + $0x8] sm:$0xff]
  %v2264 = vld [vmem:[%s10 + $0x10] sm:$0xff]
  %v2265 = vld [vmem:[%s10 + $0x18] sm:$0xff]
  %v2266 = vld [vmem:[%s10 + $0x20] sm:$0xff]
  %v2267 = vld [vmem:[%s10 + $0x28] sm:$0xff]
  %v2268 = vld [vmem:[%s10 + $0x30] sm:$0xff]
  %v2269 = vld [vmem:[%s10 + $0x38] sm:$0xff]
  %v2270 = vld [vmem:[%s10 + $0x40] sm:$0xff]
  %v2271 = vld [vmem:[%s10 + $0x48] sm:$0xff]
  %v2272 = vld [vmem:[%s10 + $0x50] sm:$0xff]
  %v2273 = vld [vmem:[%s10 + $0x58] sm:$0xff]
  %v2274 = vld [vmem:[%s10 + $0x60] sm:$0xff]
  %v2275 = vld [vmem:[%s10 + $0x68] sm:$0xff]
  %v2276 = vld [vmem:[%s10 + $0x70] sm:$0xff]
  %v2277 = vld [vmem:[%s9] sm:$0xff]
  %v2278 = vld [vmem:[%s9 + $0x8] sm:$0xff]
  %v2279 = vld [vmem:[%s9 + $0x10] sm:$0xff]
  %v2280 = vld [vmem:[%s9 + $0x18] sm:$0xff]
  %v2281 = vld [vmem:[%s9 + $0x20] sm:$0xff]
  %v2282 = vld [vmem:[%s9 + $0x28] sm:$0xff]
  %v2283 = vld [vmem:[%s9 + $0x30] sm:$0xff]
  %v2284 = vld [vmem:[%s9 + $0x38] sm:$0xff]
  %v2285 = vld [vmem:[%s9 + $0x40] sm:$0xff]
  %v2286 = vld [vmem:[%s9 + $0x48] sm:$0xff]
  %v2287 = vld [vmem:[%s9 + $0x50] sm:$0xff]
  %v2288 = vld [vmem:[%s9 + $0x58] sm:$0xff]
  %v2289 = vld [vmem:[%s9 + $0x60] sm:$0xff]
  %v2290 = vld [vmem:[%s9 + $0x68] sm:$0xff]
  %v2291 = vld [vmem:[%s9 + $0x70] sm:$0xff]
  %vm2292 = vcmask 654336
  %v2294 = vsel %vm2292, %v2277, 0
  %v2297 = vsel %vm2292, %v2278, 0
  %v2300 = vsel %vm2292, %v2279, 0
  %v2303 = vsel %vm2292, %v2280, 0
  %v2306 = vsel %vm2292, %v2281, 0
  %v2309 = vsel %vm2292, %v2282, 0
  %v2312 = vsel %vm2292, %v2283, 0
  %v2315 = vsel %vm2292, %v2284, 0
  %v2318 = vsel %vm2292, %v2285, 0
  %v2321 = vsel %vm2292, %v2286, 0
  %v2324 = vsel %vm2292, %v2287, 0
  %v2327 = vsel %vm2292, %v2288, 0
  %v2330 = vsel %vm2292, %v2289, 0
  %v2333 = vsel %vm2292, %v2290, 0
  %v2336 = vsel %vm2292, %v2291, 0
  %2338 = vmatprep.subr.mxu0 0.0
  %2339 = vmatpush1.msra.mxu0 %v2214
  %2340 = vmatprep.subr.mxu0 0.0
  %2341 = vmatpush1.msra.mxu0 %v2219
  %2342 = vmatprep.subr.mxu0 0.0
  %2343 = vmatpush1.msra.mxu0 %v2224
  %2344 = vmatprep.subr.mxu0 0.0
  %2345 = vmatpush1.msra.mxu0 %v2229
  %2346 = vmatprep.subr.mxu0 0.0
  %2347 = vmatpush1.msra.mxu0 %v2234
  %2348 = vmatprep.subr.mxu0 0.0
  %2349 = vmatpush1.msra.mxu0 %v2239
  %2350 = vmatprep.subr.mxu0 0.0
  %2351 = vmatpush1.msra.mxu0 %v2244
  %2352 = vmatprep.subr.mxu0 0.0
  %2353 = vmatpush1.msra.mxu0 %v2249
  %2354 = vmatprep.subr.mxu0 0.0
  %2355 = vmatpush1.msra.mxu0 %v2254
  %2356 = vmatprep.subr.mxu0 0.0
  %2357 = vmatpush1.msra.mxu0 %v2259
  %2358 = vmatprep.subr.mxu0 0.0
  %2359 = vmatpush1.msra.mxu0 0.0
  %2360 = vmatprep.subr.mxu0 0.0
  %2361 = vmatpush1.msra.mxu0 0.0
  %2362 = vmatprep.subr.mxu0 0.0
  %2363 = vmatpush1.msra.mxu0 0.0
  %2364 = vmatprep.subr.mxu0 0.0
  %2365 = vmatpush1.msra.mxu0 0.0
  %2366 = vmatprep.subr.mxu0 0.0
  %2367 = vmatpush1.msra.mxu0 0.0
  %2368 = vmatprep.subr.mxu0 0.0
  %2369 = vmatpush1.msra.mxu0 0.0
  %2370 = vmatprep.subr.mxu0 0.0
  %2371 = vmatpush1.msra.mxu0 0.0
  %2372 = vmatprep.subr.mxu0 0.0
  %2373 = vmatpush1.msra.mxu0 0.0
  %2374 = vmatprep.subr.mxu0 0.0
  %2375 = vmatpush1.msra.mxu0 0.0
  %2376 = vmatprep.subr.mxu0 0.0
  %2377 = vmatpush1.msra.mxu0 0.0
  %2378 = vmatprep.subr.mxu0 0.0
  %2379 = vmatpush1.msra.mxu0 0.0
  %2380 = vmatprep.subr.mxu0 0.0
  %2381 = vmatpush1.msra.mxu0 0.0
  %2382 = vmatprep.subr.mxu0 0.0
  %2383 = vmatpush1.msra.mxu0 0.0
  %2384 = vmatprep.subr.mxu0 0.0
  %2385 = vmatpush1.msra.mxu0 0.0
  %2386 = vmatprep.subr.mxu0 0.0
  %2387 = vmatpush1.msra.mxu0 0.0
  %2388 = vmatprep.subr.mxu0 0.0
  %2389 = vmatpush1.msra.mxu0 0.0
  %2390 = vmatprep.subr.mxu0 0.0
  %2391 = vmatpush1.msra.mxu0 0.0
  %2392 = vmatprep.subr.mxu0 0.0
  %2393 = vmatpush1.msra.mxu0 0.0
  %2394 = vmatprep.subr.mxu0 0.0
  %2395 = vmatpush1.msra.mxu0 0.0
  %2396 = vmatprep.subr.mxu0 0.0
  %2397 = vmatpush1.msra.mxu0 0.0
  %2398 = vmatprep.subr.mxu0 0.0
  %2399 = vmatpush1.msra.mxu0 0.0
  %2400 = vmatprep.subr.mxu0 0.0
  %2401 = vmatpush1.msra.mxu0 0.0
  %2402 = vmatprep.mubr.f32.mxu0 0.0
  %2403 = vmatmul.mubr.f32.gmra.mrb[0].mxu0 %v2294
  %v2404 = vpop.f32.mrb[0].mxu0
  %v2405 = vadd.f32 0.0, %v2404
  %v2406 = vpop.f32.mrb[0].mxu0
  %2407 = vmatprep.mubr.f32.mxu0 0.0
  %2408 = vmatmul.mubr.f32.gmra.mrb[0].mxu0 %v2297
  %v2409 = vpop.f32.mrb[0].mxu0
  %v2410 = vadd.f32 0.0, %v2409
  %v2411 = vpop.f32.mrb[0].mxu0
  %2412 = vmatprep.mubr.f32.mxu0 0.0
  %2413 = vmatmul.mubr.f32.gmra.mrb[0].mxu0 %v2300
  %v2414 = vpop.f32.mrb[0].mxu0
  %v2415 = vadd.f32 0.0, %v2414
  %v2416 = vpop.f32.mrb[0].mxu0
  %2417 = vmatprep.mubr.f32.mxu0 0.0
  %2418 = vmatmul.mubr.f32.gmra.mrb[0].mxu0 %v2303
  %v2419 = vpop.f32.mrb[0].mxu0
  %v2420 = vadd.f32 0.0, %v2419
  %v2421 = vpop.f32.mrb[0].mxu0
  %2422 = vmatprep.mubr.f32.mxu0 0.0
  %2423 = vmatmul.mubr.f32.gmra.mrb[0].mxu0 %v2306
  %v2424 = vpop.f32.mrb[0].mxu0
  %v2425 = vadd.f32 0.0, %v2424
  %v2426 = vpop.f32.mrb[0].mxu0
  %2427 = vmatprep.mubr.f32.mxu0 0.0
  %2428 = vmatmul.mubr.f32.gmra.mrb[0].mxu0 %v2309
  %v2429 = vpop.f32.mrb[0].mxu0
  %v2430 = vadd.f32 0.0, %v2429
  %v2431 = vpop.f32.mrb[0].mxu0
  %2432 = vmatprep.mubr.f32.mxu0 0.0
  %2433 = vmatmul.mubr.f32.gmra.mrb[0].mxu0 %v2312
  %v2434 = vpop.f32.mrb[0].mxu0
  %v2435 = vadd.f32 0.0, %v2434
  %v2436 = vpop.f32.mrb[0].mxu0
  %2437 = vmatprep.mubr.f32.mxu0 0.0
  %2438 = vmatmul.mubr.f32.gmra.mrb[0].mxu0 %v2315
  %v2439 = vpop.f32.mrb[0].mxu0
  %v2440 = vadd.f32 0.0, %v2439
  %v2441 = vpop.f32.mrb[0].mxu0
  %2442 = vmatprep.mubr.f32.mxu0 0.0
  %2443 = vmatmul.mubr.f32.gmra.mrb[0].mxu0 %v2318
  %v2444 = vpop.f32.mrb[0].mxu0
  %v2445 = vadd.f32 0.0, %v2444
  %v2446 = vpop.f32.mrb[0].mxu0
  %2447 = vmatprep.mubr.f32.mxu0 0.0
  %2448 = vmatmul.mubr.f32.gmra.mrb[0].mxu0 %v2321
  %v2449 = vpop.f32.mrb[0].mxu0
  %v2450 = vadd.f32 0.0, %v2449
  %v2451 = vpop.f32.mrb[0].mxu0
  %2452 = vmatprep.mubr.f32.mxu0 0.0
  %2453 = vmatmul.mubr.f32.gmra.mrb[0].mxu0 %v2324
  %v2454 = vpop.f32.mrb[0].mxu0
  %v2455 = vadd.f32 0.0, %v2454
  %v2456 = vpop.f32.mrb[0].mxu0
  %2457 = vmatprep.mubr.f32.mxu0 0.0
  %2458 = vmatmul.mubr.f32.gmra.mrb[0].mxu0 %v2327
  %v2459 = vpop.f32.mrb[0].mxu0
  %v2460 = vadd.f32 0.0, %v2459
  %v2461 = vpop.f32.mrb[0].mxu0
  %2462 = vmatprep.mubr.f32.mxu0 0.0
  %2463 = vmatmul.mubr.f32.gmra.mrb[0].mxu0 %v2330
  %v2464 = vpop.f32.mrb[0].mxu0
  %v2465 = vadd.f32 0.0, %v2464
  %v2466 = vpop.f32.mrb[0].mxu0
  %2467 = vmatprep.mubr.f32.mxu0 0.0
  %2468 = vmatmul.mubr.f32.gmra.mrb[0].mxu0 %v2333
  %v2469 = vpop.f32.mrb[0].mxu0
  %v2470 = vadd.f32 0.0, %v2469
  %v2471 = vpop.f32.mrb[0].mxu0
  %2472 = vmatprep.mubr.f32.mxu0 0.0
  %2473 = vmatmul.mubr.f32.gmra.mrb[0].mxu0 %v2336
  %v2474 = vpop.f32.mrb[0].mxu0
  %v2475 = vadd.f32 0.0, %v2474
  %v2476 = vpop.f32.mrb[0].mxu0
  %2477 = vdwg.mxu0
  %2479 = vset.pattern.permute.xlu0 0
  %2480 = vperm.xlu0 %2479, %v2262
  %v2481 = vpop.permute.xlu0 %2480
  %2484 = vset.pattern.permute.xlu0 0
  %2485 = vperm.xlu0 %2484, %v2263
  %v2486 = vpop.permute.xlu0 %2485
  %2489 = vset.pattern.permute.xlu0 0
  %2490 = vperm.xlu0 %2489, %v2264
  %v2491 = vpop.permute.xlu0 %2490
  %2494 = vset.pattern.permute.xlu0 0
  %2495 = vperm.xlu0 %2494, %v2265
  %v2496 = vpop.permute.xlu0 %2495
  %2499 = vset.pattern.permute.xlu0 0
  %2500 = vperm.xlu0 %2499, %v2266
  %v2501 = vpop.permute.xlu0 %2500
  %2504 = vset.pattern.permute.xlu0 0
  %2505 = vperm.xlu0 %2504, %v2267
  %v2506 = vpop.permute.xlu0 %2505
  %2509 = vset.pattern.permute.xlu0 0
  %2510 = vperm.xlu0 %2509, %v2268
  %v2511 = vpop.permute.xlu0 %2510
  %2514 = vset.pattern.permute.xlu0 0
  %2515 = vperm.xlu0 %2514, %v2269
  %v2516 = vpop.permute.xlu0 %2515
  %2519 = vset.pattern.permute.xlu0 0
  %2520 = vperm.xlu0 %2519, %v2270
  %v2521 = vpop.permute.xlu0 %2520
  %2524 = vset.pattern.permute.xlu0 0
  %2525 = vperm.xlu0 %2524, %v2271
  %v2526 = vpop.permute.xlu0 %2525
  %2529 = vset.pattern.permute.xlu0 0
  %2530 = vperm.xlu0 %2529, %v2272
  %v2531 = vpop.permute.xlu0 %2530
  %2534 = vset.pattern.permute.xlu0 0
  %2535 = vperm.xlu0 %2534, %v2273
  %v2536 = vpop.permute.xlu0 %2535
  %2539 = vset.pattern.permute.xlu0 0
  %2540 = vperm.xlu0 %2539, %v2274
  %v2541 = vpop.permute.xlu0 %2540
  %2544 = vset.pattern.permute.xlu0 0
  %2545 = vperm.xlu0 %2544, %v2275
  %v2546 = vpop.permute.xlu0 %2545
  %2549 = vset.pattern.permute.xlu0 0
  %2550 = vperm.xlu0 %2549, %v2276
  %v2551 = vpop.permute.xlu0 %2550
  %v2553 = vadd.f32 %v2481, %v2405
  %v2554 = vadd.f32 %v2486, %v2410
  %v2555 = vadd.f32 %v2491, %v2415
  %v2556 = vadd.f32 %v2496, %v2420
  %v2557 = vadd.f32 %v2501, %v2425
  %v2558 = vadd.f32 %v2506, %v2430
  %v2559 = vadd.f32 %v2511, %v2435
  %v2560 = vadd.f32 %v2516, %v2440
  %v2561 = vadd.f32 %v2521, %v2445
  %v2562 = vadd.f32 %v2526, %v2450
  %v2563 = vadd.f32 %v2531, %v2455
  %v2564 = vadd.f32 %v2536, %v2460
  %v2565 = vadd.f32 %v2541, %v2465
  %v2566 = vadd.f32 %v2546, %v2470
  %v2567 = vadd.f32 %v2551, %v2475
  %s2568 = scalar_lea.vmem %s9, 120
  %v2569 = vld [vmem:[%s2568] sm:$0xff]
  %v2570 = vld [vmem:[%s2568 + $0x8] sm:$0xff]
  %v2571 = vld [vmem:[%s2568 + $0x10] sm:$0xff]
  %v2572 = vld [vmem:[%s2568 + $0x18] sm:$0xff]
  %v2573 = vld [vmem:[%s2568 + $0x20] sm:$0xff]
  %v2574 = vld [vmem:[%s2568 + $0x28] sm:$0xff]
  %v2575 = vld [vmem:[%s2568 + $0x30] sm:$0xff]
  %v2576 = vld [vmem:[%s2568 + $0x38] sm:$0xff]
  %v2577 = vld [vmem:[%s2568 + $0x40] sm:$0xff]
  %v2578 = vld [vmem:[%s2568 + $0x48] sm:$0xff]
  %v2579 = vld [vmem:[%s2568 + $0x50] sm:$0xff]
  %v2580 = vld [vmem:[%s2568 + $0x58] sm:$0xff]
  %v2581 = vld [vmem:[%s2568 + $0x60] sm:$0xff]
  %v2582 = vld [vmem:[%s2568 + $0x68] sm:$0xff]
  %v2583 = vld [vmem:[%s2568 + $0x70] sm:$0xff]
  %2594 = vrot.lane.b32.xlu0 %v2214, 126
  %v2595 = vpop.permute.xlu0 %2594
  %2596 = vrot.lane.b32.xlu0 %v2219, 126
  %v2597 = vpop.permute.xlu0 %2596
  %2598 = vrot.lane.b32.xlu0 %v2224, 126
  %v2599 = vpop.permute.xlu0 %2598
  %2600 = vrot.lane.b32.xlu0 %v2229, 126
  %v2601 = vpop.permute.xlu0 %2600
  %2602 = vrot.lane.b32.xlu0 %v2234, 126
  %v2603 = vpop.permute.xlu0 %2602
  %2604 = vrot.lane.b32.xlu0 %v2239, 126
  %v2605 = vpop.permute.xlu0 %2604
  %2606 = vrot.lane.b32.xlu0 %v2244, 126
  %v2607 = vpop.permute.xlu0 %2606
  %2608 = vrot.lane.b32.xlu0 %v2249, 126
  %v2609 = vpop.permute.xlu0 %2608
  %2610 = vrot.lane.b32.xlu0 %v2254, 126
  %v2611 = vpop.permute.xlu0 %2610
  %2612 = vrot.lane.b32.xlu0 %v2259, 126
  %v2613 = vpop.permute.xlu0 %2612
  %v2625 = vsel %vm2292, %v2569, 0
  %v2628 = vsel %vm2292, %v2570, 0
  %v2631 = vsel %vm2292, %v2571, 0
  %v2634 = vsel %vm2292, %v2572, 0
  %v2637 = vsel %vm2292, %v2573, 0
  %v2640 = vsel %vm2292, %v2574, 0
  %v2643 = vsel %vm2292, %v2575, 0
  %v2646 = vsel %vm2292, %v2576, 0
  %v2649 = vsel %vm2292, %v2577, 0
  %v2652 = vsel %vm2292, %v2578, 0
  %v2655 = vsel %vm2292, %v2579, 0
  %v2658 = vsel %vm2292, %v2580, 0
  %v2661 = vsel %vm2292, %v2581, 0
  %v2664 = vsel %vm2292, %v2582, 0
  %v2667 = vsel %vm2292, %v2583, 0
  %2669 = vmatprep.subr.mxu0 0.0
  %2670 = vmatpush1.msra.mxu0 %v2595
  %2671 = vmatprep.subr.mxu0 0.0
  %2672 = vmatpush1.msra.mxu0 %v2597
  %2673 = vmatprep.subr.mxu0 0.0
  %2674 = vmatpush1.msra.mxu0 %v2599
  %2675 = vmatprep.subr.mxu0 0.0
  %2676 = vmatpush1.msra.mxu0 %v2601
  %2677 = vmatprep.subr.mxu0 0.0
  %2678 = vmatpush1.msra.mxu0 %v2603
  %2679 = vmatprep.subr.mxu0 0.0
  %2680 = vmatpush1.msra.mxu0 %v2605
  %2681 = vmatprep.subr.mxu0 0.0
  %2682 = vmatpush1.msra.mxu0 %v2607
  %2683 = vmatprep.subr.mxu0 0.0
  %2684 = vmatpush1.msra.mxu0 %v2609
  %2685 = vmatprep.subr.mxu0 0.0
  %2686 = vmatpush1.msra.mxu0 %v2611
  %2687 = vmatprep.subr.mxu0 0.0
  %2688 = vmatpush1.msra.mxu0 %v2613
  %2689 = vmatprep.subr.mxu0 0.0
  %2690 = vmatpush1.msra.mxu0 0.0
  %2691 = vmatprep.subr.mxu0 0.0
  %2692 = vmatpush1.msra.mxu0 0.0
  %2693 = vmatprep.subr.mxu0 0.0
  %2694 = vmatpush1.msra.mxu0 0.0
  %2695 = vmatprep.subr.mxu0 0.0
  %2696 = vmatpush1.msra.mxu0 0.0
  %2697 = vmatprep.subr.mxu0 0.0
  %2698 = vmatpush1.msra.mxu0 0.0
  %2699 = vmatprep.subr.mxu0 0.0
  %2700 = vmatpush1.msra.mxu0 0.0
  %2701 = vmatprep.subr.mxu0 0.0
  %2702 = vmatpush1.msra.mxu0 0.0
  %2703 = vmatprep.subr.mxu0 0.0
  %2704 = vmatpush1.msra.mxu0 0.0
  %2705 = vmatprep.subr.mxu0 0.0
  %2706 = vmatpush1.msra.mxu0 0.0
  %2707 = vmatprep.subr.mxu0 0.0
  %2708 = vmatpush1.msra.mxu0 0.0
  %2709 = vmatprep.subr.mxu0 0.0
  %2710 = vmatpush1.msra.mxu0 0.0
  %2711 = vmatprep.subr.mxu0 0.0
  %2712 = vmatpush1.msra.mxu0 0.0
  %2713 = vmatprep.subr.mxu0 0.0
  %2714 = vmatpush1.msra.mxu0 0.0
  %2715 = vmatprep.subr.mxu0 0.0
  %2716 = vmatpush1.msra.mxu0 0.0
  %2717 = vmatprep.subr.mxu0 0.0
  %2718 = vmatpush1.msra.mxu0 0.0
  %2719 = vmatprep.subr.mxu0 0.0
  %2720 = vmatpush1.msra.mxu0 0.0
  %2721 = vmatprep.subr.mxu0 0.0
  %2722 = vmatpush1.msra.mxu0 0.0
  %2723 = vmatprep.subr.mxu0 0.0
  %2724 = vmatpush1.msra.mxu0 0.0
  %2725 = vmatprep.subr.mxu0 0.0
  %2726 = vmatpush1.msra.mxu0 0.0
  %2727 = vmatprep.subr.mxu0 0.0
  %2728 = vmatpush1.msra.mxu0 0.0
  %2729 = vmatprep.subr.mxu0 0.0
  %2730 = vmatpush1.msra.mxu0 0.0
  %2731 = vmatprep.subr.mxu0 0.0
  %2732 = vmatpush1.msra.mxu0 0.0
  %2733 = vmatprep.mubr.f32.mxu0 0.0
  %2734 = vmatmul.mubr.f32.gmra.mrb[0].mxu0 %v2625
  %v2735 = vpop.f32.mrb[0].mxu0
  %v2736 = vadd.f32 0.0, %v2735
  %v2737 = vpop.f32.mrb[0].mxu0
  %2738 = vmatprep.mubr.f32.mxu0 0.0
  %2739 = vmatmul.mubr.f32.gmra.mrb[0].mxu0 %v2628
  %v2740 = vpop.f32.mrb[0].mxu0
  %v2741 = vadd.f32 0.0, %v2740
  %v2742 = vpop.f32.mrb[0].mxu0
  %2743 = vmatprep.mubr.f32.mxu0 0.0
  %2744 = vmatmul.mubr.f32.gmra.mrb[0].mxu0 %v2631
  %v2745 = vpop.f32.mrb[0].mxu0
  %v2746 = vadd.f32 0.0, %v2745
  %v2747 = vpop.f32.mrb[0].mxu0
  %2748 = vmatprep.mubr.f32.mxu0 0.0
  %2749 = vmatmul.mubr.f32.gmra.mrb[0].mxu0 %v2634
  %v2750 = vpop.f32.mrb[0].mxu0
  %v2751 = vadd.f32 0.0, %v2750
  %v2752 = vpop.f32.mrb[0].mxu0
  %2753 = vmatprep.mubr.f32.mxu0 0.0
  %2754 = vmatmul.mubr.f32.gmra.mrb[0].mxu0 %v2637
  %v2755 = vpop.f32.mrb[0].mxu0
  %v2756 = vadd.f32 0.0, %v2755
  %v2757 = vpop.f32.mrb[0].mxu0
  %2758 = vmatprep.mubr.f32.mxu0 0.0
  %2759 = vmatmul.mubr.f32.gmra.mrb[0].mxu0 %v2640
  %v2760 = vpop.f32.mrb[0].mxu0
  %v2761 = vadd.f32 0.0, %v2760
  %v2762 = vpop.f32.mrb[0].mxu0
  %2763 = vmatprep.mubr.f32.mxu0 0.0
  %2764 = vmatmul.mubr.f32.gmra.mrb[0].mxu0 %v2643
  %v2765 = vpop.f32.mrb[0].mxu0
  %v2766 = vadd.f32 0.0, %v2765
  %v2767 = vpop.f32.mrb[0].mxu0
  %2768 = vmatprep.mubr.f32.mxu0 0.0
  %2769 = vmatmul.mubr.f32.gmra.mrb[0].mxu0 %v2646
  %v2770 = vpop.f32.mrb[0].mxu0
  %v2771 = vadd.f32 0.0, %v2770
  %v2772 = vpop.f32.mrb[0].mxu0
  %2773 = vmatprep.mubr.f32.mxu0 0.0
  %2774 = vmatmul.mubr.f32.gmra.mrb[0].mxu0 %v2649
  %v2775 = vpop.f32.mrb[0].mxu0
  %v2776 = vadd.f32 0.0, %v2775
  %v2777 = vpop.f32.mrb[0].mxu0
  %2778 = vmatprep.mubr.f32.mxu0 0.0
  %2779 = vmatmul.mubr.f32.gmra.mrb[0].mxu0 %v2652
  %v2780 = vpop.f32.mrb[0].mxu0
  %v2781 = vadd.f32 0.0, %v2780
  %v2782 = vpop.f32.mrb[0].mxu0
  %2783 = vmatprep.mubr.f32.mxu0 0.0
  %2784 = vmatmul.mubr.f32.gmra.mrb[0].mxu0 %v2655
  %v2785 = vpop.f32.mrb[0].mxu0
  %v2786 = vadd.f32 0.0, %v2785
  %v2787 = vpop.f32.mrb[0].mxu0
  %2788 = vmatprep.mubr.f32.mxu0 0.0
  %2789 = vmatmul.mubr.f32.gmra.mrb[0].mxu0 %v2658
  %v2790 = vpop.f32.mrb[0].mxu0
  %v2791 = vadd.f32 0.0, %v2790
  %v2792 = vpop.f32.mrb[0].mxu0
  %2793 = vmatprep.mubr.f32.mxu0 0.0
  %2794 = vmatmul.mubr.f32.gmra.mrb[0].mxu0 %v2661
  %v2795 = vpop.f32.mrb[0].mxu0
  %v2796 = vadd.f32 0.0, %v2795
  %v2797 = vpop.f32.mrb[0].mxu0
  %2798 = vmatprep.mubr.f32.mxu0 0.0
  %2799 = vmatmul.mubr.f32.gmra.mrb[0].mxu0 %v2664
  %v2800 = vpop.f32.mrb[0].mxu0
  %v2801 = vadd.f32 0.0, %v2800
  %v2802 = vpop.f32.mrb[0].mxu0
  %2803 = vmatprep.mubr.f32.mxu0 0.0
  %2804 = vmatmul.mubr.f32.gmra.mrb[0].mxu0 %v2667
  %v2805 = vpop.f32.mrb[0].mxu0
  %v2806 = vadd.f32 0.0, %v2805
  %v2807 = vpop.f32.mrb[0].mxu0
  %2808 = vdwg.mxu0
  %v2809 = vadd.f32 %v2553, %v2736
  %v2810 = vadd.f32 %v2554, %v2741
  %v2811 = vadd.f32 %v2555, %v2746
  %v2812 = vadd.f32 %v2556, %v2751
  %v2813 = vadd.f32 %v2557, %v2756
  %v2814 = vadd.f32 %v2558, %v2761
  %v2815 = vadd.f32 %v2559, %v2766
  %v2816 = vadd.f32 %v2560, %v2771
  %v2817 = vadd.f32 %v2561, %v2776
  %v2818 = vadd.f32 %v2562, %v2781
  %v2819 = vadd.f32 %v2563, %v2786
  %v2820 = vadd.f32 %v2564, %v2791
  %v2821 = vadd.f32 %v2565, %v2796
  %v2822 = vadd.f32 %v2566, %v2801
  %v2823 = vadd.f32 %v2567, %v2806
  %s2824 = scalar_lea.vmem %s9, 240
  %v2825 = vld [vmem:[%s2824] sm:$0xff]
  %v2826 = vld [vmem:[%s2824 + $0x8] sm:$0xff]
  %v2827 = vld [vmem:[%s2824 + $0x10] sm:$0xff]
  %v2828 = vld [vmem:[%s2824 + $0x18] sm:$0xff]
  %v2829 = vld [vmem:[%s2824 + $0x20] sm:$0xff]
  %v2830 = vld [vmem:[%s2824 + $0x28] sm:$0xff]
  %v2831 = vld [vmem:[%s2824 + $0x30] sm:$0xff]
  %v2832 = vld [vmem:[%s2824 + $0x38] sm:$0xff]
  %v2833 = vld [vmem:[%s2824 + $0x40] sm:$0xff]
  %v2834 = vld [vmem:[%s2824 + $0x48] sm:$0xff]
  %v2835 = vld [vmem:[%s2824 + $0x50] sm:$0xff]
  %v2836 = vld [vmem:[%s2824 + $0x58] sm:$0xff]
  %v2837 = vld [vmem:[%s2824 + $0x60] sm:$0xff]
  %v2838 = vld [vmem:[%s2824 + $0x68] sm:$0xff]
  %v2839 = vld [vmem:[%s2824 + $0x70] sm:$0xff]
  %2840 = vrot.lane.b32.xlu0 %v2214, 124
  %v2841 = vpop.permute.xlu0 %2840
  %2842 = vrot.lane.b32.xlu0 %v2219, 124
  %v2843 = vpop.permute.xlu0 %2842
  %2844 = vrot.lane.b32.xlu0 %v2224, 124
  %v2845 = vpop.permute.xlu0 %2844
  %2846 = vrot.lane.b32.xlu0 %v2229, 124
  %v2847 = vpop.permute.xlu0 %2846
  %2848 = vrot.lane.b32.xlu0 %v2234, 124
  %v2849 = vpop.permute.xlu0 %2848
  %2850 = vrot.lane.b32.xlu0 %v2239, 124
  %v2851 = vpop.permute.xlu0 %2850
  %2852 = vrot.lane.b32.xlu0 %v2244, 124
  %v2853 = vpop.permute.xlu0 %2852
  %2854 = vrot.lane.b32.xlu0 %v2249, 124
  %v2855 = vpop.permute.xlu0 %2854
  %2856 = vrot.lane.b32.xlu0 %v2254, 124
  %v2857 = vpop.permute.xlu0 %2856
  %2858 = vrot.lane.b32.xlu0 %v2259, 124
  %v2859 = vpop.permute.xlu0 %2858
  %v2871 = vsel %vm2292, %v2825, 0
  %v2874 = vsel %vm2292, %v2826, 0
  %v2877 = vsel %vm2292, %v2827, 0
  %v2880 = vsel %vm2292, %v2828, 0
  %v2883 = vsel %vm2292, %v2829, 0
  %v2886 = vsel %vm2292, %v2830, 0
  %v2889 = vsel %vm2292, %v2831, 0
  %v2892 = vsel %vm2292, %v2832, 0
  %v2895 = vsel %vm2292, %v2833, 0
  %v2898 = vsel %vm2292, %v2834, 0
  %v2901 = vsel %vm2292, %v2835, 0
  %v2904 = vsel %vm2292, %v2836, 0
  %v2907 = vsel %vm2292, %v2837, 0
  %v2910 = vsel %vm2292, %v2838, 0
  %v2913 = vsel %vm2292, %v2839, 0
  %2915 = vmatprep.subr.mxu0 0.0
  %2916 = vmatpush1.msra.mxu0 %v2841
  %2917 = vmatprep.subr.mxu0 0.0
  %2918 = vmatpush1.msra.mxu0 %v2843
  %2919 = vmatprep.subr.mxu0 0.0
  %2920 = vmatpush1.msra.mxu0 %v2845
  %2921 = vmatprep.subr.mxu0 0.0
  %2922 = vmatpush1.msra.mxu0 %v2847
  %2923 = vmatprep.subr.mxu0 0.0
  %2924 = vmatpush1.msra.mxu0 %v2849
  %2925 = vmatprep.subr.mxu0 0.0
  %2926 = vmatpush1.msra.mxu0 %v2851
  %2927 = vmatprep.subr.mxu0 0.0
  %2928 = vmatpush1.msra.mxu0 %v2853
  %2929 = vmatprep.subr.mxu0 0.0
  %2930 = vmatpush1.msra.mxu0 %v2855
  %2931 = vmatprep.subr.mxu0 0.0
  %2932 = vmatpush1.msra.mxu0 %v2857
  %2933 = vmatprep.subr.mxu0 0.0
  %2934 = vmatpush1.msra.mxu0 %v2859
  %2935 = vmatprep.subr.mxu0 0.0
  %2936 = vmatpush1.msra.mxu0 0.0
  %2937 = vmatprep.subr.mxu0 0.0
  %2938 = vmatpush1.msra.mxu0 0.0
  %2939 = vmatprep.subr.mxu0 0.0
  %2940 = vmatpush1.msra.mxu0 0.0
  %2941 = vmatprep.subr.mxu0 0.0
  %2942 = vmatpush1.msra.mxu0 0.0
  %2943 = vmatprep.subr.mxu0 0.0
  %2944 = vmatpush1.msra.mxu0 0.0
  %2945 = vmatprep.subr.mxu0 0.0
  %2946 = vmatpush1.msra.mxu0 0.0
  %2947 = vmatprep.subr.mxu0 0.0
  %2948 = vmatpush1.msra.mxu0 0.0
  %2949 = vmatprep.subr.mxu0 0.0
  %2950 = vmatpush1.msra.mxu0 0.0
  %2951 = vmatprep.subr.mxu0 0.0
  %2952 = vmatpush1.msra.mxu0 0.0
  %2953 = vmatprep.subr.mxu0 0.0
  %2954 = vmatpush1.msra.mxu0 0.0
  %2955 = vmatprep.subr.mxu0 0.0
  %2956 = vmatpush1.msra.mxu0 0.0
  %2957 = vmatprep.subr.mxu0 0.0
  %2958 = vmatpush1.msra.mxu0 0.0
  %2959 = vmatprep.subr.mxu0 0.0
  %2960 = vmatpush1.msra.mxu0 0.0
  %2961 = vmatprep.subr.mxu0 0.0
  %2962 = vmatpush1.msra.mxu0 0.0
  %2963 = vmatprep.subr.mxu0 0.0
  %2964 = vmatpush1.msra.mxu0 0.0
  %2965 = vmatprep.subr.mxu0 0.0
  %2966 = vmatpush1.msra.mxu0 0.0
  %2967 = vmatprep.subr.mxu0 0.0
  %2968 = vmatpush1.msra.mxu0 0.0
  %2969 = vmatprep.subr.mxu0 0.0
  %2970 = vmatpush1.msra.mxu0 0.0
  %2971 = vmatprep.subr.mxu0 0.0
  %2972 = vmatpush1.msra.mxu0 0.0
  %2973 = vmatprep.subr.mxu0 0.0
  %2974 = vmatpush1.msra.mxu0 0.0
  %2975 = vmatprep.subr.mxu0 0.0
  %2976 = vmatpush1.msra.mxu0 0.0
  %2977 = vmatprep.subr.mxu0 0.0
  %2978 = vmatpush1.msra.mxu0 0.0
  %2979 = vmatprep.mubr.f32.mxu0 0.0
  %2980 = vmatmul.mubr.f32.gmra.mrb[0].mxu0 %v2871
  %v2981 = vpop.f32.mrb[0].mxu0
  %v2982 = vadd.f32 0.0, %v2981
  %v2983 = vpop.f32.mrb[0].mxu0
  %2984 = vmatprep.mubr.f32.mxu0 0.0
  %2985 = vmatmul.mubr.f32.gmra.mrb[0].mxu0 %v2874
  %v2986 = vpop.f32.mrb[0].mxu0
  %v2987 = vadd.f32 0.0, %v2986
  %v2988 = vpop.f32.mrb[0].mxu0
  %2989 = vmatprep.mubr.f32.mxu0 0.0
  %2990 = vmatmul.mubr.f32.gmra.mrb[0].mxu0 %v2877
  %v2991 = vpop.f32.mrb[0].mxu0
  %v2992 = vadd.f32 0.0, %v2991
  %v2993 = vpop.f32.mrb[0].mxu0
  %2994 = vmatprep.mubr.f32.mxu0 0.0
  %2995 = vmatmul.mubr.f32.gmra.mrb[0].mxu0 %v2880
  %v2996 = vpop.f32.mrb[0].mxu0
  %v2997 = vadd.f32 0.0, %v2996
  %v2998 = vpop.f32.mrb[0].mxu0
  %2999 = vmatprep.mubr.f32.mxu0 0.0
  %3000 = vmatmul.mubr.f32.gmra.mrb[0].mxu0 %v2883
  %v3001 = vpop.f32.mrb[0].mxu0
  %v3002 = vadd.f32 0.0, %v3001
  %v3003 = vpop.f32.mrb[0].mxu0
  %3004 = vmatprep.mubr.f32.mxu0 0.0
  %3005 = vmatmul.mubr.f32.gmra.mrb[0].mxu0 %v2886
  %v3006 = vpop.f32.mrb[0].mxu0
  %v3007 = vadd.f32 0.0, %v3006
  %v3008 = vpop.f32.mrb[0].mxu0
  %3009 = vmatprep.mubr.f32.mxu0 0.0
  %3010 = vmatmul.mubr.f32.gmra.mrb[0].mxu0 %v2889
  %v3011 = vpop.f32.mrb[0].mxu0
  %v3012 = vadd.f32 0.0, %v3011
  %v3013 = vpop.f32.mrb[0].mxu0
  %3014 = vmatprep.mubr.f32.mxu0 0.0
  %3015 = vmatmul.mubr.f32.gmra.mrb[0].mxu0 %v2892
  %v3016 = vpop.f32.mrb[0].mxu0
  %v3017 = vadd.f32 0.0, %v3016
  %v3018 = vpop.f32.mrb[0].mxu0
  %3019 = vmatprep.mubr.f32.mxu0 0.0
  %3020 = vmatmul.mubr.f32.gmra.mrb[0].mxu0 %v2895
  %v3021 = vpop.f32.mrb[0].mxu0
  %v3022 = vadd.f32 0.0, %v3021
  %v3023 = vpop.f32.mrb[0].mxu0
  %3024 = vmatprep.mubr.f32.mxu0 0.0
  %3025 = vmatmul.mubr.f32.gmra.mrb[0].mxu0 %v2898
  %v3026 = vpop.f32.mrb[0].mxu0
  %v3027 = vadd.f32 0.0, %v3026
  %v3028 = vpop.f32.mrb[0].mxu0
  %3029 = vmatprep.mubr.f32.mxu0 0.0
  %3030 = vmatmul.mubr.f32.gmra.mrb[0].mxu0 %v2901
  %v3031 = vpop.f32.mrb[0].mxu0
  %v3032 = vadd.f32 0.0, %v3031
  %v3033 = vpop.f32.mrb[0].mxu0
  %3034 = vmatprep.mubr.f32.mxu0 0.0
  %3035 = vmatmul.mubr.f32.gmra.mrb[0].mxu0 %v2904
  %v3036 = vpop.f32.mrb[0].mxu0
  %v3037 = vadd.f32 0.0, %v3036
  %v3038 = vpop.f32.mrb[0].mxu0
  %3039 = vmatprep.mubr.f32.mxu0 0.0
  %3040 = vmatmul.mubr.f32.gmra.mrb[0].mxu0 %v2907
  %v3041 = vpop.f32.mrb[0].mxu0
  %v3042 = vadd.f32 0.0, %v3041
  %v3043 = vpop.f32.mrb[0].mxu0
  %3044 = vmatprep.mubr.f32.mxu0 0.0
  %3045 = vmatmul.mubr.f32.gmra.mrb[0].mxu0 %v2910
  %v3046 = vpop.f32.mrb[0].mxu0
  %v3047 = vadd.f32 0.0, %v3046
  %v3048 = vpop.f32.mrb[0].mxu0
  %3049 = vmatprep.mubr.f32.mxu0 0.0
  %3050 = vmatmul.mubr.f32.gmra.mrb[0].mxu0 %v2913
  %v3051 = vpop.f32.mrb[0].mxu0
  %v3052 = vadd.f32 0.0, %v3051
  %v3053 = vpop.f32.mrb[0].mxu0
  %3054 = vdwg.mxu0
  %v3055 = vadd.f32 %v2809, %v2982
  %v3056 = vadd.f32 %v2810, %v2987
  %v3057 = vadd.f32 %v2811, %v2992
  %v3058 = vadd.f32 %v2812, %v2997
  %v3059 = vadd.f32 %v2813, %v3002
  %v3060 = vadd.f32 %v2814, %v3007
  %v3061 = vadd.f32 %v2815, %v3012
  %v3062 = vadd.f32 %v2816, %v3017
  %v3063 = vadd.f32 %v2817, %v3022
  %v3064 = vadd.f32 %v2818, %v3027
  %v3065 = vadd.f32 %v2819, %v3032
  %v3066 = vadd.f32 %v2820, %v3037
  %v3067 = vadd.f32 %v2821, %v3042
  %v3068 = vadd.f32 %v2822, %v3047
  %v3069 = vadd.f32 %v2823, %v3052
  %s3070 = scalar_lea.vmem %s9, 360
  %v3071 = vld [vmem:[%s3070] sm:$0xff]
  %v3072 = vld [vmem:[%s3070 + $0x8] sm:$0xff]
  %v3073 = vld [vmem:[%s3070 + $0x10] sm:$0xff]
  %v3074 = vld [vmem:[%s3070 + $0x18] sm:$0xff]
  %v3075 = vld [vmem:[%s3070 + $0x20] sm:$0xff]
  %v3076 = vld [vmem:[%s3070 + $0x28] sm:$0xff]
  %v3077 = vld [vmem:[%s3070 + $0x30] sm:$0xff]
  %v3078 = vld [vmem:[%s3070 + $0x38] sm:$0xff]
  %v3079 = vld [vmem:[%s3070 + $0x40] sm:$0xff]
  %v3080 = vld [vmem:[%s3070 + $0x48] sm:$0xff]
  %v3081 = vld [vmem:[%s3070 + $0x50] sm:$0xff]
  %v3082 = vld [vmem:[%s3070 + $0x58] sm:$0xff]
  %v3083 = vld [vmem:[%s3070 + $0x60] sm:$0xff]
  %v3084 = vld [vmem:[%s3070 + $0x68] sm:$0xff]
  %v3085 = vld [vmem:[%s3070 + $0x70] sm:$0xff]
  %3086 = vrot.lane.b32.xlu0 %v2214, 122
  %v3087 = vpop.permute.xlu0 %3086
  %3088 = vrot.lane.b32.xlu0 %v2219, 122
  %v3089 = vpop.permute.xlu0 %3088
  %3090 = vrot.lane.b32.xlu0 %v2224, 122
  %v3091 = vpop.permute.xlu0 %3090
  %3092 = vrot.lane.b32.xlu0 %v2229, 122
  %v3093 = vpop.permute.xlu0 %3092
  %3094 = vrot.lane.b32.xlu0 %v2234, 122
  %v3095 = vpop.permute.xlu0 %3094
  %3096 = vrot.lane.b32.xlu0 %v2239, 122
  %v3097 = vpop.permute.xlu0 %3096
  %3098 = vrot.lane.b32.xlu0 %v2244, 122
  %v3099 = vpop.permute.xlu0 %3098
  %3100 = vrot.lane.b32.xlu0 %v2249, 122
  %v3101 = vpop.permute.xlu0 %3100
  %3102 = vrot.lane.b32.xlu0 %v2254, 122
  %v3103 = vpop.permute.xlu0 %3102
  %3104 = vrot.lane.b32.xlu0 %v2259, 122
  %v3105 = vpop.permute.xlu0 %3104
  %v3117 = vsel %vm2292, %v3071, 0
  %v3120 = vsel %vm2292, %v3072, 0
  %v3123 = vsel %vm2292, %v3073, 0
  %v3126 = vsel %vm2292, %v3074, 0
  %v3129 = vsel %vm2292, %v3075, 0
  %v3132 = vsel %vm2292, %v3076, 0
  %v3135 = vsel %vm2292, %v3077, 0
  %v3138 = vsel %vm2292, %v3078, 0
  %v3141 = vsel %vm2292, %v3079, 0
  %v3144 = vsel %vm2292, %v3080, 0
  %v3147 = vsel %vm2292, %v3081, 0
  %v3150 = vsel %vm2292, %v3082, 0
  %v3153 = vsel %vm2292, %v3083, 0
  %v3156 = vsel %vm2292, %v3084, 0
  %v3159 = vsel %vm2292, %v3085, 0
  %3161 = vmatprep.subr.mxu0 0.0
  %3162 = vmatpush1.msra.mxu0 %v3087
  %3163 = vmatprep.subr.mxu0 0.0
  %3164 = vmatpush1.msra.mxu0 %v3089
  %3165 = vmatprep.subr.mxu0 0.0
  %3166 = vmatpush1.msra.mxu0 %v3091
  %3167 = vmatprep.subr.mxu0 0.0
  %3168 = vmatpush1.msra.mxu0 %v3093
  %3169 = vmatprep.subr.mxu0 0.0
  %3170 = vmatpush1.msra.mxu0 %v3095
  %3171 = vmatprep.subr.mxu0 0.0
  %3172 = vmatpush1.msra.mxu0 %v3097
  %3173 = vmatprep.subr.mxu0 0.0
  %3174 = vmatpush1.msra.mxu0 %v3099
  %3175 = vmatprep.subr.mxu0 0.0
  %3176 = vmatpush1.msra.mxu0 %v3101
  %3177 = vmatprep.subr.mxu0 0.0
  %3178 = vmatpush1.msra.mxu0 %v3103
  %3179 = vmatprep.subr.mxu0 0.0
  %3180 = vmatpush1.msra.mxu0 %v3105
  %3181 = vmatprep.subr.mxu0 0.0
  %3182 = vmatpush1.msra.mxu0 0.0
  %3183 = vmatprep.subr.mxu0 0.0
  %3184 = vmatpush1.msra.mxu0 0.0
  %3185 = vmatprep.subr.mxu0 0.0
  %3186 = vmatpush1.msra.mxu0 0.0
  %3187 = vmatprep.subr.mxu0 0.0
  %3188 = vmatpush1.msra.mxu0 0.0
  %3189 = vmatprep.subr.mxu0 0.0
  %3190 = vmatpush1.msra.mxu0 0.0
  %3191 = vmatprep.subr.mxu0 0.0
  %3192 = vmatpush1.msra.mxu0 0.0
  %3193 = vmatprep.subr.mxu0 0.0
  %3194 = vmatpush1.msra.mxu0 0.0
  %3195 = vmatprep.subr.mxu0 0.0
  %3196 = vmatpush1.msra.mxu0 0.0
  %3197 = vmatprep.subr.mxu0 0.0
  %3198 = vmatpush1.msra.mxu0 0.0
  %3199 = vmatprep.subr.mxu0 0.0
  %3200 = vmatpush1.msra.mxu0 0.0
  %3201 = vmatprep.subr.mxu0 0.0
  %3202 = vmatpush1.msra.mxu0 0.0
  %3203 = vmatprep.subr.mxu0 0.0
  %3204 = vmatpush1.msra.mxu0 0.0
  %3205 = vmatprep.subr.mxu0 0.0
  %3206 = vmatpush1.msra.mxu0 0.0
  %3207 = vmatprep.subr.mxu0 0.0
  %3208 = vmatpush1.msra.mxu0 0.0
  %3209 = vmatprep.subr.mxu0 0.0
  %3210 = vmatpush1.msra.mxu0 0.0
  %3211 = vmatprep.subr.mxu0 0.0
  %3212 = vmatpush1.msra.mxu0 0.0
  %3213 = vmatprep.subr.mxu0 0.0
  %3214 = vmatpush1.msra.mxu0 0.0
  %3215 = vmatprep.subr.mxu0 0.0
  %3216 = vmatpush1.msra.mxu0 0.0
  %3217 = vmatprep.subr.mxu0 0.0
  %3218 = vmatpush1.msra.mxu0 0.0
  %3219 = vmatprep.subr.mxu0 0.0
  %3220 = vmatpush1.msra.mxu0 0.0
  %3221 = vmatprep.subr.mxu0 0.0
  %3222 = vmatpush1.msra.mxu0 0.0
  %3223 = vmatprep.subr.mxu0 0.0
  %3224 = vmatpush1.msra.mxu0 0.0
  %3225 = vmatprep.mubr.f32.mxu0 0.0
  %3226 = vmatmul.mubr.f32.gmra.mrb[0].mxu0 %v3117
  %v3227 = vpop.f32.mrb[0].mxu0
  %v3228 = vadd.f32 0.0, %v3227
  %v3229 = vpop.f32.mrb[0].mxu0
  %3230 = vmatprep.mubr.f32.mxu0 0.0
  %3231 = vmatmul.mubr.f32.gmra.mrb[0].mxu0 %v3120
  %v3232 = vpop.f32.mrb[0].mxu0
  %v3233 = vadd.f32 0.0, %v3232
  %v3234 = vpop.f32.mrb[0].mxu0
  %3235 = vmatprep.mubr.f32.mxu0 0.0
  %3236 = vmatmul.mubr.f32.gmra.mrb[0].mxu0 %v3123
  %v3237 = vpop.f32.mrb[0].mxu0
  %v3238 = vadd.f32 0.0, %v3237
  %v3239 = vpop.f32.mrb[0].mxu0
  %3240 = vmatprep.mubr.f32.mxu0 0.0
  %3241 = vmatmul.mubr.f32.gmra.mrb[0].mxu0 %v3126
  %v3242 = vpop.f32.mrb[0].mxu0
  %v3243 = vadd.f32 0.0, %v3242
  %v3244 = vpop.f32.mrb[0].mxu0
  %3245 = vmatprep.mubr.f32.mxu0 0.0
  %3246 = vmatmul.mubr.f32.gmra.mrb[0].mxu0 %v3129
  %v3247 = vpop.f32.mrb[0].mxu0
  %v3248 = vadd.f32 0.0, %v3247
  %v3249 = vpop.f32.mrb[0].mxu0
  %3250 = vmatprep.mubr.f32.mxu0 0.0
  %3251 = vmatmul.mubr.f32.gmra.mrb[0].mxu0 %v3132
  %v3252 = vpop.f32.mrb[0].mxu0
  %v3253 = vadd.f32 0.0, %v3252
  %v3254 = vpop.f32.mrb[0].mxu0
  %3255 = vmatprep.mubr.f32.mxu0 0.0
  %3256 = vmatmul.mubr.f32.gmra.mrb[0].mxu0 %v3135
  %v3257 = vpop.f32.mrb[0].mxu0
  %v3258 = vadd.f32 0.0, %v3257
  %v3259 = vpop.f32.mrb[0].mxu0
  %3260 = vmatprep.mubr.f32.mxu0 0.0
  %3261 = vmatmul.mubr.f32.gmra.mrb[0].mxu0 %v3138
  %v3262 = vpop.f32.mrb[0].mxu0
  %v3263 = vadd.f32 0.0, %v3262
  %v3264 = vpop.f32.mrb[0].mxu0
  %3265 = vmatprep.mubr.f32.mxu0 0.0
  %3266 = vmatmul.mubr.f32.gmra.mrb[0].mxu0 %v3141
  %v3267 = vpop.f32.mrb[0].mxu0
  %v3268 = vadd.f32 0.0, %v3267
  %v3269 = vpop.f32.mrb[0].mxu0
  %3270 = vmatprep.mubr.f32.mxu0 0.0
  %3271 = vmatmul.mubr.f32.gmra.mrb[0].mxu0 %v3144
  %v3272 = vpop.f32.mrb[0].mxu0
  %v3273 = vadd.f32 0.0, %v3272
  %v3274 = vpop.f32.mrb[0].mxu0
  %3275 = vmatprep.mubr.f32.mxu0 0.0
  %3276 = vmatmul.mubr.f32.gmra.mrb[0].mxu0 %v3147
  %v3277 = vpop.f32.mrb[0].mxu0
  %v3278 = vadd.f32 0.0, %v3277
  %v3279 = vpop.f32.mrb[0].mxu0
  %3280 = vmatprep.mubr.f32.mxu0 0.0
  %3281 = vmatmul.mubr.f32.gmra.mrb[0].mxu0 %v3150
  %v3282 = vpop.f32.mrb[0].mxu0
  %v3283 = vadd.f32 0.0, %v3282
  %v3284 = vpop.f32.mrb[0].mxu0
  %3285 = vmatprep.mubr.f32.mxu0 0.0
  %3286 = vmatmul.mubr.f32.gmra.mrb[0].mxu0 %v3153
  %v3287 = vpop.f32.mrb[0].mxu0
  %v3288 = vadd.f32 0.0, %v3287
  %v3289 = vpop.f32.mrb[0].mxu0
  %3290 = vmatprep.mubr.f32.mxu0 0.0
  %3291 = vmatmul.mubr.f32.gmra.mrb[0].mxu0 %v3156
  %v3292 = vpop.f32.mrb[0].mxu0
  %v3293 = vadd.f32 0.0, %v3292
  %v3294 = vpop.f32.mrb[0].mxu0
  %3295 = vmatprep.mubr.f32.mxu0 0.0
  %3296 = vmatmul.mubr.f32.gmra.mrb[0].mxu0 %v3159
  %v3297 = vpop.f32.mrb[0].mxu0
  %v3298 = vadd.f32 0.0, %v3297
  %v3299 = vpop.f32.mrb[0].mxu0
  %3300 = vdwg.mxu0
  %v3301 = vadd.f32 %v3055, %v3228
  %v3302 = vadd.f32 %v3056, %v3233
  %v3303 = vadd.f32 %v3057, %v3238
  %v3304 = vadd.f32 %v3058, %v3243
  %v3305 = vadd.f32 %v3059, %v3248
  %v3306 = vadd.f32 %v3060, %v3253
  %v3307 = vadd.f32 %v3061, %v3258
  %v3308 = vadd.f32 %v3062, %v3263
  %v3309 = vadd.f32 %v3063, %v3268
  %v3310 = vadd.f32 %v3064, %v3273
  %v3311 = vadd.f32 %v3065, %v3278
  %v3312 = vadd.f32 %v3066, %v3283
  %v3313 = vadd.f32 %v3067, %v3288
  %v3314 = vadd.f32 %v3068, %v3293
  %v3315 = vadd.f32 %v3069, %v3298
  %s3316 = scalar_lea.vmem %s9, 480
  %v3317 = vld [vmem:[%s3316] sm:$0xff]
  %v3318 = vld [vmem:[%s3316 + $0x8] sm:$0xff]
  %v3319 = vld [vmem:[%s3316 + $0x10] sm:$0xff]
  %v3320 = vld [vmem:[%s3316 + $0x18] sm:$0xff]
  %v3321 = vld [vmem:[%s3316 + $0x20] sm:$0xff]
  %v3322 = vld [vmem:[%s3316 + $0x28] sm:$0xff]
  %v3323 = vld [vmem:[%s3316 + $0x30] sm:$0xff]
  %v3324 = vld [vmem:[%s3316 + $0x38] sm:$0xff]
  %v3325 = vld [vmem:[%s3316 + $0x40] sm:$0xff]
  %v3326 = vld [vmem:[%s3316 + $0x48] sm:$0xff]
  %v3327 = vld [vmem:[%s3316 + $0x50] sm:$0xff]
  %v3328 = vld [vmem:[%s3316 + $0x58] sm:$0xff]
  %v3329 = vld [vmem:[%s3316 + $0x60] sm:$0xff]
  %v3330 = vld [vmem:[%s3316 + $0x68] sm:$0xff]
  %v3331 = vld [vmem:[%s3316 + $0x70] sm:$0xff]
  %3332 = vrot.lane.b32.xlu0 %v2214, 120
  %v3333 = vpop.permute.xlu0 %3332
  %3334 = vrot.lane.b32.xlu0 %v2219, 120
  %v3335 = vpop.permute.xlu0 %3334
  %3336 = vrot.lane.b32.xlu0 %v2224, 120
  %v3337 = vpop.permute.xlu0 %3336
  %3338 = vrot.lane.b32.xlu0 %v2229, 120
  %v3339 = vpop.permute.xlu0 %3338
  %3340 = vrot.lane.b32.xlu0 %v2234, 120
  %v3341 = vpop.permute.xlu0 %3340
  %3342 = vrot.lane.b32.xlu0 %v2239, 120
  %v3343 = vpop.permute.xlu0 %3342
  %3344 = vrot.lane.b32.xlu0 %v2244, 120
  %v3345 = vpop.permute.xlu0 %3344
  %3346 = vrot.lane.b32.xlu0 %v2249, 120
  %v3347 = vpop.permute.xlu0 %3346
  %3348 = vrot.lane.b32.xlu0 %v2254, 120
  %v3349 = vpop.permute.xlu0 %3348
  %3350 = vrot.lane.b32.xlu0 %v2259, 120
  %v3351 = vpop.permute.xlu0 %3350
  %v3363 = vsel %vm2292, %v3317, 0
  %v3366 = vsel %vm2292, %v3318, 0
  %v3369 = vsel %vm2292, %v3319, 0
  %v3372 = vsel %vm2292, %v3320, 0
  %v3375 = vsel %vm2292, %v3321, 0
  %v3378 = vsel %vm2292, %v3322, 0
  %v3381 = vsel %vm2292, %v3323, 0
  %v3384 = vsel %vm2292, %v3324, 0
  %v3387 = vsel %vm2292, %v3325, 0
  %v3390 = vsel %vm2292, %v3326, 0
  %v3393 = vsel %vm2292, %v3327, 0
  %v3396 = vsel %vm2292, %v3328, 0
  %v3399 = vsel %vm2292, %v3329, 0
  %v3402 = vsel %vm2292, %v3330, 0
  %v3405 = vsel %vm2292, %v3331, 0
  %3407 = vmatprep.subr.mxu0 0.0
  %3408 = vmatpush1.msra.mxu0 %v3333
  %3409 = vmatprep.subr.mxu0 0.0
  %3410 = vmatpush1.msra.mxu0 %v3335
  %3411 = vmatprep.subr.mxu0 0.0
  %3412 = vmatpush1.msra.mxu0 %v3337
  %3413 = vmatprep.subr.mxu0 0.0
  %3414 = vmatpush1.msra.mxu0 %v3339
  %3415 = vmatprep.subr.mxu0 0.0
  %3416 = vmatpush1.msra.mxu0 %v3341
  %3417 = vmatprep.subr.mxu0 0.0
  %3418 = vmatpush1.msra.mxu0 %v3343
  %3419 = vmatprep.subr.mxu0 0.0
  %3420 = vmatpush1.msra.mxu0 %v3345
  %3421 = vmatprep.subr.mxu0 0.0
  %3422 = vmatpush1.msra.mxu0 %v3347
  %3423 = vmatprep.subr.mxu0 0.0
  %3424 = vmatpush1.msra.mxu0 %v3349
  %3425 = vmatprep.subr.mxu0 0.0
  %3426 = vmatpush1.msra.mxu0 %v3351
  %3427 = vmatprep.subr.mxu0 0.0
  %3428 = vmatpush1.msra.mxu0 0.0
  %3429 = vmatprep.subr.mxu0 0.0
  %3430 = vmatpush1.msra.mxu0 0.0
  %3431 = vmatprep.subr.mxu0 0.0
  %3432 = vmatpush1.msra.mxu0 0.0
  %3433 = vmatprep.subr.mxu0 0.0
  %3434 = vmatpush1.msra.mxu0 0.0
  %3435 = vmatprep.subr.mxu0 0.0
  %3436 = vmatpush1.msra.mxu0 0.0
  %3437 = vmatprep.subr.mxu0 0.0
  %3438 = vmatpush1.msra.mxu0 0.0
  %3439 = vmatprep.subr.mxu0 0.0
  %3440 = vmatpush1.msra.mxu0 0.0
  %3441 = vmatprep.subr.mxu0 0.0
  %3442 = vmatpush1.msra.mxu0 0.0
  %3443 = vmatprep.subr.mxu0 0.0
  %3444 = vmatpush1.msra.mxu0 0.0
  %3445 = vmatprep.subr.mxu0 0.0
  %3446 = vmatpush1.msra.mxu0 0.0
  %3447 = vmatprep.subr.mxu0 0.0
  %3448 = vmatpush1.msra.mxu0 0.0
  %3449 = vmatprep.subr.mxu0 0.0
  %3450 = vmatpush1.msra.mxu0 0.0
  %3451 = vmatprep.subr.mxu0 0.0
  %3452 = vmatpush1.msra.mxu0 0.0
  %3453 = vmatprep.subr.mxu0 0.0
  %3454 = vmatpush1.msra.mxu0 0.0
  %3455 = vmatprep.subr.mxu0 0.0
  %3456 = vmatpush1.msra.mxu0 0.0
  %3457 = vmatprep.subr.mxu0 0.0
  %3458 = vmatpush1.msra.mxu0 0.0
  %3459 = vmatprep.subr.mxu0 0.0
  %3460 = vmatpush1.msra.mxu0 0.0
  %3461 = vmatprep.subr.mxu0 0.0
  %3462 = vmatpush1.msra.mxu0 0.0
  %3463 = vmatprep.subr.mxu0 0.0
  %3464 = vmatpush1.msra.mxu0 0.0
  %3465 = vmatprep.subr.mxu0 0.0
  %3466 = vmatpush1.msra.mxu0 0.0
  %3467 = vmatprep.subr.mxu0 0.0
  %3468 = vmatpush1.msra.mxu0 0.0
  %3469 = vmatprep.subr.mxu0 0.0
  %3470 = vmatpush1.msra.mxu0 0.0
  %3471 = vmatprep.mubr.f32.mxu0 0.0
  %3472 = vmatmul.mubr.f32.gmra.mrb[0].mxu0 %v3363
  %v3473 = vpop.f32.mrb[0].mxu0
  %v3474 = vadd.f32 0.0, %v3473
  %v3475 = vpop.f32.mrb[0].mxu0
  %3476 = vmatprep.mubr.f32.mxu0 0.0
  %3477 = vmatmul.mubr.f32.gmra.mrb[0].mxu0 %v3366
  %v3478 = vpop.f32.mrb[0].mxu0
  %v3479 = vadd.f32 0.0, %v3478
  %v3480 = vpop.f32.mrb[0].mxu0
  %3481 = vmatprep.mubr.f32.mxu0 0.0
  %3482 = vmatmul.mubr.f32.gmra.mrb[0].mxu0 %v3369
  %v3483 = vpop.f32.mrb[0].mxu0
  %v3484 = vadd.f32 0.0, %v3483
  %v3485 = vpop.f32.mrb[0].mxu0
  %3486 = vmatprep.mubr.f32.mxu0 0.0
  %3487 = vmatmul.mubr.f32.gmra.mrb[0].mxu0 %v3372
  %v3488 = vpop.f32.mrb[0].mxu0
  %v3489 = vadd.f32 0.0, %v3488
  %v3490 = vpop.f32.mrb[0].mxu0
  %3491 = vmatprep.mubr.f32.mxu0 0.0
  %3492 = vmatmul.mubr.f32.gmra.mrb[0].mxu0 %v3375
  %v3493 = vpop.f32.mrb[0].mxu0
  %v3494 = vadd.f32 0.0, %v3493
  %v3495 = vpop.f32.mrb[0].mxu0
  %3496 = vmatprep.mubr.f32.mxu0 0.0
  %3497 = vmatmul.mubr.f32.gmra.mrb[0].mxu0 %v3378
  %v3498 = vpop.f32.mrb[0].mxu0
  %v3499 = vadd.f32 0.0, %v3498
  %v3500 = vpop.f32.mrb[0].mxu0
  %3501 = vmatprep.mubr.f32.mxu0 0.0
  %3502 = vmatmul.mubr.f32.gmra.mrb[0].mxu0 %v3381
  %v3503 = vpop.f32.mrb[0].mxu0
  %v3504 = vadd.f32 0.0, %v3503
  %v3505 = vpop.f32.mrb[0].mxu0
  %3506 = vmatprep.mubr.f32.mxu0 0.0
  %3507 = vmatmul.mubr.f32.gmra.mrb[0].mxu0 %v3384
  %v3508 = vpop.f32.mrb[0].mxu0
  %v3509 = vadd.f32 0.0, %v3508
  %v3510 = vpop.f32.mrb[0].mxu0
  %3511 = vmatprep.mubr.f32.mxu0 0.0
  %3512 = vmatmul.mubr.f32.gmra.mrb[0].mxu0 %v3387
  %v3513 = vpop.f32.mrb[0].mxu0
  %v3514 = vadd.f32 0.0, %v3513
  %v3515 = vpop.f32.mrb[0].mxu0
  %3516 = vmatprep.mubr.f32.mxu0 0.0
  %3517 = vmatmul.mubr.f32.gmra.mrb[0].mxu0 %v3390
  %v3518 = vpop.f32.mrb[0].mxu0
  %v3519 = vadd.f32 0.0, %v3518
  %v3520 = vpop.f32.mrb[0].mxu0
  %3521 = vmatprep.mubr.f32.mxu0 0.0
  %3522 = vmatmul.mubr.f32.gmra.mrb[0].mxu0 %v3393
  %v3523 = vpop.f32.mrb[0].mxu0
  %v3524 = vadd.f32 0.0, %v3523
  %v3525 = vpop.f32.mrb[0].mxu0
  %3526 = vmatprep.mubr.f32.mxu0 0.0
  %3527 = vmatmul.mubr.f32.gmra.mrb[0].mxu0 %v3396
  %v3528 = vpop.f32.mrb[0].mxu0
  %v3529 = vadd.f32 0.0, %v3528
  %v3530 = vpop.f32.mrb[0].mxu0
  %3531 = vmatprep.mubr.f32.mxu0 0.0
  %3532 = vmatmul.mubr.f32.gmra.mrb[0].mxu0 %v3399
  %v3533 = vpop.f32.mrb[0].mxu0
  %v3534 = vadd.f32 0.0, %v3533
  %v3535 = vpop.f32.mrb[0].mxu0
  %3536 = vmatprep.mubr.f32.mxu0 0.0
  %3537 = vmatmul.mubr.f32.gmra.mrb[0].mxu0 %v3402
  %v3538 = vpop.f32.mrb[0].mxu0
  %v3539 = vadd.f32 0.0, %v3538
  %v3540 = vpop.f32.mrb[0].mxu0
  %3541 = vmatprep.mubr.f32.mxu0 0.0
  %3542 = vmatmul.mubr.f32.gmra.mrb[0].mxu0 %v3405
  %v3543 = vpop.f32.mrb[0].mxu0
  %v3544 = vadd.f32 0.0, %v3543
  %v3545 = vpop.f32.mrb[0].mxu0
  %3546 = vdwg.mxu0
  %v3547 = vadd.f32 %v3301, %v3474
  %v3548 = vadd.f32 %v3302, %v3479
  %v3549 = vadd.f32 %v3303, %v3484
  %v3550 = vadd.f32 %v3304, %v3489
  %v3551 = vadd.f32 %v3305, %v3494
  %v3552 = vadd.f32 %v3306, %v3499
  %v3553 = vadd.f32 %v3307, %v3504
  %v3554 = vadd.f32 %v3308, %v3509
  %v3555 = vadd.f32 %v3309, %v3514
  %v3556 = vadd.f32 %v3310, %v3519
  %v3557 = vadd.f32 %v3311, %v3524
  %v3558 = vadd.f32 %v3312, %v3529
  %v3559 = vadd.f32 %v3313, %v3534
  %v3560 = vadd.f32 %v3314, %v3539
  %v3561 = vadd.f32 %v3315, %v3544
  %v3562 = vmax.f32 %v3547, 0.0
  %v3563 = vmax.f32 %v3548, 0.0
  %v3564 = vmax.f32 %v3549, 0.0
  %v3565 = vmax.f32 %v3550, 0.0
  %v3566 = vmax.f32 %v3551, 0.0
  %v3567 = vmax.f32 %v3552, 0.0
  %v3568 = vmax.f32 %v3553, 0.0
  %v3569 = vmax.f32 %v3554, 0.0
  %v3570 = vmax.f32 %v3555, 0.0
  %v3571 = vmax.f32 %v3556, 0.0
  %v3572 = vmax.f32 %v3557, 0.0
  %v3573 = vmax.f32 %v3558, 0.0
  %v3574 = vmax.f32 %v3559, 0.0
  %v3575 = vmax.f32 %v3560, 0.0
  %v3576 = vmax.f32 %v3561, 0.0
  %v3577 = vld [vmem:[%s11] sm:$0xff]
  %v3578 = vld [vmem:[%s11 + $0x8] sm:$0xff]
  %v3579 = vld [vmem:[%s11 + $0x10] sm:$0xff]
  %v3580 = vld [vmem:[%s11 + $0x18] sm:$0xff]
  %v3581 = vld [vmem:[%s11 + $0x20] sm:$0xff]
  %v3582 = vld [vmem:[%s11 + $0x28] sm:$0xff]
  %v3583 = vld [vmem:[%s11 + $0x30] sm:$0xff]
  %v3584 = vld [vmem:[%s11 + $0x38] sm:$0xff]
  %v3585 = vld [vmem:[%s11 + $0x40] sm:$0xff]
  %v3586 = vld [vmem:[%s11 + $0x48] sm:$0xff]
  %v3587 = vld [vmem:[%s11 + $0x50] sm:$0xf]
  %v3588 = vld [vmem:[%s12] sm:$0xff]
  %v3589 = vld [vmem:[%s12 + $0x8] sm:$0xff]
  %v3590 = vld [vmem:[%s12 + $0x10] sm:$0xff]
  %v3591 = vld [vmem:[%s12 + $0x18] sm:$0xff]
  %v3592 = vld [vmem:[%s12 + $0x20] sm:$0xff]
  %v3593 = vld [vmem:[%s12 + $0x28] sm:$0xff]
  %v3594 = vld [vmem:[%s12 + $0x30] sm:$0xff]
  %v3595 = vld [vmem:[%s12 + $0x38] sm:$0xff]
  %v3596 = vld [vmem:[%s12 + $0x40] sm:$0xff]
  %v3597 = vld [vmem:[%s12 + $0x48] sm:$0xff]
  %v3598 = vld [vmem:[%s12 + $0x50] sm:$0xf]
  %3600 = vset.pattern.permute.xlu0 0
  %3601 = vperm.xlu0 %3600, %v3588
  %v3602 = vpop.permute.xlu0 %3601
  %3605 = vset.pattern.permute.xlu0 0
  %3606 = vperm.xlu0 %3605, %v3589
  %v3607 = vpop.permute.xlu0 %3606
  %3610 = vset.pattern.permute.xlu0 0
  %3611 = vperm.xlu0 %3610, %v3590
  %v3612 = vpop.permute.xlu0 %3611
  %3615 = vset.pattern.permute.xlu0 0
  %3616 = vperm.xlu0 %3615, %v3591
  %v3617 = vpop.permute.xlu0 %3616
  %3620 = vset.pattern.permute.xlu0 0
  %3621 = vperm.xlu0 %3620, %v3592
  %v3622 = vpop.permute.xlu0 %3621
  %3625 = vset.pattern.permute.xlu0 0
  %3626 = vperm.xlu0 %3625, %v3593
  %v3627 = vpop.permute.xlu0 %3626
  %3630 = vset.pattern.permute.xlu0 0
  %3631 = vperm.xlu0 %3630, %v3594
  %v3632 = vpop.permute.xlu0 %3631
  %3635 = vset.pattern.permute.xlu0 0
  %3636 = vperm.xlu0 %3635, %v3595
  %v3637 = vpop.permute.xlu0 %3636
  %3640 = vset.pattern.permute.xlu0 0
  %3641 = vperm.xlu0 %3640, %v3596
  %v3642 = vpop.permute.xlu0 %3641
  %3645 = vset.pattern.permute.xlu0 0
  %3646 = vperm.xlu0 %3645, %v3597
  %v3647 = vpop.permute.xlu0 %3646
  %3650 = vset.pattern.permute.xlu0 0
  %3651 = vperm.xlu0 %3650, %v3598
  %v3652 = vpop.permute.xlu0 %3651
  %vm3654 = vcmask 982016
  %v3656 = vsel %vm3654, %v3577, 0
  %v3659 = vsel %vm3654, %v3578, 0
  %v3662 = vsel %vm3654, %v3579, 0
  %v3665 = vsel %vm3654, %v3580, 0
  %v3668 = vsel %vm3654, %v3581, 0
  %v3671 = vsel %vm3654, %v3582, 0
  %v3674 = vsel %vm3654, %v3583, 0
  %v3677 = vsel %vm3654, %v3584, 0
  %v3680 = vsel %vm3654, %v3585, 0
  %v3683 = vsel %vm3654, %v3586, 0
  %v3686 = vsel %vm3654, %v3587, 0
  %3688 = vmatprep.subr.mxu0 0.0
  %3689 = vmatpush1.msra.mxu0 %v3562
  %3690 = vmatprep.subr.mxu0 0.0
  %3691 = vmatpush1.msra.mxu0 %v3563
  %3692 = vmatprep.subr.mxu0 0.0
  %3693 = vmatpush1.msra.mxu0 %v3564
  %3694 = vmatprep.subr.mxu0 0.0
  %3695 = vmatpush1.msra.mxu0 %v3565
  %3696 = vmatprep.subr.mxu0 0.0
  %3697 = vmatpush1.msra.mxu0 %v3566
  %3698 = vmatprep.subr.mxu0 0.0
  %3699 = vmatpush1.msra.mxu0 %v3567
  %3700 = vmatprep.subr.mxu0 0.0
  %3701 = vmatpush1.msra.mxu0 %v3568
  %3702 = vmatprep.subr.mxu0 0.0
  %3703 = vmatpush1.msra.mxu0 %v3569
  %3704 = vmatprep.subr.mxu0 0.0
  %3705 = vmatpush1.msra.mxu0 %v3570
  %3706 = vmatprep.subr.mxu0 0.0
  %3707 = vmatpush1.msra.mxu0 %v3571
  %3708 = vmatprep.subr.mxu0 0.0
  %3709 = vmatpush1.msra.mxu0 %v3572
  %3710 = vmatprep.subr.mxu0 0.0
  %3711 = vmatpush1.msra.mxu0 %v3573
  %3712 = vmatprep.subr.mxu0 0.0
  %3713 = vmatpush1.msra.mxu0 %v3574
  %3714 = vmatprep.subr.mxu0 0.0
  %3715 = vmatpush1.msra.mxu0 %v3575
  %3716 = vmatprep.subr.mxu0 0.0
  %3717 = vmatpush1.msra.mxu0 %v3576
  %3718 = vmatprep.subr.mxu0 0.0
  %3719 = vmatpush1.msra.mxu0 0.0
  %3720 = vmatprep.subr.mxu0 0.0
  %3721 = vmatpush1.msra.mxu0 0.0
  %3722 = vmatprep.subr.mxu0 0.0
  %3723 = vmatpush1.msra.mxu0 0.0
  %3724 = vmatprep.subr.mxu0 0.0
  %3725 = vmatpush1.msra.mxu0 0.0
  %3726 = vmatprep.subr.mxu0 0.0
  %3727 = vmatpush1.msra.mxu0 0.0
  %3728 = vmatprep.subr.mxu0 0.0
  %3729 = vmatpush1.msra.mxu0 0.0
  %3730 = vmatprep.subr.mxu0 0.0
  %3731 = vmatpush1.msra.mxu0 0.0
  %3732 = vmatprep.subr.mxu0 0.0
  %3733 = vmatpush1.msra.mxu0 0.0
  %3734 = vmatprep.subr.mxu0 0.0
  %3735 = vmatpush1.msra.mxu0 0.0
  %3736 = vmatprep.subr.mxu0 0.0
  %3737 = vmatpush1.msra.mxu0 0.0
  %3738 = vmatprep.subr.mxu0 0.0
  %3739 = vmatpush1.msra.mxu0 0.0
  %3740 = vmatprep.subr.mxu0 0.0
  %3741 = vmatpush1.msra.mxu0 0.0
  %3742 = vmatprep.subr.mxu0 0.0
  %3743 = vmatpush1.msra.mxu0 0.0
  %3744 = vmatprep.subr.mxu0 0.0
  %3745 = vmatpush1.msra.mxu0 0.0
  %3746 = vmatprep.subr.mxu0 0.0
  %3747 = vmatpush1.msra.mxu0 0.0
  %3748 = vmatprep.subr.mxu0 0.0
  %3749 = vmatpush1.msra.mxu0 0.0
  %3750 = vmatprep.subr.mxu0 0.0
  %3751 = vmatpush1.msra.mxu0 0.0
  %3752 = vmatprep.mubr.f32.mxu0 0.0
  %3753 = vmatmul.mubr.f32.gmra.mrb[0].mxu0 %v3656
  %v3754 = vpop.f32.mrb[0].mxu0
  %v3755 = vadd.f32 %v3602, %v3754
  %v3756 = vpop.f32.mrb[0].mxu0
  %3757 = vmatprep.mubr.f32.mxu0 0.0
  %3758 = vmatmul.mubr.f32.gmra.mrb[0].mxu0 %v3659
  %v3759 = vpop.f32.mrb[0].mxu0
  %v3760 = vadd.f32 %v3607, %v3759
  %v3761 = vpop.f32.mrb[0].mxu0
  %3762 = vmatprep.mubr.f32.mxu0 0.0
  %3763 = vmatmul.mubr.f32.gmra.mrb[0].mxu0 %v3662
  %v3764 = vpop.f32.mrb[0].mxu0
  %v3765 = vadd.f32 %v3612, %v3764
  %v3766 = vpop.f32.mrb[0].mxu0
  %3767 = vmatprep.mubr.f32.mxu0 0.0
  %3768 = vmatmul.mubr.f32.gmra.mrb[0].mxu0 %v3665
  %v3769 = vpop.f32.mrb[0].mxu0
  %v3770 = vadd.f32 %v3617, %v3769
  %v3771 = vpop.f32.mrb[0].mxu0
  %3772 = vmatprep.mubr.f32.mxu0 0.0
  %3773 = vmatmul.mubr.f32.gmra.mrb[0].mxu0 %v3668
  %v3774 = vpop.f32.mrb[0].mxu0
  %v3775 = vadd.f32 %v3622, %v3774
  %v3776 = vpop.f32.mrb[0].mxu0
  %3777 = vmatprep.mubr.f32.mxu0 0.0
  %3778 = vmatmul.mubr.f32.gmra.mrb[0].mxu0 %v3671
  %v3779 = vpop.f32.mrb[0].mxu0
  %v3780 = vadd.f32 %v3627, %v3779
  %v3781 = vpop.f32.mrb[0].mxu0
  %3782 = vmatprep.mubr.f32.mxu0 0.0
  %3783 = vmatmul.mubr.f32.gmra.mrb[0].mxu0 %v3674
  %v3784 = vpop.f32.mrb[0].mxu0
  %v3785 = vadd.f32 %v3632, %v3784
  %v3786 = vpop.f32.mrb[0].mxu0
  %3787 = vmatprep.mubr.f32.mxu0 0.0
  %3788 = vmatmul.mubr.f32.gmra.mrb[0].mxu0 %v3677
  %v3789 = vpop.f32.mrb[0].mxu0
  %v3790 = vadd.f32 %v3637, %v3789
  %v3791 = vpop.f32.mrb[0].mxu0
  %3792 = vmatprep.mubr.f32.mxu0 0.0
  %3793 = vmatmul.mubr.f32.gmra.mrb[0].mxu0 %v3680
  %v3794 = vpop.f32.mrb[0].mxu0
  %v3795 = vadd.f32 %v3642, %v3794
  %v3796 = vpop.f32.mrb[0].mxu0
  %3797 = vmatprep.mubr.f32.mxu0 0.0
  %3798 = vmatmul.mubr.f32.gmra.mrb[0].mxu0 %v3683
  %v3799 = vpop.f32.mrb[0].mxu0
  %v3800 = vadd.f32 %v3647, %v3799
  %v3801 = vpop.f32.mrb[0].mxu0
  %3802 = vmatprep.mubr.f32.mxu0 0.0
  %3803 = vmatmul.mubr.f32.gmra.mrb[0].mxu0 %v3686
  %v3804 = vpop.f32.mrb[0].mxu0
  %v3805 = vadd.f32 %v3652, %v3804
  %v3806 = vpop.f32.mrb[0].mxu0
  %3807 = vdwg.mxu0
  %v3808 = vmax.f32 %v3755, 0.0
  %v3809 = vmax.f32 %v3760, 0.0
  %v3810 = vmax.f32 %v3765, 0.0
  %v3811 = vmax.f32 %v3770, 0.0
  %v3812 = vmax.f32 %v3775, 0.0
  %v3813 = vmax.f32 %v3780, 0.0
  %v3814 = vmax.f32 %v3785, 0.0
  %v3815 = vmax.f32 %v3790, 0.0
  %v3816 = vmax.f32 %v3795, 0.0
  %v3817 = vmax.f32 %v3800, 0.0
  %v3818 = vmax.f32 %v3805, 0.0
  %v3819 = vld [vmem:[%s13] sm:$0xff]
  %v3820 = vld [vmem:[%s13 + $0x8] sm:$0x3]
  %v3821 = vld [vmem:[%s14] sm:$0xff]
  %v3822 = vld [vmem:[%s14 + $0x8] sm:$0x3]
  %3824 = vset.pattern.permute.xlu0 0
  %3825 = vperm.xlu0 %3824, %v3821
  %v3826 = vpop.permute.xlu0 %3825
  %3829 = vset.pattern.permute.xlu0 0
  %3830 = vperm.xlu0 %3829, %v3822
  %v3831 = vpop.permute.xlu0 %3830
  %vm3833 = vcmask 687104
  %v3835 = vsel %vm3833, %v3819, 0
  %v3838 = vsel %vm3833, %v3820, 0
  %vm3840 = vcmask 1043456
  %v3842 = vsel %vm3840, %v3818, 0
  %3844 = vmatprep.subr.mxu0 0.0
  %3845 = vmatpush1.msra.mxu0 %v3808
  %3846 = vmatprep.subr.mxu0 0.0
  %3847 = vmatpush1.msra.mxu0 %v3809
  %3848 = vmatprep.subr.mxu0 0.0
  %3849 = vmatpush1.msra.mxu0 %v3810
  %3850 = vmatprep.subr.mxu0 0.0
  %3851 = vmatpush1.msra.mxu0 %v3811
  %3852 = vmatprep.subr.mxu0 0.0
  %3853 = vmatpush1.msra.mxu0 %v3812
  %3854 = vmatprep.subr.mxu0 0.0
  %3855 = vmatpush1.msra.mxu0 %v3813
  %3856 = vmatprep.subr.mxu0 0.0
  %3857 = vmatpush1.msra.mxu0 %v3814
  %3858 = vmatprep.subr.mxu0 0.0
  %3859 = vmatpush1.msra.mxu0 %v3815
  %3860 = vmatprep.subr.mxu0 0.0
  %3861 = vmatpush1.msra.mxu0 %v3816
  %3862 = vmatprep.subr.mxu0 0.0
  %3863 = vmatpush1.msra.mxu0 %v3817
  %3864 = vmatprep.subr.mxu0 0.0
  %3865 = vmatpush1.msra.mxu0 %v3842
  %3866 = vmatprep.subr.mxu0 0.0
  %3867 = vmatpush1.msra.mxu0 0.0
  %3868 = vmatprep.subr.mxu0 0.0
  %3869 = vmatpush1.msra.mxu0 0.0
  %3870 = vmatprep.subr.mxu0 0.0
  %3871 = vmatpush1.msra.mxu0 0.0
  %3872 = vmatprep.subr.mxu0 0.0
  %3873 = vmatpush1.msra.mxu0 0.0
  %3874 = vmatprep.subr.mxu0 0.0
  %3875 = vmatpush1.msra.mxu0 0.0
  %3876 = vmatprep.subr.mxu0 0.0
  %3877 = vmatpush1.msra.mxu0 0.0
  %3878 = vmatprep.subr.mxu0 0.0
  %3879 = vmatpush1.msra.mxu0 0.0
  %3880 = vmatprep.subr.mxu0 0.0
  %3881 = vmatpush1.msra.mxu0 0.0
  %3882 = vmatprep.subr.mxu0 0.0
  %3883 = vmatpush1.msra.mxu0 0.0
  %3884 = vmatprep.subr.mxu0 0.0
  %3885 = vmatpush1.msra.mxu0 0.0
  %3886 = vmatprep.subr.mxu0 0.0
  %3887 = vmatpush1.msra.mxu0 0.0
  %3888 = vmatprep.subr.mxu0 0.0
  %3889 = vmatpush1.msra.mxu0 0.0
  %3890 = vmatprep.subr.mxu0 0.0
  %3891 = vmatpush1.msra.mxu0 0.0
  %3892 = vmatprep.subr.mxu0 0.0
  %3893 = vmatpush1.msra.mxu0 0.0
  %3894 = vmatprep.subr.mxu0 0.0
  %3895 = vmatpush1.msra.mxu0 0.0
  %3896 = vmatprep.subr.mxu0 0.0
  %3897 = vmatpush1.msra.mxu0 0.0
  %3898 = vmatprep.subr.mxu0 0.0
  %3899 = vmatpush1.msra.mxu0 0.0
  %3900 = vmatprep.subr.mxu0 0.0
  %3901 = vmatpush1.msra.mxu0 0.0
  %3902 = vmatprep.subr.mxu0 0.0
  %3903 = vmatpush1.msra.mxu0 0.0
  %3904 = vmatprep.subr.mxu0 0.0
  %3905 = vmatpush1.msra.mxu0 0.0
  %3906 = vmatprep.subr.mxu0 0.0
  %3907 = vmatpush1.msra.mxu0 0.0
  %3908 = vmatprep.mubr.f32.mxu0 0.0
  %3909 = vmatmul.mubr.f32.gmra.mrb[0].mxu0 %v3835
  %v3910 = vpop.f32.mrb[0].mxu0
  %v3911 = vadd.f32 %v3826, %v3910
  %v3912 = vpop.f32.mrb[0].mxu0
  %3913 = vmatprep.mubr.f32.mxu0 0.0
  %3914 = vmatmul.mubr.f32.gmra.mrb[0].mxu0 %v3838
  %v3915 = vpop.f32.mrb[0].mxu0
  %v3916 = vadd.f32 %v3831, %v3915
  %v3917 = vpop.f32.mrb[0].mxu0
  %3918 = vdwg.mxu0
  %vm3919 = vcmask 15360
  %3920 = vst.msk [vmem:[%s15] sm:$0xff] %vm3919, %v3911
  %vm3921 = vcmask 9216
  %3922 = vst.msk [vmem:[%s15 + $0x8] sm:$0x3] %vm3921, %v3916
  // Predicated region
  $region62: #{lenet_forward.1} parent=0 // pred_check
    _
  $region63: #{lenet_forward.1} parent=0 // pred_check_branch
    %3924 = sbr.rel (0) target = $region65
  $region64: #{lenet_forward.1} parent=0 // pred_region
    _
  $region65: #{lenet_forward.1} parent=0 // pred_fallthru
    _
  // Predicated region
  $region66: #{lenet_forward.1} parent=0 // pred_check
    _
  $region67: #{lenet_forward.1} parent=0 // pred_check_branch
    %3926 = sbr.rel (0) target = $region69
  $region68: #{lenet_forward.1} parent=0 // pred_region
    _
  $region69: #{lenet_forward.1} parent=0 // pred_fallthru
    _

</llo_original>
